<compile_context>
chip_gen: v7x
topology: tpu7x:2x2x1
jax: 0.10.0
libtpu: 0.0.40
codegen_flags: <defaults>
</compile_context>

<pallas_src>
import functools

import numpy as np
import jax
import jax.numpy as jnp
from jax.experimental import pallas as pl
from jax.experimental.pallas import tpu as pltpu

NUM_CLASSES = 10
LANE = 128

# Fixed MNIST geometry of the module (the classifier is hard-wired to 50*4*4).
IN_HW = 28
CONV1_K, CONV1_S = 5, 2
# 5x5 stride-2 VALID on 28x28 only reads rows/cols 0..26 -> crop to 27x27.
USED_HW = ((IN_HW - CONV1_K) // CONV1_S) * CONV1_S + CONV1_K      # 27


def _round_up(x, m):
    return (x + m - 1) // m * m


# --------------------------------------------------------------------- kernel
def _henet_kernel(x_ref, a1_ref, b1_ref, a2_ref, b2_ref, wc_ref, bc_ref, o_ref):
    # conv1 (dense Toeplitz matmul) + bias + HE square activation.
    x = x_ref[...].astype(jnp.bfloat16)
    h1 = jnp.dot(x, a1_ref[...], preferred_element_type=jnp.float32)
    h1 = h1 + b1_ref[...]
    h1 = h1 * h1                                   # f32 elementwise (v5e-safe)

    # conv2 + bias + square.
    h2 = jnp.dot(h1.astype(jnp.bfloat16), a2_ref[...],
                 preferred_element_type=jnp.float32)
    h2 = h2 + b2_ref[...]
    h2 = h2 * h2

    # classifier + polynomial 1 + x + 0.5*x^2 + row-sum normalisation.
    logits = jnp.dot(h2.astype(jnp.bfloat16), wc_ref[...],
                     preferred_element_type=jnp.float32)
    logits = logits + bc_ref[...]
    p = 1.0 + logits + 0.5 * logits * logits
    # Padded class lanes (zero wc/bc columns) have logits == 0 -> p == 1
    # exactly, so subtract their count from the row sum instead of masking.
    pad_lanes = p.shape[1] - NUM_CLASSES
    denom = jnp.sum(p, axis=1, keepdims=True) - float(pad_lanes)
    # Approx reciprocal on the EUP; rows sum to 1 within ~1e-3.
    # (Use approx=False if exact normalisation is required -- still cheap.)
    o_ref[...] = p * pl.reciprocal(denom, approx=True)


# -------------------------------------------------- host-side one-time prep
def _conv_to_dense(w, b, h, w_in, stride):
    """Lower a strided VALID conv to a dense matrix acting on channel-last
    flattened activations: out[(oh*OW+ow)*OC+oc] = b[oc] + sum_k in[k]*A[k, .]."""
    w = np.asarray(w, np.float32)
    b = np.asarray(b, np.float32)
    oc, ic, kh, kw = w.shape
    oh_n = (h - kh) // stride + 1
    ow_n = (w_in - kw) // stride + 1
    a = np.zeros((h * w_in * ic, oh_n * ow_n * oc), np.float32)
    for oh in range(oh_n):
        for ow in range(ow_n):
            col0 = (oh * ow_n + ow) * oc
            for i in range(kh):
                for j in range(kw):
                    row0 = ((oh * stride + i) * w_in + (ow * stride + j)) * ic
                    a[row0:row0 + ic, col0:col0 + oc] = w[:, :, i, j].T
    return a, np.tile(b, oh_n * ow_n), oh_n, ow_n


def _pad2d(a, rows, cols):
    out = np.zeros((rows, cols), np.float32)
    out[:a.shape[0], :a.shape[1]] = a
    return out


def prepare_params(params, dot_dtype=jnp.bfloat16):
    """One-time prep: conv->dense lowering over the used 27x27 input window,
    classifier weight-row permutation (NCHW vs channel-last flatten), and
    128-lane zero padding of all matmul dims."""
    w1, b1, w2, b2, wc, bc = params

    # conv1 built over the cropped 27x27 window -> K1 = 729 (padded to 768).
    a1, b1d, h1o, w1o = _conv_to_dense(w1, b1, USED_HW, USED_HW, CONV1_S)  # [729,720]
    a2, b2d, h2o, w2o = _conv_to_dense(w2, b2, h1o, w1o, 2)                # [720,800]

    # PyTorch flattens NCHW (c, h, w); our activations are flattened
    # channel-last (h, w, c) -> permute the constant classifier weight rows.
    c2 = int(w2.shape[0])
    wc_np = np.asarray(wc, np.float32).reshape(c2, h2o, w2o, NUM_CLASSES)
    wc_np = wc_np.transpose(1, 2, 0, 3).reshape(h2o * w2o * c2, NUM_CLASSES)
    bc_np = np.asarray(bc, np.float32)

    k1 = _round_up(a1.shape[0], LANE)            # 768 (3x256 / 6x128 K-groups)
    n1 = _round_up(a1.shape[1], LANE)            # 768
    n2 = _round_up(a2.shape[1], LANE)            # 896
    nc = _round_up(NUM_CLASSES, LANE)            # 128

    a1p = _pad2d(a1, k1, n1)                     # [768, 768]
    a2p = _pad2d(a2, n1, n2)                     # [768, 896]
    wcp = _pad2d(wc_np, n2, nc)                  # [896, 128]
    b1p = _pad2d(b1d.reshape(1, -1), 1, n1)
    b2p = _pad2d(b2d.reshape(1, -1), 1, n2)
    bcp = _pad2d(bc_np.reshape(1, -1), 1, nc)

    return (jnp.asarray(a1p, dot_dtype), jnp.asarray(b1p, jnp.float32),
            jnp.asarray(a2p, dot_dtype), jnp.asarray(b2p, jnp.float32),
            jnp.asarray(wcp, dot_dtype), jnp.asarray(bcp, jnp.float32))


# -------------------------------------------------------------------- forward
def _choose_batch_tile(batch, block_b):
    """Sublane-aligned (16-row, bf16-packed) batch tile. Uses >= 2 (even) grid
    steps whenever batch > 16 so the 'parallel' axis shards across v7x's two
    TensorCores, while keeping dead padded rows to at most 15."""
    block_b = max(16, _round_up(block_b, 16))
    steps = -(-batch // block_b)                 # ceil div
    if batch > 16:
        steps = max(steps, 2)                    # never a 1-step grid on v7x
    if steps > 1 and steps % 2:
        steps += 1                               # even count balances the 2 TCs
    return min(block_b, _round_up(-(-batch // steps), 16))


@functools.partial(jax.jit, static_argnames=("block_b",))
def mnist_henet_forward(x, prepared, block_b=1024):
    """x: [B, 1, 28, 28] float32 (NCHW, as in PyTorch)."""
    a1, b1, a2, b2, wc, bc = prepared
    batch = x.shape[0]
    k_pad = a1.shape[0]                          # 768

    tb = _choose_batch_tile(batch, block_b)
    bp = _round_up(batch, tb)

    # Layout plumbing (one fused XLA copy): crop to the 27x27 window conv1
    # actually reads, flatten (c=1, so NCHW flatten == channel-last), zero-pad
    # K to 768 lanes and the batch to the tile size.
    xf = x[:, :, :USED_HW, :USED_HW].reshape(batch, -1)          # [B, 729]
    xf = jnp.pad(xf, ((0, bp - batch), (0, k_pad - xf.shape[1])))

    n1, n2, nc = a1.shape[1], a2.shape[1], wc.shape[1]
    flops = 2 * bp * (k_pad * n1 + n1 * n2 + n2 * nc)
    bytes_accessed = int(
        xf.size * xf.dtype.itemsize + bp * nc * 4
        + sum(int(t.size) * t.dtype.itemsize for t in prepared))

    out = pl.pallas_call(
        _henet_kernel,
        out_shape=jax.ShapeDtypeStruct((bp, nc), jnp.float32),
        grid=(bp // tb,),
        in_specs=[
            pl.BlockSpec((tb, k_pad), lambda i: (i, 0)),   # batch-tiled input
            # Constants: constant index_map -> fetched once, reused each step.
            # (Could be single-buffered via pipeline_mode=pl.Buffered(1);
            #  skipped: VMEM use is ~20 MiB at TB=1024, far below the limit.)
            pl.BlockSpec(a1.shape, lambda i: (0, 0)),
            pl.BlockSpec(b1.shape, lambda i: (0, 0)),
            pl.BlockSpec(a2.shape, lambda i: (0, 0)),
            pl.BlockSpec(b2.shape, lambda i: (0, 0)),
            pl.BlockSpec(wc.shape, lambda i: (0, 0)),
            pl.BlockSpec(bc.shape, lambda i: (0, 0)),
        ],
        out_specs=pl.BlockSpec((tb, nc), lambda i: (i, 0)),  # lane-dense output
        compiler_params=pltpu.CompilerParams(
            dimension_semantics=("parallel",),
            vmem_limit_bytes=48 * 1024 * 1024),
        cost_estimate=pl.CostEstimate(
            flops=flops, transcendentals=bp, bytes_accessed=bytes_accessed),
    )(xf, a1, b1, a2, b2, wc, bc)

    # Padded class lanes hold 1/denom (mask was removed in-kernel); this slice
    # is what makes that safe. Keep it.
    return out[:batch, :NUM_CLASSES]


# ---------------------------------------------------------- reference & init
def mnist_henet_reference(x, params):
    """Pure-JAX f32 reference mirroring the PyTorch module exactly."""
    w1, b1, w2, b2, wc, bc = params
    dn = ("NCHW", "OIHW", "NCHW")
    hi = jax.lax.Precision.HIGHEST
    y = jax.lax.conv_general_dilated(x, w1, (2, 2), "VALID",
                                     dimension_numbers=dn, precision=hi)
    y = y + b1.reshape(1, -1, 1, 1)
    y = y * y
    y = jax.lax.conv_general_dilated(y, w2, (2, 2), "VALID",
                                     dimension_numbers=dn, precision=hi)
    y = y + b2.reshape(1, -1, 1, 1)
    y = y * y
    flat = y.reshape(x.shape[0], -1)                      # NCHW flatten
    logits = jnp.dot(flat, wc, precision=hi) + bc
    p = 1.0 + logits + 0.5 * logits * logits
    return p / jnp.sum(p, axis=1, keepdims=True)


def init_params(key):
    k1, k2, k3, k4, k5, k6 = jax.random.split(key, 6)
    w1 = jax.random.normal(k1, (5, 1, 5, 5), jnp.float32) * 0.2    # conv1
    b1 = jax.random.normal(k2, (5,), jnp.float32) * 0.1
    w2 = jax.random.normal(k3, (50, 5, 5, 5), jnp.float32) * 0.06  # conv2
    b2 = jax.random.normal(k4, (50,), jnp.float32) * 0.05
    wc = jax.random.normal(k5, (50 * 4 * 4, NUM_CLASSES), jnp.float32) * 0.02
    bc = jax.random.normal(k6, (NUM_CLASSES,), jnp.float32) * 0.02
    return (w1, b1, w2, b2, wc, bc)


if __name__ == "__main__":
    key = jax.random.PRNGKey(0)
    k_in, k_par = jax.random.split(key)

    # MNIST-shaped input required by the module's fixed 50*4*4 flatten.
    batch = 2
    x = jax.random.normal(k_in, (batch, 1, 28, 28), jnp.float32)
    params = init_params(k_par)

    prepared = prepare_params(params)            # one-time host-side prep
    out = jax.block_until_ready(mnist_henet_forward(x, prepared))

    assert out.shape == (batch, NUM_CLASSES)
    assert bool(jnp.all(jnp.isfinite(out)))
    # rows are normalised by their sum -> each row sums to ~1 (approx recip)
    assert jnp.allclose(jnp.sum(out, axis=1), 1.0, atol=2e-2)
    # matches the f32 reference (kernel uses bf16 MXU operands, f32 accumulate)
    ref = mnist_henet_reference(x, params)
    assert jnp.allclose(out, ref, rtol=0.1, atol=2e-2), float(
        jnp.max(jnp.abs(out - ref)))

    print("KERNEL_OK")
</pallas_src>

<mosaic_0001>
module attributes {stable_mosaic.version = 11 : i64} {
  func.func @_henet_kernel(%arg0: i32, %arg1: memref<16x768xf32, #tpu.memory_space<vmem>>, %arg2: memref<768x768xbf16, #tpu.memory_space<vmem>>, %arg3: memref<1x768xf32, #tpu.memory_space<vmem>>, %arg4: memref<768x896xbf16, #tpu.memory_space<vmem>>, %arg5: memref<1x896xf32, #tpu.memory_space<vmem>>, %arg6: memref<896x128xbf16, #tpu.memory_space<vmem>>, %arg7: memref<1x128xf32, #tpu.memory_space<vmem>>, %arg8: memref<16x128xf32, #tpu.memory_space<vmem>>) attributes {dimension_semantics = [#tpu.dimension_semantics<parallel>], iteration_bounds = array<i64: 1>, scalar_prefetch = 0 : i64, scratch_operands = 0 : i64, tpu.core_type = #tpu.core_type<tc>, window_params = [{transform_indices = @transform_0, window_bounds = array<i64: 16, 768>}, {pipeline_mode = #tpu.pipeline_mode<synchronous>, transform_indices = @transform_1, window_bounds = array<i64: 768, 768>}, {pipeline_mode = #tpu.pipeline_mode<synchronous>, transform_indices = @transform_2, window_bounds = array<i64: 1, 768>}, {pipeline_mode = #tpu.pipeline_mode<synchronous>, transform_indices = @transform_3, window_bounds = array<i64: 768, 896>}, {pipeline_mode = #tpu.pipeline_mode<synchronous>, transform_indices = @transform_4, window_bounds = array<i64: 1, 896>}, {pipeline_mode = #tpu.pipeline_mode<synchronous>, transform_indices = @transform_5, window_bounds = array<i64: 896, 128>}, {pipeline_mode = #tpu.pipeline_mode<synchronous>, transform_indices = @transform_6, window_bounds = array<i64: 1, 128>}, {transform_indices = @transform_7, window_bounds = array<i64: 16, 128>}]} {
    %c0 = arith.constant 0 : index
    %c0_0 = arith.constant 0 : index
    %0 = vector.load %arg1[%c0, %c0_0] : memref<16x768xf32, #tpu.memory_space<vmem>>, vector<16x768xf32>
    %1 = arith.truncf %0 : vector<16x768xf32> to vector<16x768xbf16>
    %c0_1 = arith.constant 0 : index
    %c0_2 = arith.constant 0 : index
    %2 = vector.load %arg2[%c0_1, %c0_2] : memref<768x768xbf16, #tpu.memory_space<vmem>>, vector<768x768xbf16>
    %cst = arith.constant dense<0.000000e+00> : vector<16x768xf32>
    %3 = tpu.matmul %1, %2, %cst {dimension_numbers = #tpu.dot_dimension_numbers<[1], [0], [0], [1], [0, 0, 1, 1], [], []>} : vector<16x768xbf16>, vector<768x768xbf16>, vector<16x768xf32> -> vector<16x768xf32>
    %c0_3 = arith.constant 0 : index
    %c0_4 = arith.constant 0 : index
    %4 = vector.load %arg3[%c0_3, %c0_4] : memref<1x768xf32, #tpu.memory_space<vmem>>, vector<1x768xf32>
    %5 = vector.broadcast %4 : vector<1x768xf32> to vector<16x768xf32>
    %6 = arith.addf %3, %5 : vector<16x768xf32>
    %7 = arith.mulf %6, %6 : vector<16x768xf32>
    %8 = arith.truncf %7 : vector<16x768xf32> to vector<16x768xbf16>
    %c0_5 = arith.constant 0 : index
    %c0_6 = arith.constant 0 : index
    %9 = vector.load %arg4[%c0_5, %c0_6] : memref<768x896xbf16, #tpu.memory_space<vmem>>, vector<768x896xbf16>
    %cst_7 = arith.constant dense<0.000000e+00> : vector<16x896xf32>
    %10 = tpu.matmul %8, %9, %cst_7 {dimension_numbers = #tpu.dot_dimension_numbers<[1], [0], [0], [1], [0, 0, 1, 1], [], []>} : vector<16x768xbf16>, vector<768x896xbf16>, vector<16x896xf32> -> vector<16x896xf32>
    %c0_8 = arith.constant 0 : index
    %c0_9 = arith.constant 0 : index
    %11 = vector.load %arg5[%c0_8, %c0_9] : memref<1x896xf32, #tpu.memory_space<vmem>>, vector<1x896xf32>
    %12 = vector.broadcast %11 : vector<1x896xf32> to vector<16x896xf32>
    %13 = arith.addf %10, %12 : vector<16x896xf32>
    %14 = arith.mulf %13, %13 : vector<16x896xf32>
    %15 = arith.truncf %14 : vector<16x896xf32> to vector<16x896xbf16>
    %c0_10 = arith.constant 0 : index
    %c0_11 = arith.constant 0 : index
    %16 = vector.load %arg6[%c0_10, %c0_11] : memref<896x128xbf16, #tpu.memory_space<vmem>>, vector<896x128xbf16>
    %cst_12 = arith.constant dense<0.000000e+00> : vector<16x128xf32>
    %17 = tpu.matmul %15, %16, %cst_12 {dimension_numbers = #tpu.dot_dimension_numbers<[1], [0], [0], [1], [0, 0, 1, 1], [], []>} : vector<16x896xbf16>, vector<896x128xbf16>, vector<16x128xf32> -> vector<16x128xf32>
    %c0_13 = arith.constant 0 : index
    %c0_14 = arith.constant 0 : index
    %18 = vector.load %arg7[%c0_13, %c0_14] : memref<1x128xf32, #tpu.memory_space<vmem>>, vector<1x128xf32>
    %19 = vector.broadcast %18 : vector<1x128xf32> to vector<16x128xf32>
    %20 = arith.addf %17, %19 : vector<16x128xf32>
    %cst_15 = arith.constant 1.000000e+00 : f32
    %21 = vector.broadcast %cst_15 : f32 to vector<16x128xf32>
    %22 = arith.addf %21, %20 : vector<16x128xf32>
    %cst_16 = arith.constant 5.000000e-01 : f32
    %23 = vector.broadcast %cst_16 : f32 to vector<16x128xf32>
    %24 = arith.mulf %23, %20 : vector<16x128xf32>
    %25 = arith.mulf %24, %20 : vector<16x128xf32>
    %26 = arith.addf %22, %25 : vector<16x128xf32>
    %cst_17 = arith.constant dense<0.000000e+00> : vector<16xf32>
    %27 = vector.multi_reduction <add>, %26, %cst_17 [1] : vector<16x128xf32> to vector<16xf32>
    %28 = vector.shape_cast %27 : vector<16xf32> to vector<16x1xf32>
    %cst_18 = arith.constant 1.180000e+02 : f32
    %29 = vector.broadcast %cst_18 : f32 to vector<16x1xf32>
    %30 = arith.subf %28, %29 : vector<16x1xf32>
    %31 = tpu.reciprocal %30 {approx = true} : vector<16x1xf32> -> vector<16x1xf32>
    %32 = vector.broadcast %31 : vector<16x1xf32> to vector<16x128xf32>
    %33 = arith.mulf %26, %32 : vector<16x128xf32>
    %c0_19 = arith.constant 0 : index
    %c0_20 = arith.constant 0 : index
    %34 = vector.load %arg8[%c0_19, %c0_20] : memref<16x128xf32, #tpu.memory_space<vmem>>, vector<16x128xf32>
    tpu.vector_store %arg8[%c0_19, %c0_20], %33 {strides = array<i32>} : memref<16x128xf32, #tpu.memory_space<vmem>>, vector<16x128xf32>,
    return
  }
  func.func @transform_0(%arg0: i32) -> (i32, i32) {
    %c0_i32 = arith.constant 0 : i32
    %c0_i32_0 = arith.constant 0 : i32
    return %arg0, %c0_i32 : i32, i32
  }
  func.func @transform_1(%arg0: i32) -> (i32, i32) {
    %c0_i32 = arith.constant 0 : i32
    %c0_i32_0 = arith.constant 0 : i32
    %c0_i32_1 = arith.constant 0 : i32
    return %c0_i32, %c0_i32_0 : i32, i32
  }
  func.func @transform_2(%arg0: i32) -> (i32, i32) {
    %c0_i32 = arith.constant 0 : i32
    %c0_i32_0 = arith.constant 0 : i32
    %c0_i32_1 = arith.constant 0 : i32
    return %c0_i32, %c0_i32_0 : i32, i32
  }
  func.func @transform_3(%arg0: i32) -> (i32, i32) {
    %c0_i32 = arith.constant 0 : i32
    %c0_i32_0 = arith.constant 0 : i32
    %c0_i32_1 = arith.constant 0 : i32
    return %c0_i32, %c0_i32_0 : i32, i32
  }
  func.func @transform_4(%arg0: i32) -> (i32, i32) {
    %c0_i32 = arith.constant 0 : i32
    %c0_i32_0 = arith.constant 0 : i32
    %c0_i32_1 = arith.constant 0 : i32
    return %c0_i32, %c0_i32_0 : i32, i32
  }
  func.func @transform_5(%arg0: i32) -> (i32, i32) {
    %c0_i32 = arith.constant 0 : i32
    %c0_i32_0 = arith.constant 0 : i32
    %c0_i32_1 = arith.constant 0 : i32
    return %c0_i32, %c0_i32_0 : i32, i32
  }
  func.func @transform_6(%arg0: i32) -> (i32, i32) {
    %c0_i32 = arith.constant 0 : i32
    %c0_i32_0 = arith.constant 0 : i32
    %c0_i32_1 = arith.constant 0 : i32
    return %c0_i32, %c0_i32_0 : i32, i32
  }
  func.func @transform_7(%arg0: i32) -> (i32, i32) {
    %c0_i32 = arith.constant 0 : i32
    %c0_i32_0 = arith.constant 0 : i32
    return %arg0, %c0_i32 : i32, i32
  }
}

</mosaic_0001>

<llo_original>
// kernel: mnist_henet_forward.1
$region0: #{mnist_henet_forward.1}
  #allocation0 [shape = 'u32[]', space=smem, size = 0x4, offset = 0x4, fixed_abs, tag = 'smem constant byte address 0x4 - core index']
  #allocation1 [shape = 'u32[144,128]{1,0:T(1,128)}', space=vmem, size = 0x12000, scoped, tag = 'internal scratch']
  %s0 = inlined_call_operand.vmem [shape: f32[16,768], index: 0, kind: input, shape index: {}]
  %s1 = inlined_call_operand.hbm [shape: bf16[768,768], index: 1, kind: input, shape index: {}]
  %s2 = inlined_call_operand.hbm [shape: f32[1,768], index: 2, kind: input, shape index: {}]
  %s3 = inlined_call_operand.hbm [shape: bf16[768,896], index: 3, kind: input, shape index: {}]
  %s4 = inlined_call_operand.hbm [shape: f32[1,896], index: 4, kind: input, shape index: {}]
  %s5 = inlined_call_operand.hbm [shape: bf16[896,128], index: 5, kind: input, shape index: {}]
  %s6 = inlined_call_operand.hbm [shape: f32[1,128], index: 6, kind: input, shape index: {}]
  %s7 = inlined_call_operand.vmem [shape: f32[16,128], index: 7, kind: output, shape index: {}]
  %s8 = sld [smem:[#allocation0]]
  $region62: #{mnist_henet_forward.1} parent=0
    _
  %s10 = ssub.s32 1, %s8
  %s11 = scalar_select 0, %s10, %s8
  $region1: #{mnist_henet_forward.1} parent=0
    #allocation2 [shape = 'u8[1179648]{0}', space=vmem, size = 0x120000, scoped, tag = 'input window, operand 1, single buffered']
    #allocation3 [shape = 's32[1]{0}', space=sflag, size = 0x4, scoped, tag = 'scoped memory for mnist_henet_forward.1']
    #allocation4 [shape = 'u8[3072]{0}', space=vmem, size = 0xc00, scoped, tag = 'input window, operand 2, single buffered']
    #allocation5 [shape = 's32[1]{0}', space=sflag, size = 0x4, scoped, tag = 'scoped memory for mnist_henet_forward.1']
    #allocation6 [shape = 'u8[1376256]{0}', space=vmem, size = 0x150000, scoped, tag = 'input window, operand 3, single buffered']
    #allocation7 [shape = 'u8[3584]{0}', space=vmem, size = 0x1000, scoped, tag = 'input window, operand 4, single buffered']
    #allocation8 [shape = 's32[1]{0}', space=sflag, size = 0x4, scoped, tag = 'scoped memory for mnist_henet_forward.1']
    #allocation9 [shape = 'u8[229376]{0}', space=vmem, size = 0x38000, scoped, tag = 'input window, operand 5, single buffered']
    #allocation10 [shape = 'u8[512]{0}', space=vmem, size = 0x400, scoped, tag = 'input window, operand 6, single buffered']
    #allocation11 [shape = 's32[1]{0}', space=sflag, size = 0x4, scoped, tag = 'scoped memory for mnist_henet_forward.1']
    %12 = vsyncpa [#allocation3], 0
    %13 = vsyncpa [#allocation5], 0
    %14 = vsyncpa [#allocation8], 0
    %15 = vsyncpa [#allocation11], 0
    // Predicated region
    $region2: #{mnist_henet_forward.1} parent=1 // pred_check
      _
    $region3: #{mnist_henet_forward.1} parent=1 // pred_check_branch
      %17 = sbr.rel (0) target = $region5
    $region4: #{mnist_henet_forward.1} parent=1 // pred_region
      _
    $region5: #{mnist_henet_forward.1} parent=1 // pred_fallthru
      _
    // Predicated region
    $region6: #{mnist_henet_forward.1} parent=1 // pred_check
      _
    $region7: #{mnist_henet_forward.1} parent=1 // pred_check_branch
      %19 = sbr.rel (0) target = $region9
    $region8: #{mnist_henet_forward.1} parent=1 // pred_region
      %s21 = ssub.s32 36864, 36864
      %22 = vsyncadd [#allocation3], %s21
      %s23 = sshll.u32 [#allocation2], 4
      %s24 = int_to_ptr.vmem [resolvable:$true] %s23
      %29 = dma.hbm_to_vmem [thread:$0]  %s1, 36864, %s24, [#allocation3], 384, 384, 24
    $region9: #{mnist_henet_forward.1} parent=1 // pred_fallthru
      _
    // Predicated region
    $region10: #{mnist_henet_forward.1} parent=1 // pred_check
      _
    $region11: #{mnist_henet_forward.1} parent=1 // pred_check_branch
      %31 = sbr.rel (0) target = $region13
    $region12: #{mnist_henet_forward.1} parent=1 // pred_region
      %s33 = ssub.s32 96, 96
      %34 = vsyncadd [#allocation5], %s33
      %s36 = sshll.u32 [#allocation4], 4
      %s37 = int_to_ptr.vmem [resolvable:$true] %s36
      %39 = dma.hbm_to_vmem [thread:$0]  %s2, 96, %s37, [#allocation5]
    $region13: #{mnist_henet_forward.1} parent=1 // pred_fallthru
      _
    // Predicated region
    $region14: #{mnist_henet_forward.1} parent=1 // pred_check
      _
    $region15: #{mnist_henet_forward.1} parent=1 // pred_check_branch
      %41 = sbr.rel (0) target = $region17
    $region16: #{mnist_henet_forward.1} parent=1 // pred_region
      %s43 = ssub.s32 43008, 43008
      %44 = vsyncadd [#allocation5], %s43
      %s45 = sshll.u32 [#allocation6], 4
      %s46 = int_to_ptr.vmem [resolvable:$true] %s45
      %51 = dma.hbm_to_vmem [thread:$0]  %s3, 43008, %s46, [#allocation5], 448, 448, 28
    $region17: #{mnist_henet_forward.1} parent=1 // pred_fallthru
      _
    // Predicated region
    $region18: #{mnist_henet_forward.1} parent=1 // pred_check
      _
    $region19: #{mnist_henet_forward.1} parent=1 // pred_check_branch
      %53 = sbr.rel (0) target = $region21
    $region20: #{mnist_henet_forward.1} parent=1 // pred_region
      %s55 = ssub.s32 112, 112
      %56 = vsyncadd [#allocation8], %s55
      %s58 = sshll.u32 [#allocation7], 4
      %s59 = int_to_ptr.vmem [resolvable:$true] %s58
      %61 = dma.hbm_to_vmem [thread:$0]  %s4, 112, %s59, [#allocation8]
    $region21: #{mnist_henet_forward.1} parent=1 // pred_fallthru
      _
    // Predicated region
    $region22: #{mnist_henet_forward.1} parent=1 // pred_check
      _
    $region23: #{mnist_henet_forward.1} parent=1 // pred_check_branch
      %63 = sbr.rel (0) target = $region25
    $region24: #{mnist_henet_forward.1} parent=1 // pred_region
      %s65 = ssub.s32 7168, 7168
      %66 = vsyncadd [#allocation8], %s65
      %s67 = sshll.u32 [#allocation9], 4
      %s68 = int_to_ptr.vmem [resolvable:$true] %s67
      %73 = dma.hbm_to_vmem [thread:$0]  %s5, 7168, %s68, [#allocation8], 64, 64, 4
    $region25: #{mnist_henet_forward.1} parent=1 // pred_fallthru
      _
    // Predicated region
    $region26: #{mnist_henet_forward.1} parent=1 // pred_check
      _
    $region27: #{mnist_henet_forward.1} parent=1 // pred_check_branch
      %75 = sbr.rel (0) target = $region29
    $region28: #{mnist_henet_forward.1} parent=1 // pred_region
      %s77 = ssub.s32 16, 16
      %78 = vsyncadd [#allocation11], %s77
      %s80 = sshll.u32 [#allocation10], 4
      %s81 = int_to_ptr.vmem [resolvable:$true] %s80
      %83 = dma.hbm_to_vmem [thread:$0]  %s6, 16, %s81, [#allocation11]
    $region29: #{mnist_henet_forward.1} parent=1 // pred_fallthru
      _
    // Predicated region
    $region30: #{mnist_henet_forward.1} parent=1 // pred_check
      _
    $region31: #{mnist_henet_forward.1} parent=1 // pred_check_branch
      %85 = sbr.rel (0) target = $region33
    $region32: #{mnist_henet_forward.1} parent=1 // pred_region
      %86 = dma.done [#allocation3], 36864
    $region33: #{mnist_henet_forward.1} parent=1 // pred_fallthru
      _
    // Predicated region
    $region34: #{mnist_henet_forward.1} parent=1 // pred_check
      _
    $region35: #{mnist_henet_forward.1} parent=1 // pred_check_branch
      %88 = sbr.rel (0) target = $region37
    $region36: #{mnist_henet_forward.1} parent=1 // pred_region
      %89 = dma.done [#allocation5], 96
    $region37: #{mnist_henet_forward.1} parent=1 // pred_fallthru
      _
    // Predicated region
    $region38: #{mnist_henet_forward.1} parent=1 // pred_check
      _
    $region39: #{mnist_henet_forward.1} parent=1 // pred_check_branch
      %91 = sbr.rel (0) target = $region41
    $region40: #{mnist_henet_forward.1} parent=1 // pred_region
      %92 = dma.done [#allocation5], 43008
    $region41: #{mnist_henet_forward.1} parent=1 // pred_fallthru
      _
    // Predicated region
    $region42: #{mnist_henet_forward.1} parent=1 // pred_check
      _
    $region43: #{mnist_henet_forward.1} parent=1 // pred_check_branch
      %94 = sbr.rel (0) target = $region45
    $region44: #{mnist_henet_forward.1} parent=1 // pred_region
      %95 = dma.done [#allocation8], 112
    $region45: #{mnist_henet_forward.1} parent=1 // pred_fallthru
      _
    // Predicated region
    $region46: #{mnist_henet_forward.1} parent=1 // pred_check
      _
    $region47: #{mnist_henet_forward.1} parent=1 // pred_check_branch
      %97 = sbr.rel (0) target = $region49
    $region48: #{mnist_henet_forward.1} parent=1 // pred_region
      %98 = dma.done [#allocation8], 7168
    $region49: #{mnist_henet_forward.1} parent=1 // pred_fallthru
      _
    // Predicated region
    $region50: #{mnist_henet_forward.1} parent=1 // pred_check
      _
    $region51: #{mnist_henet_forward.1} parent=1 // pred_check_branch
      %100 = sbr.rel (0) target = $region53
    $region52: #{mnist_henet_forward.1} parent=1 // pred_region
      %101 = dma.done [#allocation11], 16
    $region53: #{mnist_henet_forward.1} parent=1 // pred_fallthru
      _
    %v103 = vld [vmem:[%s0] sm:$0xff]
    %v104 = vld [vmem:[%s0 + $0x8] sm:$0xff]
    %v105 = vld [vmem:[%s0 + $0x10] sm:$0xff]
    %v106 = vld [vmem:[%s0 + $0x18] sm:$0xff]
    %v107 = vld [vmem:[%s0 + $0x20] sm:$0xff]
    %v108 = vld [vmem:[%s0 + $0x28] sm:$0xff]
    %v109 = vld [vmem:[%s0 + $0x30] sm:$0xff]
    %v110 = vld [vmem:[%s0 + $0x38] sm:$0xff]
    %v111 = vld [vmem:[%s0 + $0x40] sm:$0xff]
    %v112 = vld [vmem:[%s0 + $0x48] sm:$0xff]
    %v113 = vld [vmem:[%s0 + $0x50] sm:$0xff]
    %v114 = vld [vmem:[%s0 + $0x58] sm:$0xff]
    %v115 = vpack.c.bf16 %v109, %v103
    %v116 = vpack.c.bf16 %v110, %v104
    %v117 = vpack.c.bf16 %v111, %v105
    %v118 = vpack.c.bf16 %v112, %v106
    %v119 = vpack.c.bf16 %v113, %v107
    %v120 = vpack.c.bf16 %v114, %v108
    %v121 = vld [vmem:[#allocation2] sm:$0xff]
    %v122 = vld [vmem:[#allocation2 + $0x8] sm:$0xff]
    %v123 = vld [vmem:[#allocation2 + $0x10] sm:$0xff]
    %v124 = vld [vmem:[#allocation2 + $0x18] sm:$0xff]
    %v125 = vld [vmem:[#allocation2 + $0x20] sm:$0xff]
    %v126 = vld [vmem:[#allocation2 + $0x28] sm:$0xff]
    %v127 = vld [vmem:[#allocation2 + $0x30] sm:$0xff]
    %v128 = vld [vmem:[#allocation2 + $0x38] sm:$0xff]
    %v129 = vld [vmem:[#allocation2 + $0x40] sm:$0xff]
    %v130 = vld [vmem:[#allocation2 + $0x48] sm:$0xff]
    %v131 = vld [vmem:[#allocation2 + $0x50] sm:$0xff]
    %v132 = vld [vmem:[#allocation2 + $0x58] sm:$0xff]
    %v133 = vld [vmem:[#allocation2 + $0x60] sm:$0xff]
    %v134 = vld [vmem:[#allocation2 + $0x68] sm:$0xff]
    %v135 = vld [vmem:[#allocation2 + $0x70] sm:$0xff]
    %v136 = vld [vmem:[#allocation2 + $0x78] sm:$0xff]
    %v137 = vld [vmem:[#allocation2 + $0x80] sm:$0xff]
    %v138 = vld [vmem:[#allocation2 + $0x88] sm:$0xff]
    %v139 = vld [vmem:[#allocation2 + $0x90] sm:$0xff]
    %v140 = vld [vmem:[#allocation2 + $0x98] sm:$0xff]
    %v141 = vld [vmem:[#allocation2 + $0xa0] sm:$0xff]
    %v142 = vld [vmem:[#allocation2 + $0xa8] sm:$0xff]
    %v143 = vld [vmem:[#allocation2 + $0xb0] sm:$0xff]
    %v144 = vld [vmem:[#allocation2 + $0xb8] sm:$0xff]
    %v145 = vld [vmem:[#allocation2 + $0xc0] sm:$0xff]
    %v146 = vld [vmem:[#allocation2 + $0xc8] sm:$0xff]
    %v147 = vld [vmem:[#allocation2 + $0xd0] sm:$0xff]
    %v148 = vld [vmem:[#allocation2 + $0xd8] sm:$0xff]
    %v149 = vld [vmem:[#allocation2 + $0xe0] sm:$0xff]
    %v150 = vld [vmem:[#allocation2 + $0xe8] sm:$0xff]
    %v151 = vld [vmem:[#allocation2 + $0xf0] sm:$0xff]
    %v152 = vld [vmem:[#allocation2 + $0xf8] sm:$0xff]
    %v153 = vld [vmem:[#allocation2 + $0x100] sm:$0xff]
    %v154 = vld [vmem:[#allocation2 + $0x108] sm:$0xff]
    %v155 = vld [vmem:[#allocation2 + $0x110] sm:$0xff]
    %v156 = vld [vmem:[#allocation2 + $0x118] sm:$0xff]
    %v157 = vld [vmem:[#allocation2 + $0x120] sm:$0xff]
    %v158 = vld [vmem:[#allocation2 + $0x128] sm:$0xff]
    %v159 = vld [vmem:[#allocation2 + $0x130] sm:$0xff]
    %v160 = vld [vmem:[#allocation2 + $0x138] sm:$0xff]
    %v161 = vld [vmem:[#allocation2 + $0x140] sm:$0xff]
    %v162 = vld [vmem:[#allocation2 + $0x148] sm:$0xff]
    %v163 = vld [vmem:[#allocation2 + $0x150] sm:$0xff]
    %v164 = vld [vmem:[#allocation2 + $0x158] sm:$0xff]
    %v165 = vld [vmem:[#allocation2 + $0x160] sm:$0xff]
    %v166 = vld [vmem:[#allocation2 + $0x168] sm:$0xff]
    %v167 = vld [vmem:[#allocation2 + $0x170] sm:$0xff]
    %v168 = vld [vmem:[#allocation2 + $0x178] sm:$0xff]
    %v169 = vld [vmem:[#allocation2 + $0x180] sm:$0xff]
    %v170 = vld [vmem:[#allocation2 + $0x188] sm:$0xff]
    %v171 = vld [vmem:[#allocation2 + $0x190] sm:$0xff]
    %v172 = vld [vmem:[#allocation2 + $0x198] sm:$0xff]
    %v173 = vld [vmem:[#allocation2 + $0x1a0] sm:$0xff]
    %v174 = vld [vmem:[#allocation2 + $0x1a8] sm:$0xff]
    %v175 = vld [vmem:[#allocation2 + $0x1b0] sm:$0xff]
    %v176 = vld [vmem:[#allocation2 + $0x1b8] sm:$0xff]
    %v177 = vld [vmem:[#allocation2 + $0x1c0] sm:$0xff]
    %v178 = vld [vmem:[#allocation2 + $0x1c8] sm:$0xff]
    %v179 = vld [vmem:[#allocation2 + $0x1d0] sm:$0xff]
    %v180 = vld [vmem:[#allocation2 + $0x1d8] sm:$0xff]
    %v181 = vld [vmem:[#allocation2 + $0x1e0] sm:$0xff]
    %v182 = vld [vmem:[#allocation2 + $0x1e8] sm:$0xff]
    %v183 = vld [vmem:[#allocation2 + $0x1f0] sm:$0xff]
    %v184 = vld [vmem:[#allocation2 + $0x1f8] sm:$0xff]
    %v185 = vld [vmem:[#allocation2 + $0x200] sm:$0xff]
    %v186 = vld [vmem:[#allocation2 + $0x208] sm:$0xff]
    %v187 = vld [vmem:[#allocation2 + $0x210] sm:$0xff]
    %v188 = vld [vmem:[#allocation2 + $0x218] sm:$0xff]
    %v189 = vld [vmem:[#allocation2 + $0x220] sm:$0xff]
    %v190 = vld [vmem:[#allocation2 + $0x228] sm:$0xff]
    %v191 = vld [vmem:[#allocation2 + $0x230] sm:$0xff]
    %v192 = vld [vmem:[#allocation2 + $0x238] sm:$0xff]
    %v193 = vld [vmem:[#allocation2 + $0x240] sm:$0xff]
    %v194 = vld [vmem:[#allocation2 + $0x248] sm:$0xff]
    %v195 = vld [vmem:[#allocation2 + $0x250] sm:$0xff]
    %v196 = vld [vmem:[#allocation2 + $0x258] sm:$0xff]
    %v197 = vld [vmem:[#allocation2 + $0x260] sm:$0xff]
    %v198 = vld [vmem:[#allocation2 + $0x268] sm:$0xff]
    %v199 = vld [vmem:[#allocation2 + $0x270] sm:$0xff]
    %v200 = vld [vmem:[#allocation2 + $0x278] sm:$0xff]
    %v201 = vld [vmem:[#allocation2 + $0x280] sm:$0xff]
    %v202 = vld [vmem:[#allocation2 + $0x288] sm:$0xff]
    %v203 = vld [vmem:[#allocation2 + $0x290] sm:$0xff]
    %v204 = vld [vmem:[#allocation2 + $0x298] sm:$0xff]
    %v205 = vld [vmem:[#allocation2 + $0x2a0] sm:$0xff]
    %v206 = vld [vmem:[#allocation2 + $0x2a8] sm:$0xff]
    %v207 = vld [vmem:[#allocation2 + $0x2b0] sm:$0xff]
    %v208 = vld [vmem:[#allocation2 + $0x2b8] sm:$0xff]
    %v209 = vld [vmem:[#allocation2 + $0x2c0] sm:$0xff]
    %v210 = vld [vmem:[#allocation2 + $0x2c8] sm:$0xff]
    %v211 = vld [vmem:[#allocation2 + $0x2d0] sm:$0xff]
    %v212 = vld [vmem:[#allocation2 + $0x2d8] sm:$0xff]
    %v213 = vld [vmem:[#allocation2 + $0x2e0] sm:$0xff]
    %v214 = vld [vmem:[#allocation2 + $0x2e8] sm:$0xff]
    %v215 = vld [vmem:[#allocation2 + $0x2f0] sm:$0xff]
    %v216 = vld [vmem:[#allocation2 + $0x2f8] sm:$0xff]
    %v217 = vld [vmem:[#allocation2 + $0x300] sm:$0xff]
    %v218 = vld [vmem:[#allocation2 + $0x308] sm:$0xff]
    %v219 = vld [vmem:[#allocation2 + $0x310] sm:$0xff]
    %v220 = vld [vmem:[#allocation2 + $0x318] sm:$0xff]
    %v221 = vld [vmem:[#allocation2 + $0x320] sm:$0xff]
    %v222 = vld [vmem:[#allocation2 + $0x328] sm:$0xff]
    %v223 = vld [vmem:[#allocation2 + $0x330] sm:$0xff]
    %v224 = vld [vmem:[#allocation2 + $0x338] sm:$0xff]
    %v225 = vld [vmem:[#allocation2 + $0x340] sm:$0xff]
    %v226 = vld [vmem:[#allocation2 + $0x348] sm:$0xff]
    %v227 = vld [vmem:[#allocation2 + $0x350] sm:$0xff]
    %v228 = vld [vmem:[#allocation2 + $0x358] sm:$0xff]
    %v229 = vld [vmem:[#allocation2 + $0x360] sm:$0xff]
    %v230 = vld [vmem:[#allocation2 + $0x368] sm:$0xff]
    %v231 = vld [vmem:[#allocation2 + $0x370] sm:$0xff]
    %v232 = vld [vmem:[#allocation2 + $0x378] sm:$0xff]
    %v233 = vld [vmem:[#allocation2 + $0x380] sm:$0xff]
    %v234 = vld [vmem:[#allocation2 + $0x388] sm:$0xff]
    %v235 = vld [vmem:[#allocation2 + $0x390] sm:$0xff]
    %v236 = vld [vmem:[#allocation2 + $0x398] sm:$0xff]
    %v237 = vld [vmem:[#allocation2 + $0x3a0] sm:$0xff]
    %v238 = vld [vmem:[#allocation2 + $0x3a8] sm:$0xff]
    %v239 = vld [vmem:[#allocation2 + $0x3b0] sm:$0xff]
    %v240 = vld [vmem:[#allocation2 + $0x3b8] sm:$0xff]
    %v241 = vld [vmem:[#allocation2 + $0x3c0] sm:$0xff]
    %v242 = vld [vmem:[#allocation2 + $0x3c8] sm:$0xff]
    %v243 = vld [vmem:[#allocation2 + $0x3d0] sm:$0xff]
    %v244 = vld [vmem:[#allocation2 + $0x3d8] sm:$0xff]
    %v245 = vld [vmem:[#allocation2 + $0x3e0] sm:$0xff]
    %v246 = vld [vmem:[#allocation2 + $0x3e8] sm:$0xff]
    %v247 = vld [vmem:[#allocation2 + $0x3f0] sm:$0xff]
    %v248 = vld [vmem:[#allocation2 + $0x3f8] sm:$0xff]
    %v249 = vld [vmem:[#allocation2 + $0x400] sm:$0xff]
    %v250 = vld [vmem:[#allocation2 + $0x408] sm:$0xff]
    %v251 = vld [vmem:[#allocation2 + $0x410] sm:$0xff]
    %v252 = vld [vmem:[#allocation2 + $0x418] sm:$0xff]
    %v253 = vld [vmem:[#allocation2 + $0x420] sm:$0xff]
    %v254 = vld [vmem:[#allocation2 + $0x428] sm:$0xff]
    %v255 = vld [vmem:[#allocation2 + $0x430] sm:$0xff]
    %v256 = vld [vmem:[#allocation2 + $0x438] sm:$0xff]
    %v257 = vld [vmem:[#allocation2 + $0x440] sm:$0xff]
    %v258 = vld [vmem:[#allocation2 + $0x448] sm:$0xff]
    %v259 = vld [vmem:[#allocation2 + $0x450] sm:$0xff]
    %v260 = vld [vmem:[#allocation2 + $0x458] sm:$0xff]
    %v261 = vld [vmem:[#allocation2 + $0x460] sm:$0xff]
    %v262 = vld [vmem:[#allocation2 + $0x468] sm:$0xff]
    %v263 = vld [vmem:[#allocation2 + $0x470] sm:$0xff]
    %v264 = vld [vmem:[#allocation2 + $0x478] sm:$0xff]
    %v265 = vld [vmem:[#allocation2 + $0x480] sm:$0xff]
    %v266 = vld [vmem:[#allocation2 + $0x488] sm:$0xff]
    %v267 = vld [vmem:[#allocation2 + $0x490] sm:$0xff]
    %v268 = vld [vmem:[#allocation2 + $0x498] sm:$0xff]
    %v269 = vld [vmem:[#allocation2 + $0x4a0] sm:$0xff]
    %v270 = vld [vmem:[#allocation2 + $0x4a8] sm:$0xff]
    %v271 = vld [vmem:[#allocation2 + $0x4b0] sm:$0xff]
    %v272 = vld [vmem:[#allocation2 + $0x4b8] sm:$0xff]
    %v273 = vld [vmem:[#allocation2 + $0x4c0] sm:$0xff]
    %v274 = vld [vmem:[#allocation2 + $0x4c8] sm:$0xff]
    %v275 = vld [vmem:[#allocation2 + $0x4d0] sm:$0xff]
    %v276 = vld [vmem:[#allocation2 + $0x4d8] sm:$0xff]
    %v277 = vld [vmem:[#allocation2 + $0x4e0] sm:$0xff]
    %v278 = vld [vmem:[#allocation2 + $0x4e8] sm:$0xff]
    %v279 = vld [vmem:[#allocation2 + $0x4f0] sm:$0xff]
    %v280 = vld [vmem:[#allocation2 + $0x4f8] sm:$0xff]
    %v281 = vld [vmem:[#allocation2 + $0x500] sm:$0xff]
    %v282 = vld [vmem:[#allocation2 + $0x508] sm:$0xff]
    %v283 = vld [vmem:[#allocation2 + $0x510] sm:$0xff]
    %v284 = vld [vmem:[#allocation2 + $0x518] sm:$0xff]
    %v285 = vld [vmem:[#allocation2 + $0x520] sm:$0xff]
    %v286 = vld [vmem:[#allocation2 + $0x528] sm:$0xff]
    %v287 = vld [vmem:[#allocation2 + $0x530] sm:$0xff]
    %v288 = vld [vmem:[#allocation2 + $0x538] sm:$0xff]
    %v289 = vld [vmem:[#allocation2 + $0x540] sm:$0xff]
    %v290 = vld [vmem:[#allocation2 + $0x548] sm:$0xff]
    %v291 = vld [vmem:[#allocation2 + $0x550] sm:$0xff]
    %v292 = vld [vmem:[#allocation2 + $0x558] sm:$0xff]
    %v293 = vld [vmem:[#allocation2 + $0x560] sm:$0xff]
    %v294 = vld [vmem:[#allocation2 + $0x568] sm:$0xff]
    %v295 = vld [vmem:[#allocation2 + $0x570] sm:$0xff]
    %v296 = vld [vmem:[#allocation2 + $0x578] sm:$0xff]
    %v297 = vld [vmem:[#allocation2 + $0x580] sm:$0xff]
    %v298 = vld [vmem:[#allocation2 + $0x588] sm:$0xff]
    %v299 = vld [vmem:[#allocation2 + $0x590] sm:$0xff]
    %v300 = vld [vmem:[#allocation2 + $0x598] sm:$0xff]
    %v301 = vld [vmem:[#allocation2 + $0x5a0] sm:$0xff]
    %v302 = vld [vmem:[#allocation2 + $0x5a8] sm:$0xff]
    %v303 = vld [vmem:[#allocation2 + $0x5b0] sm:$0xff]
    %v304 = vld [vmem:[#allocation2 + $0x5b8] sm:$0xff]
    %v305 = vld [vmem:[#allocation2 + $0x5c0] sm:$0xff]
    %v306 = vld [vmem:[#allocation2 + $0x5c8] sm:$0xff]
    %v307 = vld [vmem:[#allocation2 + $0x5d0] sm:$0xff]
    %v308 = vld [vmem:[#allocation2 + $0x5d8] sm:$0xff]
    %v309 = vld [vmem:[#allocation2 + $0x5e0] sm:$0xff]
    %v310 = vld [vmem:[#allocation2 + $0x5e8] sm:$0xff]
    %v311 = vld [vmem:[#allocation2 + $0x5f0] sm:$0xff]
    %v312 = vld [vmem:[#allocation2 + $0x5f8] sm:$0xff]
    %v313 = vld [vmem:[#allocation2 + $0x600] sm:$0xff]
    %v314 = vld [vmem:[#allocation2 + $0x608] sm:$0xff]
    %v315 = vld [vmem:[#allocation2 + $0x610] sm:$0xff]
    %v316 = vld [vmem:[#allocation2 + $0x618] sm:$0xff]
    %v317 = vld [vmem:[#allocation2 + $0x620] sm:$0xff]
    %v318 = vld [vmem:[#allocation2 + $0x628] sm:$0xff]
    %v319 = vld [vmem:[#allocation2 + $0x630] sm:$0xff]
    %v320 = vld [vmem:[#allocation2 + $0x638] sm:$0xff]
    %v321 = vld [vmem:[#allocation2 + $0x640] sm:$0xff]
    %v322 = vld [vmem:[#allocation2 + $0x648] sm:$0xff]
    %v323 = vld [vmem:[#allocation2 + $0x650] sm:$0xff]
    %v324 = vld [vmem:[#allocation2 + $0x658] sm:$0xff]
    %v325 = vld [vmem:[#allocation2 + $0x660] sm:$0xff]
    %v326 = vld [vmem:[#allocation2 + $0x668] sm:$0xff]
    %v327 = vld [vmem:[#allocation2 + $0x670] sm:$0xff]
    %v328 = vld [vmem:[#allocation2 + $0x678] sm:$0xff]
    %v329 = vld [vmem:[#allocation2 + $0x680] sm:$0xff]
    %v330 = vld [vmem:[#allocation2 + $0x688] sm:$0xff]
    %v331 = vld [vmem:[#allocation2 + $0x690] sm:$0xff]
    %v332 = vld [vmem:[#allocation2 + $0x698] sm:$0xff]
    %v333 = vld [vmem:[#allocation2 + $0x6a0] sm:$0xff]
    %v334 = vld [vmem:[#allocation2 + $0x6a8] sm:$0xff]
    %v335 = vld [vmem:[#allocation2 + $0x6b0] sm:$0xff]
    %v336 = vld [vmem:[#allocation2 + $0x6b8] sm:$0xff]
    %v337 = vld [vmem:[#allocation2 + $0x6c0] sm:$0xff]
    %v338 = vld [vmem:[#allocation2 + $0x6c8] sm:$0xff]
    %v339 = vld [vmem:[#allocation2 + $0x6d0] sm:$0xff]
    %v340 = vld [vmem:[#allocation2 + $0x6d8] sm:$0xff]
    %v341 = vld [vmem:[#allocation2 + $0x6e0] sm:$0xff]
    %v342 = vld [vmem:[#allocation2 + $0x6e8] sm:$0xff]
    %v343 = vld [vmem:[#allocation2 + $0x6f0] sm:$0xff]
    %v344 = vld [vmem:[#allocation2 + $0x6f8] sm:$0xff]
    %v345 = vld [vmem:[#allocation2 + $0x700] sm:$0xff]
    %v346 = vld [vmem:[#allocation2 + $0x708] sm:$0xff]
    %v347 = vld [vmem:[#allocation2 + $0x710] sm:$0xff]
    %v348 = vld [vmem:[#allocation2 + $0x718] sm:$0xff]
    %v349 = vld [vmem:[#allocation2 + $0x720] sm:$0xff]
    %v350 = vld [vmem:[#allocation2 + $0x728] sm:$0xff]
    %v351 = vld [vmem:[#allocation2 + $0x730] sm:$0xff]
    %v352 = vld [vmem:[#allocation2 + $0x738] sm:$0xff]
    %v353 = vld [vmem:[#allocation2 + $0x740] sm:$0xff]
    %v354 = vld [vmem:[#allocation2 + $0x748] sm:$0xff]
    %v355 = vld [vmem:[#allocation2 + $0x750] sm:$0xff]
    %v356 = vld [vmem:[#allocation2 + $0x758] sm:$0xff]
    %v357 = vld [vmem:[#allocation2 + $0x760] sm:$0xff]
    %v358 = vld [vmem:[#allocation2 + $0x768] sm:$0xff]
    %v359 = vld [vmem:[#allocation2 + $0x770] sm:$0xff]
    %v360 = vld [vmem:[#allocation2 + $0x778] sm:$0xff]
    %v361 = vld [vmem:[#allocation2 + $0x780] sm:$0xff]
    %v362 = vld [vmem:[#allocation2 + $0x788] sm:$0xff]
    %v363 = vld [vmem:[#allocation2 + $0x790] sm:$0xff]
    %v364 = vld [vmem:[#allocation2 + $0x798] sm:$0xff]
    %v365 = vld [vmem:[#allocation2 + $0x7a0] sm:$0xff]
    %v366 = vld [vmem:[#allocation2 + $0x7a8] sm:$0xff]
    %v367 = vld [vmem:[#allocation2 + $0x7b0] sm:$0xff]
    %v368 = vld [vmem:[#allocation2 + $0x7b8] sm:$0xff]
    %v369 = vld [vmem:[#allocation2 + $0x7c0] sm:$0xff]
    %v370 = vld [vmem:[#allocation2 + $0x7c8] sm:$0xff]
    %v371 = vld [vmem:[#allocation2 + $0x7d0] sm:$0xff]
    %v372 = vld [vmem:[#allocation2 + $0x7d8] sm:$0xff]
    %v373 = vld [vmem:[#allocation2 + $0x7e0] sm:$0xff]
    %v374 = vld [vmem:[#allocation2 + $0x7e8] sm:$0xff]
    %v375 = vld [vmem:[#allocation2 + $0x7f0] sm:$0xff]
    %v376 = vld [vmem:[#allocation2 + $0x7f8] sm:$0xff]
    %v377 = vld [vmem:[#allocation2 + $0x800] sm:$0xff]
    %v378 = vld [vmem:[#allocation2 + $0x808] sm:$0xff]
    %v379 = vld [vmem:[#allocation2 + $0x810] sm:$0xff]
    %v380 = vld [vmem:[#allocation2 + $0x818] sm:$0xff]
    %v381 = vld [vmem:[#allocation2 + $0x820] sm:$0xff]
    %v382 = vld [vmem:[#allocation2 + $0x828] sm:$0xff]
    %v383 = vld [vmem:[#allocation2 + $0x830] sm:$0xff]
    %v384 = vld [vmem:[#allocation2 + $0x838] sm:$0xff]
    %v385 = vld [vmem:[#allocation2 + $0x840] sm:$0xff]
    %v386 = vld [vmem:[#allocation2 + $0x848] sm:$0xff]
    %v387 = vld [vmem:[#allocation2 + $0x850] sm:$0xff]
    %v388 = vld [vmem:[#allocation2 + $0x858] sm:$0xff]
    %v389 = vld [vmem:[#allocation2 + $0x860] sm:$0xff]
    %v390 = vld [vmem:[#allocation2 + $0x868] sm:$0xff]
    %v391 = vld [vmem:[#allocation2 + $0x870] sm:$0xff]
    %v392 = vld [vmem:[#allocation2 + $0x878] sm:$0xff]
    %v393 = vld [vmem:[#allocation2 + $0x880] sm:$0xff]
    %v394 = vld [vmem:[#allocation2 + $0x888] sm:$0xff]
    %v395 = vld [vmem:[#allocation2 + $0x890] sm:$0xff]
    %v396 = vld [vmem:[#allocation2 + $0x898] sm:$0xff]
    %v397 = vld [vmem:[#allocation2 + $0x8a0] sm:$0xff]
    %v398 = vld [vmem:[#allocation2 + $0x8a8] sm:$0xff]
    %v399 = vld [vmem:[#allocation2 + $0x8b0] sm:$0xff]
    %v400 = vld [vmem:[#allocation2 + $0x8b8] sm:$0xff]
    %v401 = vld [vmem:[#allocation2 + $0x8c0] sm:$0xff]
    %v402 = vld [vmem:[#allocation2 + $0x8c8] sm:$0xff]
    %v403 = vld [vmem:[#allocation2 + $0x8d0] sm:$0xff]
    %v404 = vld [vmem:[#allocation2 + $0x8d8] sm:$0xff]
    %v405 = vld [vmem:[#allocation2 + $0x8e0] sm:$0xff]
    %v406 = vld [vmem:[#allocation2 + $0x8e8] sm:$0xff]
    %v407 = vld [vmem:[#allocation2 + $0x8f0] sm:$0xff]
    %v408 = vld [vmem:[#allocation2 + $0x8f8] sm:$0xff]
    %v409 = vld [vmem:[#allocation4] sm:$0x3f]
    %v411 = vlaneseq
    %v412 = vshrl.u32 %v411, 7
    %v413 = vsub.s32 0, %v412
    %v414 = vrot.slane %v409, %v413
    %v415 = vlaneseq
    %v416 = vshrl.u32 %v415, 7
    %v417 = vsub.s32 1, %v416
    %v418 = vrot.slane %v409, %v417
    %v419 = vlaneseq
    %v420 = vshrl.u32 %v419, 7
    %v421 = vsub.s32 2, %v420
    %v422 = vrot.slane %v409, %v421
    %v423 = vlaneseq
    %v424 = vshrl.u32 %v423, 7
    %v425 = vsub.s32 3, %v424
    %v426 = vrot.slane %v409, %v425
    %v427 = vlaneseq
    %v428 = vshrl.u32 %v427, 7
    %v429 = vsub.s32 4, %v428
    %v430 = vrot.slane %v409, %v429
    %v431 = vlaneseq
    %v432 = vshrl.u32 %v431, 7
    %v433 = vsub.s32 5, %v432
    %v434 = vrot.slane %v409, %v433
    %v729 = vunpack.c.l.b16 %v121
    %v730 = vunpack.c.h.b16 %v121
    %v731 = vunpack.c.l.b16 %v122
    %v732 = vunpack.c.h.b16 %v122
    %v733 = vunpack.c.l.b16 %v123
    %v734 = vunpack.c.h.b16 %v123
    %v735 = vunpack.c.l.b16 %v124
    %v736 = vunpack.c.h.b16 %v124
    %v737 = vunpack.c.l.b16 %v125
    %v738 = vunpack.c.h.b16 %v125
    %v739 = vunpack.c.l.b16 %v126
    %v740 = vunpack.c.h.b16 %v126
    %v741 = vunpack.c.l.b16 %v127
    %v742 = vunpack.c.h.b16 %v127
    %v743 = vunpack.c.l.b16 %v128
    %v744 = vunpack.c.h.b16 %v128
    %v745 = vunpack.c.l.b16 %v129
    %v746 = vunpack.c.h.b16 %v129
    %v747 = vunpack.c.l.b16 %v130
    %v748 = vunpack.c.h.b16 %v130
    %v749 = vunpack.c.l.b16 %v131
    %v750 = vunpack.c.h.b16 %v131
    %v751 = vunpack.c.l.b16 %v132
    %v752 = vunpack.c.h.b16 %v132
    %v753 = vunpack.c.l.b16 %v133
    %v754 = vunpack.c.h.b16 %v133
    %v755 = vunpack.c.l.b16 %v134
    %v756 = vunpack.c.h.b16 %v134
    %v757 = vunpack.c.l.b16 %v135
    %v758 = vunpack.c.h.b16 %v135
    %v759 = vunpack.c.l.b16 %v136
    %v760 = vunpack.c.h.b16 %v136
    %v761 = vunpack.c.l.b16 %v137
    %v762 = vunpack.c.h.b16 %v137
    %v763 = vunpack.c.l.b16 %v138
    %v764 = vunpack.c.h.b16 %v138
    %v765 = vunpack.c.l.b16 %v139
    %v766 = vunpack.c.h.b16 %v139
    %v767 = vunpack.c.l.b16 %v140
    %v768 = vunpack.c.h.b16 %v140
    %v769 = vunpack.c.l.b16 %v141
    %v770 = vunpack.c.h.b16 %v141
    %v771 = vunpack.c.l.b16 %v142
    %v772 = vunpack.c.h.b16 %v142
    %v773 = vunpack.c.l.b16 %v143
    %v774 = vunpack.c.h.b16 %v143
    %v775 = vunpack.c.l.b16 %v144
    %v776 = vunpack.c.h.b16 %v144
    %v777 = vunpack.c.l.b16 %v145
    %v778 = vunpack.c.h.b16 %v145
    %v779 = vunpack.c.l.b16 %v146
    %v780 = vunpack.c.h.b16 %v146
    %v781 = vunpack.c.l.b16 %v147
    %v782 = vunpack.c.h.b16 %v147
    %v783 = vunpack.c.l.b16 %v148
    %v784 = vunpack.c.h.b16 %v148
    %v785 = vunpack.c.l.b16 %v149
    %v786 = vunpack.c.h.b16 %v149
    %v787 = vunpack.c.l.b16 %v150
    %v788 = vunpack.c.h.b16 %v150
    %v789 = vunpack.c.l.b16 %v151
    %v790 = vunpack.c.h.b16 %v151
    %v791 = vunpack.c.l.b16 %v152
    %v792 = vunpack.c.h.b16 %v152
    %v793 = vunpack.c.l.b16 %v153
    %v794 = vunpack.c.h.b16 %v153
    %v795 = vunpack.c.l.b16 %v154
    %v796 = vunpack.c.h.b16 %v154
    %v797 = vunpack.c.l.b16 %v155
    %v798 = vunpack.c.h.b16 %v155
    %v799 = vunpack.c.l.b16 %v156
    %v800 = vunpack.c.h.b16 %v156
    %v801 = vunpack.c.l.b16 %v157
    %v802 = vunpack.c.h.b16 %v157
    %v803 = vunpack.c.l.b16 %v158
    %v804 = vunpack.c.h.b16 %v158
    %v805 = vunpack.c.l.b16 %v159
    %v806 = vunpack.c.h.b16 %v159
    %v807 = vunpack.c.l.b16 %v160
    %v808 = vunpack.c.h.b16 %v160
    %v809 = vunpack.c.l.b16 %v161
    %v810 = vunpack.c.h.b16 %v161
    %v811 = vunpack.c.l.b16 %v162
    %v812 = vunpack.c.h.b16 %v162
    %v813 = vunpack.c.l.b16 %v163
    %v814 = vunpack.c.h.b16 %v163
    %v815 = vunpack.c.l.b16 %v164
    %v816 = vunpack.c.h.b16 %v164
    %v817 = vunpack.c.l.b16 %v165
    %v818 = vunpack.c.h.b16 %v165
    %v819 = vunpack.c.l.b16 %v166
    %v820 = vunpack.c.h.b16 %v166
    %v821 = vunpack.c.l.b16 %v167
    %v822 = vunpack.c.h.b16 %v167
    %v823 = vunpack.c.l.b16 %v168
    %v824 = vunpack.c.h.b16 %v168
    %v825 = vunpack.c.l.b16 %v169
    %v826 = vunpack.c.h.b16 %v169
    %v827 = vunpack.c.l.b16 %v170
    %v828 = vunpack.c.h.b16 %v170
    %v829 = vunpack.c.l.b16 %v171
    %v830 = vunpack.c.h.b16 %v171
    %v831 = vunpack.c.l.b16 %v172
    %v832 = vunpack.c.h.b16 %v172
    %v833 = vunpack.c.l.b16 %v173
    %v834 = vunpack.c.h.b16 %v173
    %v835 = vunpack.c.l.b16 %v174
    %v836 = vunpack.c.h.b16 %v174
    %v837 = vunpack.c.l.b16 %v175
    %v838 = vunpack.c.h.b16 %v175
    %v839 = vunpack.c.l.b16 %v176
    %v840 = vunpack.c.h.b16 %v176
    %v841 = vunpack.c.l.b16 %v177
    %v842 = vunpack.c.h.b16 %v177
    %v843 = vunpack.c.l.b16 %v178
    %v844 = vunpack.c.h.b16 %v178
    %v845 = vunpack.c.l.b16 %v179
    %v846 = vunpack.c.h.b16 %v179
    %v847 = vunpack.c.l.b16 %v180
    %v848 = vunpack.c.h.b16 %v180
    %v849 = vunpack.c.l.b16 %v181
    %v850 = vunpack.c.h.b16 %v181
    %v851 = vunpack.c.l.b16 %v182
    %v852 = vunpack.c.h.b16 %v182
    %v853 = vunpack.c.l.b16 %v183
    %v854 = vunpack.c.h.b16 %v183
    %v855 = vunpack.c.l.b16 %v184
    %v856 = vunpack.c.h.b16 %v184
    %v857 = vunpack.c.l.b16 %v185
    %v858 = vunpack.c.h.b16 %v185
    %v859 = vunpack.c.l.b16 %v186
    %v860 = vunpack.c.h.b16 %v186
    %v861 = vunpack.c.l.b16 %v187
    %v862 = vunpack.c.h.b16 %v187
    %v863 = vunpack.c.l.b16 %v188
    %v864 = vunpack.c.h.b16 %v188
    %v865 = vunpack.c.l.b16 %v189
    %v866 = vunpack.c.h.b16 %v189
    %v867 = vunpack.c.l.b16 %v190
    %v868 = vunpack.c.h.b16 %v190
    %v869 = vunpack.c.l.b16 %v191
    %v870 = vunpack.c.h.b16 %v191
    %v871 = vunpack.c.l.b16 %v192
    %v872 = vunpack.c.h.b16 %v192
    %v873 = vunpack.c.l.b16 %v193
    %v874 = vunpack.c.h.b16 %v193
    %v875 = vunpack.c.l.b16 %v194
    %v876 = vunpack.c.h.b16 %v194
    %v877 = vunpack.c.l.b16 %v195
    %v878 = vunpack.c.h.b16 %v195
    %v879 = vunpack.c.l.b16 %v196
    %v880 = vunpack.c.h.b16 %v196
    %v881 = vunpack.c.l.b16 %v197
    %v882 = vunpack.c.h.b16 %v197
    %v883 = vunpack.c.l.b16 %v198
    %v884 = vunpack.c.h.b16 %v198
    %v885 = vunpack.c.l.b16 %v199
    %v886 = vunpack.c.h.b16 %v199
    %v887 = vunpack.c.l.b16 %v200
    %v888 = vunpack.c.h.b16 %v200
    %v889 = vunpack.c.l.b16 %v201
    %v890 = vunpack.c.h.b16 %v201
    %v891 = vunpack.c.l.b16 %v202
    %v892 = vunpack.c.h.b16 %v202
    %v893 = vunpack.c.l.b16 %v203
    %v894 = vunpack.c.h.b16 %v203
    %v895 = vunpack.c.l.b16 %v204
    %v896 = vunpack.c.h.b16 %v204
    %v897 = vunpack.c.l.b16 %v205
    %v898 = vunpack.c.h.b16 %v205
    %v899 = vunpack.c.l.b16 %v206
    %v900 = vunpack.c.h.b16 %v206
    %v901 = vunpack.c.l.b16 %v207
    %v902 = vunpack.c.h.b16 %v207
    %v903 = vunpack.c.l.b16 %v208
    %v904 = vunpack.c.h.b16 %v208
    %v905 = vunpack.c.l.b16 %v209
    %v906 = vunpack.c.h.b16 %v209
    %v907 = vunpack.c.l.b16 %v210
    %v908 = vunpack.c.h.b16 %v210
    %v909 = vunpack.c.l.b16 %v211
    %v910 = vunpack.c.h.b16 %v211
    %v911 = vunpack.c.l.b16 %v212
    %v912 = vunpack.c.h.b16 %v212
    %v913 = vunpack.c.l.b16 %v213
    %v914 = vunpack.c.h.b16 %v213
    %v915 = vunpack.c.l.b16 %v214
    %v916 = vunpack.c.h.b16 %v214
    %v917 = vunpack.c.l.b16 %v215
    %v918 = vunpack.c.h.b16 %v215
    %v919 = vunpack.c.l.b16 %v216
    %v920 = vunpack.c.h.b16 %v216
    %v921 = vunpack.c.l.b16 %v217
    %v922 = vunpack.c.h.b16 %v217
    %v923 = vunpack.c.l.b16 %v218
    %v924 = vunpack.c.h.b16 %v218
    %v925 = vunpack.c.l.b16 %v219
    %v926 = vunpack.c.h.b16 %v219
    %v927 = vunpack.c.l.b16 %v220
    %v928 = vunpack.c.h.b16 %v220
    %v929 = vunpack.c.l.b16 %v221
    %v930 = vunpack.c.h.b16 %v221
    %v931 = vunpack.c.l.b16 %v222
    %v932 = vunpack.c.h.b16 %v222
    %v933 = vunpack.c.l.b16 %v223
    %v934 = vunpack.c.h.b16 %v223
    %v935 = vunpack.c.l.b16 %v224
    %v936 = vunpack.c.h.b16 %v224
    %v937 = vunpack.c.l.b16 %v225
    %v938 = vunpack.c.h.b16 %v225
    %v939 = vunpack.c.l.b16 %v226
    %v940 = vunpack.c.h.b16 %v226
    %v941 = vunpack.c.l.b16 %v227
    %v942 = vunpack.c.h.b16 %v227
    %v943 = vunpack.c.l.b16 %v228
    %v944 = vunpack.c.h.b16 %v228
    %v945 = vunpack.c.l.b16 %v229
    %v946 = vunpack.c.h.b16 %v229
    %v947 = vunpack.c.l.b16 %v230
    %v948 = vunpack.c.h.b16 %v230
    %v949 = vunpack.c.l.b16 %v231
    %v950 = vunpack.c.h.b16 %v231
    %v951 = vunpack.c.l.b16 %v232
    %v952 = vunpack.c.h.b16 %v232
    %v953 = vunpack.c.l.b16 %v233
    %v954 = vunpack.c.h.b16 %v233
    %v955 = vunpack.c.l.b16 %v234
    %v956 = vunpack.c.h.b16 %v234
    %v957 = vunpack.c.l.b16 %v235
    %v958 = vunpack.c.h.b16 %v235
    %v959 = vunpack.c.l.b16 %v236
    %v960 = vunpack.c.h.b16 %v236
    %v961 = vunpack.c.l.b16 %v237
    %v962 = vunpack.c.h.b16 %v237
    %v963 = vunpack.c.l.b16 %v238
    %v964 = vunpack.c.h.b16 %v238
    %v965 = vunpack.c.l.b16 %v239
    %v966 = vunpack.c.h.b16 %v239
    %v967 = vunpack.c.l.b16 %v240
    %v968 = vunpack.c.h.b16 %v240
    %v969 = vunpack.c.l.b16 %v241
    %v970 = vunpack.c.h.b16 %v241
    %v971 = vunpack.c.l.b16 %v242
    %v972 = vunpack.c.h.b16 %v242
    %v973 = vunpack.c.l.b16 %v243
    %v974 = vunpack.c.h.b16 %v243
    %v975 = vunpack.c.l.b16 %v244
    %v976 = vunpack.c.h.b16 %v244
    %v977 = vunpack.c.l.b16 %v245
    %v978 = vunpack.c.h.b16 %v245
    %v979 = vunpack.c.l.b16 %v246
    %v980 = vunpack.c.h.b16 %v246
    %v981 = vunpack.c.l.b16 %v247
    %v982 = vunpack.c.h.b16 %v247
    %v983 = vunpack.c.l.b16 %v248
    %v984 = vunpack.c.h.b16 %v248
    %v985 = vunpack.c.l.b16 %v249
    %v986 = vunpack.c.h.b16 %v249
    %v987 = vunpack.c.l.b16 %v250
    %v988 = vunpack.c.h.b16 %v250
    %v989 = vunpack.c.l.b16 %v251
    %v990 = vunpack.c.h.b16 %v251
    %v991 = vunpack.c.l.b16 %v252
    %v992 = vunpack.c.h.b16 %v252
    %v993 = vunpack.c.l.b16 %v253
    %v994 = vunpack.c.h.b16 %v253
    %v995 = vunpack.c.l.b16 %v254
    %v996 = vunpack.c.h.b16 %v254
    %v997 = vunpack.c.l.b16 %v255
    %v998 = vunpack.c.h.b16 %v255
    %v999 = vunpack.c.l.b16 %v256
    %v1000 = vunpack.c.h.b16 %v256
    %v1001 = vunpack.c.l.b16 %v257
    %v1002 = vunpack.c.h.b16 %v257
    %v1003 = vunpack.c.l.b16 %v258
    %v1004 = vunpack.c.h.b16 %v258
    %v1005 = vunpack.c.l.b16 %v259
    %v1006 = vunpack.c.h.b16 %v259
    %v1007 = vunpack.c.l.b16 %v260
    %v1008 = vunpack.c.h.b16 %v260
    %v1009 = vunpack.c.l.b16 %v261
    %v1010 = vunpack.c.h.b16 %v261
    %v1011 = vunpack.c.l.b16 %v262
    %v1012 = vunpack.c.h.b16 %v262
    %v1013 = vunpack.c.l.b16 %v263
    %v1014 = vunpack.c.h.b16 %v263
    %v1015 = vunpack.c.l.b16 %v264
    %v1016 = vunpack.c.h.b16 %v264
    %v1017 = vunpack.c.l.b16 %v265
    %v1018 = vunpack.c.h.b16 %v265
    %v1019 = vunpack.c.l.b16 %v266
    %v1020 = vunpack.c.h.b16 %v266
    %v1021 = vunpack.c.l.b16 %v267
    %v1022 = vunpack.c.h.b16 %v267
    %v1023 = vunpack.c.l.b16 %v268
    %v1024 = vunpack.c.h.b16 %v268
    %v1025 = vunpack.c.l.b16 %v269
    %v1026 = vunpack.c.h.b16 %v269
    %v1027 = vunpack.c.l.b16 %v270
    %v1028 = vunpack.c.h.b16 %v270
    %v1029 = vunpack.c.l.b16 %v271
    %v1030 = vunpack.c.h.b16 %v271
    %v1031 = vunpack.c.l.b16 %v272
    %v1032 = vunpack.c.h.b16 %v272
    %v1033 = vunpack.c.l.b16 %v273
    %v1034 = vunpack.c.h.b16 %v273
    %v1035 = vunpack.c.l.b16 %v274
    %v1036 = vunpack.c.h.b16 %v274
    %v1037 = vunpack.c.l.b16 %v275
    %v1038 = vunpack.c.h.b16 %v275
    %v1039 = vunpack.c.l.b16 %v276
    %v1040 = vunpack.c.h.b16 %v276
    %v1041 = vunpack.c.l.b16 %v277
    %v1042 = vunpack.c.h.b16 %v277
    %v1043 = vunpack.c.l.b16 %v278
    %v1044 = vunpack.c.h.b16 %v278
    %v1045 = vunpack.c.l.b16 %v279
    %v1046 = vunpack.c.h.b16 %v279
    %v1047 = vunpack.c.l.b16 %v280
    %v1048 = vunpack.c.h.b16 %v280
    %v1049 = vunpack.c.l.b16 %v281
    %v1050 = vunpack.c.h.b16 %v281
    %v1051 = vunpack.c.l.b16 %v282
    %v1052 = vunpack.c.h.b16 %v282
    %v1053 = vunpack.c.l.b16 %v283
    %v1054 = vunpack.c.h.b16 %v283
    %v1055 = vunpack.c.l.b16 %v284
    %v1056 = vunpack.c.h.b16 %v284
    %v1057 = vunpack.c.l.b16 %v285
    %v1058 = vunpack.c.h.b16 %v285
    %v1059 = vunpack.c.l.b16 %v286
    %v1060 = vunpack.c.h.b16 %v286
    %v1061 = vunpack.c.l.b16 %v287
    %v1062 = vunpack.c.h.b16 %v287
    %v1063 = vunpack.c.l.b16 %v288
    %v1064 = vunpack.c.h.b16 %v288
    %v1065 = vunpack.c.l.b16 %v289
    %v1066 = vunpack.c.h.b16 %v289
    %v1067 = vunpack.c.l.b16 %v290
    %v1068 = vunpack.c.h.b16 %v290
    %v1069 = vunpack.c.l.b16 %v291
    %v1070 = vunpack.c.h.b16 %v291
    %v1071 = vunpack.c.l.b16 %v292
    %v1072 = vunpack.c.h.b16 %v292
    %v1073 = vunpack.c.l.b16 %v293
    %v1074 = vunpack.c.h.b16 %v293
    %v1075 = vunpack.c.l.b16 %v294
    %v1076 = vunpack.c.h.b16 %v294
    %v1077 = vunpack.c.l.b16 %v295
    %v1078 = vunpack.c.h.b16 %v295
    %v1079 = vunpack.c.l.b16 %v296
    %v1080 = vunpack.c.h.b16 %v296
    %v1081 = vunpack.c.l.b16 %v297
    %v1082 = vunpack.c.h.b16 %v297
    %v1083 = vunpack.c.l.b16 %v298
    %v1084 = vunpack.c.h.b16 %v298
    %v1085 = vunpack.c.l.b16 %v299
    %v1086 = vunpack.c.h.b16 %v299
    %v1087 = vunpack.c.l.b16 %v300
    %v1088 = vunpack.c.h.b16 %v300
    %v1089 = vunpack.c.l.b16 %v301
    %v1090 = vunpack.c.h.b16 %v301
    %v1091 = vunpack.c.l.b16 %v302
    %v1092 = vunpack.c.h.b16 %v302
    %v1093 = vunpack.c.l.b16 %v303
    %v1094 = vunpack.c.h.b16 %v303
    %v1095 = vunpack.c.l.b16 %v304
    %v1096 = vunpack.c.h.b16 %v304
    %v1097 = vunpack.c.l.b16 %v305
    %v1098 = vunpack.c.h.b16 %v305
    %v1099 = vunpack.c.l.b16 %v306
    %v1100 = vunpack.c.h.b16 %v306
    %v1101 = vunpack.c.l.b16 %v307
    %v1102 = vunpack.c.h.b16 %v307
    %v1103 = vunpack.c.l.b16 %v308
    %v1104 = vunpack.c.h.b16 %v308
    %v1105 = vunpack.c.l.b16 %v309
    %v1106 = vunpack.c.h.b16 %v309
    %v1107 = vunpack.c.l.b16 %v310
    %v1108 = vunpack.c.h.b16 %v310
    %v1109 = vunpack.c.l.b16 %v311
    %v1110 = vunpack.c.h.b16 %v311
    %v1111 = vunpack.c.l.b16 %v312
    %v1112 = vunpack.c.h.b16 %v312
    %v1113 = vunpack.c.l.b16 %v313
    %v1114 = vunpack.c.h.b16 %v313
    %v1115 = vunpack.c.l.b16 %v314
    %v1116 = vunpack.c.h.b16 %v314
    %v1117 = vunpack.c.l.b16 %v315
    %v1118 = vunpack.c.h.b16 %v315
    %v1119 = vunpack.c.l.b16 %v316
    %v1120 = vunpack.c.h.b16 %v316
    %v1121 = vunpack.c.l.b16 %v317
    %v1122 = vunpack.c.h.b16 %v317
    %v1123 = vunpack.c.l.b16 %v318
    %v1124 = vunpack.c.h.b16 %v318
    %v1125 = vunpack.c.l.b16 %v319
    %v1126 = vunpack.c.h.b16 %v319
    %v1127 = vunpack.c.l.b16 %v320
    %v1128 = vunpack.c.h.b16 %v320
    %v1129 = vunpack.c.l.b16 %v321
    %v1130 = vunpack.c.h.b16 %v321
    %v1131 = vunpack.c.l.b16 %v322
    %v1132 = vunpack.c.h.b16 %v322
    %v1133 = vunpack.c.l.b16 %v323
    %v1134 = vunpack.c.h.b16 %v323
    %v1135 = vunpack.c.l.b16 %v324
    %v1136 = vunpack.c.h.b16 %v324
    %v1137 = vunpack.c.l.b16 %v325
    %v1138 = vunpack.c.h.b16 %v325
    %v1139 = vunpack.c.l.b16 %v326
    %v1140 = vunpack.c.h.b16 %v326
    %v1141 = vunpack.c.l.b16 %v327
    %v1142 = vunpack.c.h.b16 %v327
    %v1143 = vunpack.c.l.b16 %v328
    %v1144 = vunpack.c.h.b16 %v328
    %v1145 = vunpack.c.l.b16 %v329
    %v1146 = vunpack.c.h.b16 %v329
    %v1147 = vunpack.c.l.b16 %v330
    %v1148 = vunpack.c.h.b16 %v330
    %v1149 = vunpack.c.l.b16 %v331
    %v1150 = vunpack.c.h.b16 %v331
    %v1151 = vunpack.c.l.b16 %v332
    %v1152 = vunpack.c.h.b16 %v332
    %v1153 = vunpack.c.l.b16 %v333
    %v1154 = vunpack.c.h.b16 %v333
    %v1155 = vunpack.c.l.b16 %v334
    %v1156 = vunpack.c.h.b16 %v334
    %v1157 = vunpack.c.l.b16 %v335
    %v1158 = vunpack.c.h.b16 %v335
    %v1159 = vunpack.c.l.b16 %v336
    %v1160 = vunpack.c.h.b16 %v336
    %v1161 = vunpack.c.l.b16 %v337
    %v1162 = vunpack.c.h.b16 %v337
    %v1163 = vunpack.c.l.b16 %v338
    %v1164 = vunpack.c.h.b16 %v338
    %v1165 = vunpack.c.l.b16 %v339
    %v1166 = vunpack.c.h.b16 %v339
    %v1167 = vunpack.c.l.b16 %v340
    %v1168 = vunpack.c.h.b16 %v340
    %v1169 = vunpack.c.l.b16 %v341
    %v1170 = vunpack.c.h.b16 %v341
    %v1171 = vunpack.c.l.b16 %v342
    %v1172 = vunpack.c.h.b16 %v342
    %v1173 = vunpack.c.l.b16 %v343
    %v1174 = vunpack.c.h.b16 %v343
    %v1175 = vunpack.c.l.b16 %v344
    %v1176 = vunpack.c.h.b16 %v344
    %v1177 = vunpack.c.l.b16 %v345
    %v1178 = vunpack.c.h.b16 %v345
    %v1179 = vunpack.c.l.b16 %v346
    %v1180 = vunpack.c.h.b16 %v346
    %v1181 = vunpack.c.l.b16 %v347
    %v1182 = vunpack.c.h.b16 %v347
    %v1183 = vunpack.c.l.b16 %v348
    %v1184 = vunpack.c.h.b16 %v348
    %v1185 = vunpack.c.l.b16 %v349
    %v1186 = vunpack.c.h.b16 %v349
    %v1187 = vunpack.c.l.b16 %v350
    %v1188 = vunpack.c.h.b16 %v350
    %v1189 = vunpack.c.l.b16 %v351
    %v1190 = vunpack.c.h.b16 %v351
    %v1191 = vunpack.c.l.b16 %v352
    %v1192 = vunpack.c.h.b16 %v352
    %v1193 = vunpack.c.l.b16 %v353
    %v1194 = vunpack.c.h.b16 %v353
    %v1195 = vunpack.c.l.b16 %v354
    %v1196 = vunpack.c.h.b16 %v354
    %v1197 = vunpack.c.l.b16 %v355
    %v1198 = vunpack.c.h.b16 %v355
    %v1199 = vunpack.c.l.b16 %v356
    %v1200 = vunpack.c.h.b16 %v356
    %v1201 = vunpack.c.l.b16 %v357
    %v1202 = vunpack.c.h.b16 %v357
    %v1203 = vunpack.c.l.b16 %v358
    %v1204 = vunpack.c.h.b16 %v358
    %v1205 = vunpack.c.l.b16 %v359
    %v1206 = vunpack.c.h.b16 %v359
    %v1207 = vunpack.c.l.b16 %v360
    %v1208 = vunpack.c.h.b16 %v360
    %v1209 = vunpack.c.l.b16 %v361
    %v1210 = vunpack.c.h.b16 %v361
    %v1211 = vunpack.c.l.b16 %v362
    %v1212 = vunpack.c.h.b16 %v362
    %v1213 = vunpack.c.l.b16 %v363
    %v1214 = vunpack.c.h.b16 %v363
    %v1215 = vunpack.c.l.b16 %v364
    %v1216 = vunpack.c.h.b16 %v364
    %v1217 = vunpack.c.l.b16 %v365
    %v1218 = vunpack.c.h.b16 %v365
    %v1219 = vunpack.c.l.b16 %v366
    %v1220 = vunpack.c.h.b16 %v366
    %v1221 = vunpack.c.l.b16 %v367
    %v1222 = vunpack.c.h.b16 %v367
    %v1223 = vunpack.c.l.b16 %v368
    %v1224 = vunpack.c.h.b16 %v368
    %v1225 = vunpack.c.l.b16 %v369
    %v1226 = vunpack.c.h.b16 %v369
    %v1227 = vunpack.c.l.b16 %v370
    %v1228 = vunpack.c.h.b16 %v370
    %v1229 = vunpack.c.l.b16 %v371
    %v1230 = vunpack.c.h.b16 %v371
    %v1231 = vunpack.c.l.b16 %v372
    %v1232 = vunpack.c.h.b16 %v372
    %v1233 = vunpack.c.l.b16 %v373
    %v1234 = vunpack.c.h.b16 %v373
    %v1235 = vunpack.c.l.b16 %v374
    %v1236 = vunpack.c.h.b16 %v374
    %v1237 = vunpack.c.l.b16 %v375
    %v1238 = vunpack.c.h.b16 %v375
    %v1239 = vunpack.c.l.b16 %v376
    %v1240 = vunpack.c.h.b16 %v376
    %v1241 = vunpack.c.l.b16 %v377
    %v1242 = vunpack.c.h.b16 %v377
    %v1243 = vunpack.c.l.b16 %v378
    %v1244 = vunpack.c.h.b16 %v378
    %v1245 = vunpack.c.l.b16 %v379
    %v1246 = vunpack.c.h.b16 %v379
    %v1247 = vunpack.c.l.b16 %v380
    %v1248 = vunpack.c.h.b16 %v380
    %v1249 = vunpack.c.l.b16 %v381
    %v1250 = vunpack.c.h.b16 %v381
    %v1251 = vunpack.c.l.b16 %v382
    %v1252 = vunpack.c.h.b16 %v382
    %v1253 = vunpack.c.l.b16 %v383
    %v1254 = vunpack.c.h.b16 %v383
    %v1255 = vunpack.c.l.b16 %v384
    %v1256 = vunpack.c.h.b16 %v384
    %v1257 = vunpack.c.l.b16 %v385
    %v1258 = vunpack.c.h.b16 %v385
    %v1259 = vunpack.c.l.b16 %v386
    %v1260 = vunpack.c.h.b16 %v386
    %v1261 = vunpack.c.l.b16 %v387
    %v1262 = vunpack.c.h.b16 %v387
    %v1263 = vunpack.c.l.b16 %v388
    %v1264 = vunpack.c.h.b16 %v388
    %v1265 = vunpack.c.l.b16 %v389
    %v1266 = vunpack.c.h.b16 %v389
    %v1267 = vunpack.c.l.b16 %v390
    %v1268 = vunpack.c.h.b16 %v390
    %v1269 = vunpack.c.l.b16 %v391
    %v1270 = vunpack.c.h.b16 %v391
    %v1271 = vunpack.c.l.b16 %v392
    %v1272 = vunpack.c.h.b16 %v392
    %v1273 = vunpack.c.l.b16 %v393
    %v1274 = vunpack.c.h.b16 %v393
    %v1275 = vunpack.c.l.b16 %v394
    %v1276 = vunpack.c.h.b16 %v394
    %v1277 = vunpack.c.l.b16 %v395
    %v1278 = vunpack.c.h.b16 %v395
    %v1279 = vunpack.c.l.b16 %v396
    %v1280 = vunpack.c.h.b16 %v396
    %v1281 = vunpack.c.l.b16 %v397
    %v1282 = vunpack.c.h.b16 %v397
    %v1283 = vunpack.c.l.b16 %v398
    %v1284 = vunpack.c.h.b16 %v398
    %v1285 = vunpack.c.l.b16 %v399
    %v1286 = vunpack.c.h.b16 %v399
    %v1287 = vunpack.c.l.b16 %v400
    %v1288 = vunpack.c.h.b16 %v400
    %v1289 = vunpack.c.l.b16 %v401
    %v1290 = vunpack.c.h.b16 %v401
    %v1291 = vunpack.c.l.b16 %v402
    %v1292 = vunpack.c.h.b16 %v402
    %v1293 = vunpack.c.l.b16 %v403
    %v1294 = vunpack.c.h.b16 %v403
    %v1295 = vunpack.c.l.b16 %v404
    %v1296 = vunpack.c.h.b16 %v404
    %v1297 = vunpack.c.l.b16 %v405
    %v1298 = vunpack.c.h.b16 %v405
    %v1299 = vunpack.c.l.b16 %v406
    %v1300 = vunpack.c.h.b16 %v406
    %v1301 = vunpack.c.l.b16 %v407
    %v1302 = vunpack.c.h.b16 %v407
    %v1303 = vunpack.c.l.b16 %v408
    %v1304 = vunpack.c.h.b16 %v408
    %v1305 = vpack.c.b16 %v735, %v729
    %v1306 = vpack.c.b16 %v736, %v730
    %v1307 = vpack.c.b16 %v737, %v731
    %v1308 = vpack.c.b16 %v738, %v732
    %v1309 = vpack.c.b16 %v739, %v733
    %v1310 = vpack.c.b16 %v740, %v734
    %v1311 = vpack.c.b16 %v747, %v741
    %v1312 = vpack.c.b16 %v748, %v742
    %v1313 = vpack.c.b16 %v749, %v743
    %v1314 = vpack.c.b16 %v750, %v744
    %v1315 = vpack.c.b16 %v751, %v745
    %v1316 = vpack.c.b16 %v752, %v746
    %v1317 = vpack.c.b16 %v759, %v753
    %v1318 = vpack.c.b16 %v760, %v754
    %v1319 = vpack.c.b16 %v761, %v755
    %v1320 = vpack.c.b16 %v762, %v756
    %v1321 = vpack.c.b16 %v763, %v757
    %v1322 = vpack.c.b16 %v764, %v758
    %v1323 = vpack.c.b16 %v771, %v765
    %v1324 = vpack.c.b16 %v772, %v766
    %v1325 = vpack.c.b16 %v773, %v767
    %v1326 = vpack.c.b16 %v774, %v768
    %v1327 = vpack.c.b16 %v775, %v769
    %v1328 = vpack.c.b16 %v776, %v770
    %v1329 = vpack.c.b16 %v783, %v777
    %v1330 = vpack.c.b16 %v784, %v778
    %v1331 = vpack.c.b16 %v785, %v779
    %v1332 = vpack.c.b16 %v786, %v780
    %v1333 = vpack.c.b16 %v787, %v781
    %v1334 = vpack.c.b16 %v788, %v782
    %v1335 = vpack.c.b16 %v795, %v789
    %v1336 = vpack.c.b16 %v796, %v790
    %v1337 = vpack.c.b16 %v797, %v791
    %v1338 = vpack.c.b16 %v798, %v792
    %v1339 = vpack.c.b16 %v799, %v793
    %v1340 = vpack.c.b16 %v800, %v794
    %v1341 = vpack.c.b16 %v807, %v801
    %v1342 = vpack.c.b16 %v808, %v802
    %v1343 = vpack.c.b16 %v809, %v803
    %v1344 = vpack.c.b16 %v810, %v804
    %v1345 = vpack.c.b16 %v811, %v805
    %v1346 = vpack.c.b16 %v812, %v806
    %v1347 = vpack.c.b16 %v819, %v813
    %v1348 = vpack.c.b16 %v820, %v814
    %v1349 = vpack.c.b16 %v821, %v815
    %v1350 = vpack.c.b16 %v822, %v816
    %v1351 = vpack.c.b16 %v823, %v817
    %v1352 = vpack.c.b16 %v824, %v818
    %v1353 = vpack.c.b16 %v831, %v825
    %v1354 = vpack.c.b16 %v832, %v826
    %v1355 = vpack.c.b16 %v833, %v827
    %v1356 = vpack.c.b16 %v834, %v828
    %v1357 = vpack.c.b16 %v835, %v829
    %v1358 = vpack.c.b16 %v836, %v830
    %v1359 = vpack.c.b16 %v843, %v837
    %v1360 = vpack.c.b16 %v844, %v838
    %v1361 = vpack.c.b16 %v845, %v839
    %v1362 = vpack.c.b16 %v846, %v840
    %v1363 = vpack.c.b16 %v847, %v841
    %v1364 = vpack.c.b16 %v848, %v842
    %v1365 = vpack.c.b16 %v855, %v849
    %v1366 = vpack.c.b16 %v856, %v850
    %v1367 = vpack.c.b16 %v857, %v851
    %v1368 = vpack.c.b16 %v858, %v852
    %v1369 = vpack.c.b16 %v859, %v853
    %v1370 = vpack.c.b16 %v860, %v854
    %v1371 = vpack.c.b16 %v867, %v861
    %v1372 = vpack.c.b16 %v868, %v862
    %v1373 = vpack.c.b16 %v869, %v863
    %v1374 = vpack.c.b16 %v870, %v864
    %v1375 = vpack.c.b16 %v871, %v865
    %v1376 = vpack.c.b16 %v872, %v866
    %v1377 = vpack.c.b16 %v879, %v873
    %v1378 = vpack.c.b16 %v880, %v874
    %v1379 = vpack.c.b16 %v881, %v875
    %v1380 = vpack.c.b16 %v882, %v876
    %v1381 = vpack.c.b16 %v883, %v877
    %v1382 = vpack.c.b16 %v884, %v878
    %v1383 = vpack.c.b16 %v891, %v885
    %v1384 = vpack.c.b16 %v892, %v886
    %v1385 = vpack.c.b16 %v893, %v887
    %v1386 = vpack.c.b16 %v894, %v888
    %v1387 = vpack.c.b16 %v895, %v889
    %v1388 = vpack.c.b16 %v896, %v890
    %v1389 = vpack.c.b16 %v903, %v897
    %v1390 = vpack.c.b16 %v904, %v898
    %v1391 = vpack.c.b16 %v905, %v899
    %v1392 = vpack.c.b16 %v906, %v900
    %v1393 = vpack.c.b16 %v907, %v901
    %v1394 = vpack.c.b16 %v908, %v902
    %v1395 = vpack.c.b16 %v915, %v909
    %v1396 = vpack.c.b16 %v916, %v910
    %v1397 = vpack.c.b16 %v917, %v911
    %v1398 = vpack.c.b16 %v918, %v912
    %v1399 = vpack.c.b16 %v919, %v913
    %v1400 = vpack.c.b16 %v920, %v914
    %v1401 = vpack.c.b16 %v927, %v921
    %v1402 = vpack.c.b16 %v928, %v922
    %v1403 = vpack.c.b16 %v929, %v923
    %v1404 = vpack.c.b16 %v930, %v924
    %v1405 = vpack.c.b16 %v931, %v925
    %v1406 = vpack.c.b16 %v932, %v926
    %v1407 = vpack.c.b16 %v939, %v933
    %v1408 = vpack.c.b16 %v940, %v934
    %v1409 = vpack.c.b16 %v941, %v935
    %v1410 = vpack.c.b16 %v942, %v936
    %v1411 = vpack.c.b16 %v943, %v937
    %v1412 = vpack.c.b16 %v944, %v938
    %v1413 = vpack.c.b16 %v951, %v945
    %v1414 = vpack.c.b16 %v952, %v946
    %v1415 = vpack.c.b16 %v953, %v947
    %v1416 = vpack.c.b16 %v954, %v948
    %v1417 = vpack.c.b16 %v955, %v949
    %v1418 = vpack.c.b16 %v956, %v950
    %v1419 = vpack.c.b16 %v963, %v957
    %v1420 = vpack.c.b16 %v964, %v958
    %v1421 = vpack.c.b16 %v965, %v959
    %v1422 = vpack.c.b16 %v966, %v960
    %v1423 = vpack.c.b16 %v967, %v961
    %v1424 = vpack.c.b16 %v968, %v962
    %v1425 = vpack.c.b16 %v975, %v969
    %v1426 = vpack.c.b16 %v976, %v970
    %v1427 = vpack.c.b16 %v977, %v971
    %v1428 = vpack.c.b16 %v978, %v972
    %v1429 = vpack.c.b16 %v979, %v973
    %v1430 = vpack.c.b16 %v980, %v974
    %v1431 = vpack.c.b16 %v987, %v981
    %v1432 = vpack.c.b16 %v988, %v982
    %v1433 = vpack.c.b16 %v989, %v983
    %v1434 = vpack.c.b16 %v990, %v984
    %v1435 = vpack.c.b16 %v991, %v985
    %v1436 = vpack.c.b16 %v992, %v986
    %v1437 = vpack.c.b16 %v999, %v993
    %v1438 = vpack.c.b16 %v1000, %v994
    %v1439 = vpack.c.b16 %v1001, %v995
    %v1440 = vpack.c.b16 %v1002, %v996
    %v1441 = vpack.c.b16 %v1003, %v997
    %v1442 = vpack.c.b16 %v1004, %v998
    %v1443 = vpack.c.b16 %v1011, %v1005
    %v1444 = vpack.c.b16 %v1012, %v1006
    %v1445 = vpack.c.b16 %v1013, %v1007
    %v1446 = vpack.c.b16 %v1014, %v1008
    %v1447 = vpack.c.b16 %v1015, %v1009
    %v1448 = vpack.c.b16 %v1016, %v1010
    %v1449 = vpack.c.b16 %v1023, %v1017
    %v1450 = vpack.c.b16 %v1024, %v1018
    %v1451 = vpack.c.b16 %v1025, %v1019
    %v1452 = vpack.c.b16 %v1026, %v1020
    %v1453 = vpack.c.b16 %v1027, %v1021
    %v1454 = vpack.c.b16 %v1028, %v1022
    %v1455 = vpack.c.b16 %v1035, %v1029
    %v1456 = vpack.c.b16 %v1036, %v1030
    %v1457 = vpack.c.b16 %v1037, %v1031
    %v1458 = vpack.c.b16 %v1038, %v1032
    %v1459 = vpack.c.b16 %v1039, %v1033
    %v1460 = vpack.c.b16 %v1040, %v1034
    %v1461 = vpack.c.b16 %v1047, %v1041
    %v1462 = vpack.c.b16 %v1048, %v1042
    %v1463 = vpack.c.b16 %v1049, %v1043
    %v1464 = vpack.c.b16 %v1050, %v1044
    %v1465 = vpack.c.b16 %v1051, %v1045
    %v1466 = vpack.c.b16 %v1052, %v1046
    %v1467 = vpack.c.b16 %v1059, %v1053
    %v1468 = vpack.c.b16 %v1060, %v1054
    %v1469 = vpack.c.b16 %v1061, %v1055
    %v1470 = vpack.c.b16 %v1062, %v1056
    %v1471 = vpack.c.b16 %v1063, %v1057
    %v1472 = vpack.c.b16 %v1064, %v1058
    %v1473 = vpack.c.b16 %v1071, %v1065
    %v1474 = vpack.c.b16 %v1072, %v1066
    %v1475 = vpack.c.b16 %v1073, %v1067
    %v1476 = vpack.c.b16 %v1074, %v1068
    %v1477 = vpack.c.b16 %v1075, %v1069
    %v1478 = vpack.c.b16 %v1076, %v1070
    %v1479 = vpack.c.b16 %v1083, %v1077
    %v1480 = vpack.c.b16 %v1084, %v1078
    %v1481 = vpack.c.b16 %v1085, %v1079
    %v1482 = vpack.c.b16 %v1086, %v1080
    %v1483 = vpack.c.b16 %v1087, %v1081
    %v1484 = vpack.c.b16 %v1088, %v1082
    %v1485 = vpack.c.b16 %v1095, %v1089
    %v1486 = vpack.c.b16 %v1096, %v1090
    %v1487 = vpack.c.b16 %v1097, %v1091
    %v1488 = vpack.c.b16 %v1098, %v1092
    %v1489 = vpack.c.b16 %v1099, %v1093
    %v1490 = vpack.c.b16 %v1100, %v1094
    %v1491 = vpack.c.b16 %v1107, %v1101
    %v1492 = vpack.c.b16 %v1108, %v1102
    %v1493 = vpack.c.b16 %v1109, %v1103
    %v1494 = vpack.c.b16 %v1110, %v1104
    %v1495 = vpack.c.b16 %v1111, %v1105
    %v1496 = vpack.c.b16 %v1112, %v1106
    %v1497 = vpack.c.b16 %v1119, %v1113
    %v1498 = vpack.c.b16 %v1120, %v1114
    %v1499 = vpack.c.b16 %v1121, %v1115
    %v1500 = vpack.c.b16 %v1122, %v1116
    %v1501 = vpack.c.b16 %v1123, %v1117
    %v1502 = vpack.c.b16 %v1124, %v1118
    %v1503 = vpack.c.b16 %v1131, %v1125
    %v1504 = vpack.c.b16 %v1132, %v1126
    %v1505 = vpack.c.b16 %v1133, %v1127
    %v1506 = vpack.c.b16 %v1134, %v1128
    %v1507 = vpack.c.b16 %v1135, %v1129
    %v1508 = vpack.c.b16 %v1136, %v1130
    %v1509 = vpack.c.b16 %v1143, %v1137
    %v1510 = vpack.c.b16 %v1144, %v1138
    %v1511 = vpack.c.b16 %v1145, %v1139
    %v1512 = vpack.c.b16 %v1146, %v1140
    %v1513 = vpack.c.b16 %v1147, %v1141
    %v1514 = vpack.c.b16 %v1148, %v1142
    %v1515 = vpack.c.b16 %v1155, %v1149
    %v1516 = vpack.c.b16 %v1156, %v1150
    %v1517 = vpack.c.b16 %v1157, %v1151
    %v1518 = vpack.c.b16 %v1158, %v1152
    %v1519 = vpack.c.b16 %v1159, %v1153
    %v1520 = vpack.c.b16 %v1160, %v1154
    %v1521 = vpack.c.b16 %v1167, %v1161
    %v1522 = vpack.c.b16 %v1168, %v1162
    %v1523 = vpack.c.b16 %v1169, %v1163
    %v1524 = vpack.c.b16 %v1170, %v1164
    %v1525 = vpack.c.b16 %v1171, %v1165
    %v1526 = vpack.c.b16 %v1172, %v1166
    %v1527 = vpack.c.b16 %v1179, %v1173
    %v1528 = vpack.c.b16 %v1180, %v1174
    %v1529 = vpack.c.b16 %v1181, %v1175
    %v1530 = vpack.c.b16 %v1182, %v1176
    %v1531 = vpack.c.b16 %v1183, %v1177
    %v1532 = vpack.c.b16 %v1184, %v1178
    %v1533 = vpack.c.b16 %v1191, %v1185
    %v1534 = vpack.c.b16 %v1192, %v1186
    %v1535 = vpack.c.b16 %v1193, %v1187
    %v1536 = vpack.c.b16 %v1194, %v1188
    %v1537 = vpack.c.b16 %v1195, %v1189
    %v1538 = vpack.c.b16 %v1196, %v1190
    %v1539 = vpack.c.b16 %v1203, %v1197
    %v1540 = vpack.c.b16 %v1204, %v1198
    %v1541 = vpack.c.b16 %v1205, %v1199
    %v1542 = vpack.c.b16 %v1206, %v1200
    %v1543 = vpack.c.b16 %v1207, %v1201
    %v1544 = vpack.c.b16 %v1208, %v1202
    %v1545 = vpack.c.b16 %v1215, %v1209
    %v1546 = vpack.c.b16 %v1216, %v1210
    %v1547 = vpack.c.b16 %v1217, %v1211
    %v1548 = vpack.c.b16 %v1218, %v1212
    %v1549 = vpack.c.b16 %v1219, %v1213
    %v1550 = vpack.c.b16 %v1220, %v1214
    %v1551 = vpack.c.b16 %v1227, %v1221
    %v1552 = vpack.c.b16 %v1228, %v1222
    %v1553 = vpack.c.b16 %v1229, %v1223
    %v1554 = vpack.c.b16 %v1230, %v1224
    %v1555 = vpack.c.b16 %v1231, %v1225
    %v1556 = vpack.c.b16 %v1232, %v1226
    %v1557 = vpack.c.b16 %v1239, %v1233
    %v1558 = vpack.c.b16 %v1240, %v1234
    %v1559 = vpack.c.b16 %v1241, %v1235
    %v1560 = vpack.c.b16 %v1242, %v1236
    %v1561 = vpack.c.b16 %v1243, %v1237
    %v1562 = vpack.c.b16 %v1244, %v1238
    %v1563 = vpack.c.b16 %v1251, %v1245
    %v1564 = vpack.c.b16 %v1252, %v1246
    %v1565 = vpack.c.b16 %v1253, %v1247
    %v1566 = vpack.c.b16 %v1254, %v1248
    %v1567 = vpack.c.b16 %v1255, %v1249
    %v1568 = vpack.c.b16 %v1256, %v1250
    %v1569 = vpack.c.b16 %v1263, %v1257
    %v1570 = vpack.c.b16 %v1264, %v1258
    %v1571 = vpack.c.b16 %v1265, %v1259
    %v1572 = vpack.c.b16 %v1266, %v1260
    %v1573 = vpack.c.b16 %v1267, %v1261
    %v1574 = vpack.c.b16 %v1268, %v1262
    %v1575 = vpack.c.b16 %v1275, %v1269
    %v1576 = vpack.c.b16 %v1276, %v1270
    %v1577 = vpack.c.b16 %v1277, %v1271
    %v1578 = vpack.c.b16 %v1278, %v1272
    %v1579 = vpack.c.b16 %v1279, %v1273
    %v1580 = vpack.c.b16 %v1280, %v1274
    %v1581 = vpack.c.b16 %v1287, %v1281
    %v1582 = vpack.c.b16 %v1288, %v1282
    %v1583 = vpack.c.b16 %v1289, %v1283
    %v1584 = vpack.c.b16 %v1290, %v1284
    %v1585 = vpack.c.b16 %v1291, %v1285
    %v1586 = vpack.c.b16 %v1292, %v1286
    %v1587 = vpack.c.b16 %v1299, %v1293
    %v1588 = vpack.c.b16 %v1300, %v1294
    %v1589 = vpack.c.b16 %v1301, %v1295
    %v1590 = vpack.c.b16 %v1302, %v1296
    %v1591 = vpack.c.b16 %v1303, %v1297
    %v1592 = vpack.c.b16 %v1304, %v1298
    %1881 = vmatprep.subr.bf16.mxu0 %v1306
    %1882 = vmatpush1.bf16.msra.mxu0 %v1305
    %1883 = vmatprep.subr.bf16.mxu0 %v1312
    %1884 = vmatpush1.bf16.msra.mxu0 %v1311
    %1885 = vmatprep.subr.bf16.mxu0 %v1318
    %1886 = vmatpush1.bf16.msra.mxu0 %v1317
    %1887 = vmatprep.subr.bf16.mxu0 %v1324
    %1888 = vmatpush1.bf16.msra.mxu0 %v1323
    %1889 = vmatprep.subr.bf16.mxu0 %v1330
    %1890 = vmatpush1.bf16.msra.mxu0 %v1329
    %1891 = vmatprep.subr.bf16.mxu0 %v1336
    %1892 = vmatpush1.bf16.msra.mxu0 %v1335
    %1893 = vmatprep.subr.bf16.mxu0 %v1342
    %1894 = vmatpush1.bf16.msra.mxu0 %v1341
    %1895 = vmatprep.subr.bf16.mxu0 %v1348
    %1896 = vmatpush1.bf16.msra.mxu0 %v1347
    %1897 = vmatprep.subr.bf16.mxu0 %v1354
    %1898 = vmatpush1.bf16.msra.mxu0 %v1353
    %1899 = vmatprep.subr.bf16.mxu0 %v1360
    %1900 = vmatpush1.bf16.msra.mxu0 %v1359
    %1901 = vmatprep.subr.bf16.mxu0 %v1366
    %1902 = vmatpush1.bf16.msra.mxu0 %v1365
    %1903 = vmatprep.subr.bf16.mxu0 %v1372
    %1904 = vmatpush1.bf16.msra.mxu0 %v1371
    %1905 = vmatprep.subr.bf16.mxu0 %v1378
    %1906 = vmatpush1.bf16.msra.mxu0 %v1377
    %1907 = vmatprep.subr.bf16.mxu0 %v1384
    %1908 = vmatpush1.bf16.msra.mxu0 %v1383
    %1909 = vmatprep.subr.bf16.mxu0 %v1390
    %1910 = vmatpush1.bf16.msra.mxu0 %v1389
    %1911 = vmatprep.subr.bf16.mxu0 %v1396
    %1912 = vmatpush1.bf16.msra.mxu0 %v1395
    %1913 = vmatprep.mubr.bf16.mxu0 %v116
    %1914 = vmatmul.mubr.bf16.gmra.mrb[0].mxu0 %v115
    %v1915 = vpop.f32.mrb[0].mxu0
    %v1916 = vadd.f32 %v414, %v1915
    %v1917 = vpop.f32.mrb[0].mxu0
    %v1918 = vadd.f32 %v418, %v1917
    %v1919 = vpop.f32.mrb[0].mxu0
    %v1920 = vadd.f32 %v414, %v1919
    %v1921 = vpop.f32.mrb[0].mxu0
    %v1922 = vadd.f32 %v418, %v1921
    %1923 = vdwg.mxu0
    %1924 = vmatprep.subr.bf16.mxu0 %v1402
    %1925 = vmatpush1.bf16.msra.mxu0 %v1401
    %1926 = vmatprep.subr.bf16.mxu0 %v1408
    %1927 = vmatpush1.bf16.msra.mxu0 %v1407
    %1928 = vmatprep.subr.bf16.mxu0 %v1414
    %1929 = vmatpush1.bf16.msra.mxu0 %v1413
    %1930 = vmatprep.subr.bf16.mxu0 %v1420
    %1931 = vmatpush1.bf16.msra.mxu0 %v1419
    %1932 = vmatprep.subr.bf16.mxu0 %v1426
    %1933 = vmatpush1.bf16.msra.mxu0 %v1425
    %1934 = vmatprep.subr.bf16.mxu0 %v1432
    %1935 = vmatpush1.bf16.msra.mxu0 %v1431
    %1936 = vmatprep.subr.bf16.mxu0 %v1438
    %1937 = vmatpush1.bf16.msra.mxu0 %v1437
    %1938 = vmatprep.subr.bf16.mxu0 %v1444
    %1939 = vmatpush1.bf16.msra.mxu0 %v1443
    %1940 = vmatprep.subr.bf16.mxu0 %v1450
    %1941 = vmatpush1.bf16.msra.mxu0 %v1449
    %1942 = vmatprep.subr.bf16.mxu0 %v1456
    %1943 = vmatpush1.bf16.msra.mxu0 %v1455
    %1944 = vmatprep.subr.bf16.mxu0 %v1462
    %1945 = vmatpush1.bf16.msra.mxu0 %v1461
    %1946 = vmatprep.subr.bf16.mxu0 %v1468
    %1947 = vmatpush1.bf16.msra.mxu0 %v1467
    %1948 = vmatprep.subr.bf16.mxu0 %v1474
    %1949 = vmatpush1.bf16.msra.mxu0 %v1473
    %1950 = vmatprep.subr.bf16.mxu0 %v1480
    %1951 = vmatpush1.bf16.msra.mxu0 %v1479
    %1952 = vmatprep.subr.bf16.mxu0 %v1486
    %1953 = vmatpush1.bf16.msra.mxu0 %v1485
    %1954 = vmatprep.subr.bf16.mxu0 %v1492
    %1955 = vmatpush1.bf16.msra.mxu0 %v1491
    %1956 = vmatprep.mubr.bf16.mxu0 %v118
    %1957 = vmatmul.mubr.bf16.gmra.mrb[0].mxu0 %v117
    %v1958 = vpop.f32.mrb[0].mxu0
    %v1959 = vadd.f32 %v1916, %v1958
    %v1960 = vpop.f32.mrb[0].mxu0
    %v1961 = vadd.f32 %v1918, %v1960
    %v1962 = vpop.f32.mrb[0].mxu0
    %v1963 = vadd.f32 %v1920, %v1962
    %v1964 = vpop.f32.mrb[0].mxu0
    %v1965 = vadd.f32 %v1922, %v1964
    %1966 = vdwg.mxu0
    %1967 = vmatprep.subr.bf16.mxu0 %v1498
    %1968 = vmatpush1.bf16.msra.mxu0 %v1497
    %1969 = vmatprep.subr.bf16.mxu0 %v1504
    %1970 = vmatpush1.bf16.msra.mxu0 %v1503
    %1971 = vmatprep.subr.bf16.mxu0 %v1510
    %1972 = vmatpush1.bf16.msra.mxu0 %v1509
    %1973 = vmatprep.subr.bf16.mxu0 %v1516
    %1974 = vmatpush1.bf16.msra.mxu0 %v1515
    %1975 = vmatprep.subr.bf16.mxu0 %v1522
    %1976 = vmatpush1.bf16.msra.mxu0 %v1521
    %1977 = vmatprep.subr.bf16.mxu0 %v1528
    %1978 = vmatpush1.bf16.msra.mxu0 %v1527
    %1979 = vmatprep.subr.bf16.mxu0 %v1534
    %1980 = vmatpush1.bf16.msra.mxu0 %v1533
    %1981 = vmatprep.subr.bf16.mxu0 %v1540
    %1982 = vmatpush1.bf16.msra.mxu0 %v1539
    %1983 = vmatprep.subr.bf16.mxu0 %v1546
    %1984 = vmatpush1.bf16.msra.mxu0 %v1545
    %1985 = vmatprep.subr.bf16.mxu0 %v1552
    %1986 = vmatpush1.bf16.msra.mxu0 %v1551
    %1987 = vmatprep.subr.bf16.mxu0 %v1558
    %1988 = vmatpush1.bf16.msra.mxu0 %v1557
    %1989 = vmatprep.subr.bf16.mxu0 %v1564
    %1990 = vmatpush1.bf16.msra.mxu0 %v1563
    %1991 = vmatprep.subr.bf16.mxu0 %v1570
    %1992 = vmatpush1.bf16.msra.mxu0 %v1569
    %1993 = vmatprep.subr.bf16.mxu0 %v1576
    %1994 = vmatpush1.bf16.msra.mxu0 %v1575
    %1995 = vmatprep.subr.bf16.mxu0 %v1582
    %1996 = vmatpush1.bf16.msra.mxu0 %v1581
    %1997 = vmatprep.subr.bf16.mxu0 %v1588
    %1998 = vmatpush1.bf16.msra.mxu0 %v1587
    %1999 = vmatprep.mubr.bf16.mxu0 %v120
    %2000 = vmatmul.mubr.bf16.gmra.mrb[0].mxu0 %v119
    %v2001 = vpop.f32.mrb[0].mxu0
    %v2002 = vadd.f32 %v1959, %v2001
    %v2003 = vpop.f32.mrb[0].mxu0
    %v2004 = vadd.f32 %v1961, %v2003
    %v2005 = vpop.f32.mrb[0].mxu0
    %v2006 = vadd.f32 %v1963, %v2005
    %v2007 = vpop.f32.mrb[0].mxu0
    %v2008 = vadd.f32 %v1965, %v2007
    %2009 = vdwg.mxu0
    %2010 = vmatprep.subr.bf16.mxu0 %v1308
    %2011 = vmatpush1.bf16.msra.mxu0 %v1307
    %2012 = vmatprep.subr.bf16.mxu0 %v1314
    %2013 = vmatpush1.bf16.msra.mxu0 %v1313
    %2014 = vmatprep.subr.bf16.mxu0 %v1320
    %2015 = vmatpush1.bf16.msra.mxu0 %v1319
    %2016 = vmatprep.subr.bf16.mxu0 %v1326
    %2017 = vmatpush1.bf16.msra.mxu0 %v1325
    %2018 = vmatprep.subr.bf16.mxu0 %v1332
    %2019 = vmatpush1.bf16.msra.mxu0 %v1331
    %2020 = vmatprep.subr.bf16.mxu0 %v1338
    %2021 = vmatpush1.bf16.msra.mxu0 %v1337
    %2022 = vmatprep.subr.bf16.mxu0 %v1344
    %2023 = vmatpush1.bf16.msra.mxu0 %v1343
    %2024 = vmatprep.subr.bf16.mxu0 %v1350
    %2025 = vmatpush1.bf16.msra.mxu0 %v1349
    %2026 = vmatprep.subr.bf16.mxu0 %v1356
    %2027 = vmatpush1.bf16.msra.mxu0 %v1355
    %2028 = vmatprep.subr.bf16.mxu0 %v1362
    %2029 = vmatpush1.bf16.msra.mxu0 %v1361
    %2030 = vmatprep.subr.bf16.mxu0 %v1368
    %2031 = vmatpush1.bf16.msra.mxu0 %v1367
    %2032 = vmatprep.subr.bf16.mxu0 %v1374
    %2033 = vmatpush1.bf16.msra.mxu0 %v1373
    %2034 = vmatprep.subr.bf16.mxu0 %v1380
    %2035 = vmatpush1.bf16.msra.mxu0 %v1379
    %2036 = vmatprep.subr.bf16.mxu0 %v1386
    %2037 = vmatpush1.bf16.msra.mxu0 %v1385
    %2038 = vmatprep.subr.bf16.mxu0 %v1392
    %2039 = vmatpush1.bf16.msra.mxu0 %v1391
    %2040 = vmatprep.subr.bf16.mxu0 %v1398
    %2041 = vmatpush1.bf16.msra.mxu0 %v1397
    %2042 = vmatprep.mubr.bf16.mxu0 %v116
    %2043 = vmatmul.mubr.bf16.gmra.mrb[0].mxu0 %v115
    %v2044 = vpop.f32.mrb[0].mxu0
    %v2045 = vadd.f32 %v422, %v2044
    %v2046 = vpop.f32.mrb[0].mxu0
    %v2047 = vadd.f32 %v426, %v2046
    %v2048 = vpop.f32.mrb[0].mxu0
    %v2049 = vadd.f32 %v422, %v2048
    %v2050 = vpop.f32.mrb[0].mxu0
    %v2051 = vadd.f32 %v426, %v2050
    %2052 = vdwg.mxu0
    %2053 = vmatprep.subr.bf16.mxu0 %v1404
    %2054 = vmatpush1.bf16.msra.mxu0 %v1403
    %2055 = vmatprep.subr.bf16.mxu0 %v1410
    %2056 = vmatpush1.bf16.msra.mxu0 %v1409
    %2057 = vmatprep.subr.bf16.mxu0 %v1416
    %2058 = vmatpush1.bf16.msra.mxu0 %v1415
    %2059 = vmatprep.subr.bf16.mxu0 %v1422
    %2060 = vmatpush1.bf16.msra.mxu0 %v1421
    %2061 = vmatprep.subr.bf16.mxu0 %v1428
    %2062 = vmatpush1.bf16.msra.mxu0 %v1427
    %2063 = vmatprep.subr.bf16.mxu0 %v1434
    %2064 = vmatpush1.bf16.msra.mxu0 %v1433
    %2065 = vmatprep.subr.bf16.mxu0 %v1440
    %2066 = vmatpush1.bf16.msra.mxu0 %v1439
    %2067 = vmatprep.subr.bf16.mxu0 %v1446
    %2068 = vmatpush1.bf16.msra.mxu0 %v1445
    %2069 = vmatprep.subr.bf16.mxu0 %v1452
    %2070 = vmatpush1.bf16.msra.mxu0 %v1451
    %2071 = vmatprep.subr.bf16.mxu0 %v1458
    %2072 = vmatpush1.bf16.msra.mxu0 %v1457
    %2073 = vmatprep.subr.bf16.mxu0 %v1464
    %2074 = vmatpush1.bf16.msra.mxu0 %v1463
    %2075 = vmatprep.subr.bf16.mxu0 %v1470
    %2076 = vmatpush1.bf16.msra.mxu0 %v1469
    %2077 = vmatprep.subr.bf16.mxu0 %v1476
    %2078 = vmatpush1.bf16.msra.mxu0 %v1475
    %2079 = vmatprep.subr.bf16.mxu0 %v1482
    %2080 = vmatpush1.bf16.msra.mxu0 %v1481
    %2081 = vmatprep.subr.bf16.mxu0 %v1488
    %2082 = vmatpush1.bf16.msra.mxu0 %v1487
    %2083 = vmatprep.subr.bf16.mxu0 %v1494
    %2084 = vmatpush1.bf16.msra.mxu0 %v1493
    %2085 = vmatprep.mubr.bf16.mxu0 %v118
    %2086 = vmatmul.mubr.bf16.gmra.mrb[0].mxu0 %v117
    %v2087 = vpop.f32.mrb[0].mxu0
    %v2088 = vadd.f32 %v2045, %v2087
    %v2089 = vpop.f32.mrb[0].mxu0
    %v2090 = vadd.f32 %v2047, %v2089
    %v2091 = vpop.f32.mrb[0].mxu0
    %v2092 = vadd.f32 %v2049, %v2091
    %v2093 = vpop.f32.mrb[0].mxu0
    %v2094 = vadd.f32 %v2051, %v2093
    %2095 = vdwg.mxu0
    %2096 = vmatprep.subr.bf16.mxu0 %v1500
    %2097 = vmatpush1.bf16.msra.mxu0 %v1499
    %2098 = vmatprep.subr.bf16.mxu0 %v1506
    %2099 = vmatpush1.bf16.msra.mxu0 %v1505
    %2100 = vmatprep.subr.bf16.mxu0 %v1512
    %2101 = vmatpush1.bf16.msra.mxu0 %v1511
    %2102 = vmatprep.subr.bf16.mxu0 %v1518
    %2103 = vmatpush1.bf16.msra.mxu0 %v1517
    %2104 = vmatprep.subr.bf16.mxu0 %v1524
    %2105 = vmatpush1.bf16.msra.mxu0 %v1523
    %2106 = vmatprep.subr.bf16.mxu0 %v1530
    %2107 = vmatpush1.bf16.msra.mxu0 %v1529
    %2108 = vmatprep.subr.bf16.mxu0 %v1536
    %2109 = vmatpush1.bf16.msra.mxu0 %v1535
    %2110 = vmatprep.subr.bf16.mxu0 %v1542
    %2111 = vmatpush1.bf16.msra.mxu0 %v1541
    %2112 = vmatprep.subr.bf16.mxu0 %v1548
    %2113 = vmatpush1.bf16.msra.mxu0 %v1547
    %2114 = vmatprep.subr.bf16.mxu0 %v1554
    %2115 = vmatpush1.bf16.msra.mxu0 %v1553
    %2116 = vmatprep.subr.bf16.mxu0 %v1560
    %2117 = vmatpush1.bf16.msra.mxu0 %v1559
    %2118 = vmatprep.subr.bf16.mxu0 %v1566
    %2119 = vmatpush1.bf16.msra.mxu0 %v1565
    %2120 = vmatprep.subr.bf16.mxu0 %v1572
    %2121 = vmatpush1.bf16.msra.mxu0 %v1571
    %2122 = vmatprep.subr.bf16.mxu0 %v1578
    %2123 = vmatpush1.bf16.msra.mxu0 %v1577
    %2124 = vmatprep.subr.bf16.mxu0 %v1584
    %2125 = vmatpush1.bf16.msra.mxu0 %v1583
    %2126 = vmatprep.subr.bf16.mxu0 %v1590
    %2127 = vmatpush1.bf16.msra.mxu0 %v1589
    %2128 = vmatprep.mubr.bf16.mxu0 %v120
    %2129 = vmatmul.mubr.bf16.gmra.mrb[0].mxu0 %v119
    %v2130 = vpop.f32.mrb[0].mxu0
    %v2131 = vadd.f32 %v2088, %v2130
    %v2132 = vpop.f32.mrb[0].mxu0
    %v2133 = vadd.f32 %v2090, %v2132
    %v2134 = vpop.f32.mrb[0].mxu0
    %v2135 = vadd.f32 %v2092, %v2134
    %v2136 = vpop.f32.mrb[0].mxu0
    %v2137 = vadd.f32 %v2094, %v2136
    %2138 = vdwg.mxu0
    %2139 = vmatprep.subr.bf16.mxu0 %v1310
    %2140 = vmatpush1.bf16.msra.mxu0 %v1309
    %2141 = vmatprep.subr.bf16.mxu0 %v1316
    %2142 = vmatpush1.bf16.msra.mxu0 %v1315
    %2143 = vmatprep.subr.bf16.mxu0 %v1322
    %2144 = vmatpush1.bf16.msra.mxu0 %v1321
    %2145 = vmatprep.subr.bf16.mxu0 %v1328
    %2146 = vmatpush1.bf16.msra.mxu0 %v1327
    %2147 = vmatprep.subr.bf16.mxu0 %v1334
    %2148 = vmatpush1.bf16.msra.mxu0 %v1333
    %2149 = vmatprep.subr.bf16.mxu0 %v1340
    %2150 = vmatpush1.bf16.msra.mxu0 %v1339
    %2151 = vmatprep.subr.bf16.mxu0 %v1346
    %2152 = vmatpush1.bf16.msra.mxu0 %v1345
    %2153 = vmatprep.subr.bf16.mxu0 %v1352
    %2154 = vmatpush1.bf16.msra.mxu0 %v1351
    %2155 = vmatprep.subr.bf16.mxu0 %v1358
    %2156 = vmatpush1.bf16.msra.mxu0 %v1357
    %2157 = vmatprep.subr.bf16.mxu0 %v1364
    %2158 = vmatpush1.bf16.msra.mxu0 %v1363
    %2159 = vmatprep.subr.bf16.mxu0 %v1370
    %2160 = vmatpush1.bf16.msra.mxu0 %v1369
    %2161 = vmatprep.subr.bf16.mxu0 %v1376
    %2162 = vmatpush1.bf16.msra.mxu0 %v1375
    %2163 = vmatprep.subr.bf16.mxu0 %v1382
    %2164 = vmatpush1.bf16.msra.mxu0 %v1381
    %2165 = vmatprep.subr.bf16.mxu0 %v1388
    %2166 = vmatpush1.bf16.msra.mxu0 %v1387
    %2167 = vmatprep.subr.bf16.mxu0 %v1394
    %2168 = vmatpush1.bf16.msra.mxu0 %v1393
    %2169 = vmatprep.subr.bf16.mxu0 %v1400
    %2170 = vmatpush1.bf16.msra.mxu0 %v1399
    %2171 = vmatprep.mubr.bf16.mxu0 %v116
    %2172 = vmatmul.mubr.bf16.gmra.mrb[0].mxu0 %v115
    %v2173 = vpop.f32.mrb[0].mxu0
    %v2174 = vadd.f32 %v430, %v2173
    %v2175 = vpop.f32.mrb[0].mxu0
    %v2176 = vadd.f32 %v434, %v2175
    %v2177 = vpop.f32.mrb[0].mxu0
    %v2178 = vadd.f32 %v430, %v2177
    %v2179 = vpop.f32.mrb[0].mxu0
    %v2180 = vadd.f32 %v434, %v2179
    %2181 = vdwg.mxu0
    %2182 = vmatprep.subr.bf16.mxu0 %v1406
    %2183 = vmatpush1.bf16.msra.mxu0 %v1405
    %2184 = vmatprep.subr.bf16.mxu0 %v1412
    %2185 = vmatpush1.bf16.msra.mxu0 %v1411
    %2186 = vmatprep.subr.bf16.mxu0 %v1418
    %2187 = vmatpush1.bf16.msra.mxu0 %v1417
    %2188 = vmatprep.subr.bf16.mxu0 %v1424
    %2189 = vmatpush1.bf16.msra.mxu0 %v1423
    %2190 = vmatprep.subr.bf16.mxu0 %v1430
    %2191 = vmatpush1.bf16.msra.mxu0 %v1429
    %2192 = vmatprep.subr.bf16.mxu0 %v1436
    %2193 = vmatpush1.bf16.msra.mxu0 %v1435
    %2194 = vmatprep.subr.bf16.mxu0 %v1442
    %2195 = vmatpush1.bf16.msra.mxu0 %v1441
    %2196 = vmatprep.subr.bf16.mxu0 %v1448
    %2197 = vmatpush1.bf16.msra.mxu0 %v1447
    %2198 = vmatprep.subr.bf16.mxu0 %v1454
    %2199 = vmatpush1.bf16.msra.mxu0 %v1453
    %2200 = vmatprep.subr.bf16.mxu0 %v1460
    %2201 = vmatpush1.bf16.msra.mxu0 %v1459
    %2202 = vmatprep.subr.bf16.mxu0 %v1466
    %2203 = vmatpush1.bf16.msra.mxu0 %v1465
    %2204 = vmatprep.subr.bf16.mxu0 %v1472
    %2205 = vmatpush1.bf16.msra.mxu0 %v1471
    %2206 = vmatprep.subr.bf16.mxu0 %v1478
    %2207 = vmatpush1.bf16.msra.mxu0 %v1477
    %2208 = vmatprep.subr.bf16.mxu0 %v1484
    %2209 = vmatpush1.bf16.msra.mxu0 %v1483
    %2210 = vmatprep.subr.bf16.mxu0 %v1490
    %2211 = vmatpush1.bf16.msra.mxu0 %v1489
    %2212 = vmatprep.subr.bf16.mxu0 %v1496
    %2213 = vmatpush1.bf16.msra.mxu0 %v1495
    %2214 = vmatprep.mubr.bf16.mxu0 %v118
    %2215 = vmatmul.mubr.bf16.gmra.mrb[0].mxu0 %v117
    %v2216 = vpop.f32.mrb[0].mxu0
    %v2217 = vadd.f32 %v2174, %v2216
    %v2218 = vpop.f32.mrb[0].mxu0
    %v2219 = vadd.f32 %v2176, %v2218
    %v2220 = vpop.f32.mrb[0].mxu0
    %v2221 = vadd.f32 %v2178, %v2220
    %v2222 = vpop.f32.mrb[0].mxu0
    %v2223 = vadd.f32 %v2180, %v2222
    %2224 = vdwg.mxu0
    %2225 = vmatprep.subr.bf16.mxu0 %v1502
    %2226 = vmatpush1.bf16.msra.mxu0 %v1501
    %2227 = vmatprep.subr.bf16.mxu0 %v1508
    %2228 = vmatpush1.bf16.msra.mxu0 %v1507
    %2229 = vmatprep.subr.bf16.mxu0 %v1514
    %2230 = vmatpush1.bf16.msra.mxu0 %v1513
    %2231 = vmatprep.subr.bf16.mxu0 %v1520
    %2232 = vmatpush1.bf16.msra.mxu0 %v1519
    %2233 = vmatprep.subr.bf16.mxu0 %v1526
    %2234 = vmatpush1.bf16.msra.mxu0 %v1525
    %2235 = vmatprep.subr.bf16.mxu0 %v1532
    %2236 = vmatpush1.bf16.msra.mxu0 %v1531
    %2237 = vmatprep.subr.bf16.mxu0 %v1538
    %2238 = vmatpush1.bf16.msra.mxu0 %v1537
    %2239 = vmatprep.subr.bf16.mxu0 %v1544
    %2240 = vmatpush1.bf16.msra.mxu0 %v1543
    %2241 = vmatprep.subr.bf16.mxu0 %v1550
    %2242 = vmatpush1.bf16.msra.mxu0 %v1549
    %2243 = vmatprep.subr.bf16.mxu0 %v1556
    %2244 = vmatpush1.bf16.msra.mxu0 %v1555
    %2245 = vmatprep.subr.bf16.mxu0 %v1562
    %2246 = vmatpush1.bf16.msra.mxu0 %v1561
    %2247 = vmatprep.subr.bf16.mxu0 %v1568
    %2248 = vmatpush1.bf16.msra.mxu0 %v1567
    %2249 = vmatprep.subr.bf16.mxu0 %v1574
    %2250 = vmatpush1.bf16.msra.mxu0 %v1573
    %2251 = vmatprep.subr.bf16.mxu0 %v1580
    %2252 = vmatpush1.bf16.msra.mxu0 %v1579
    %2253 = vmatprep.subr.bf16.mxu0 %v1586
    %2254 = vmatpush1.bf16.msra.mxu0 %v1585
    %2255 = vmatprep.subr.bf16.mxu0 %v1592
    %2256 = vmatpush1.bf16.msra.mxu0 %v1591
    %2257 = vmatprep.mubr.bf16.mxu0 %v120
    %2258 = vmatmul.mubr.bf16.gmra.mrb[0].mxu0 %v119
    %v2259 = vpop.f32.mrb[0].mxu0
    %v2260 = vadd.f32 %v2217, %v2259
    %v2261 = vpop.f32.mrb[0].mxu0
    %v2262 = vadd.f32 %v2219, %v2261
    %v2263 = vpop.f32.mrb[0].mxu0
    %v2264 = vadd.f32 %v2221, %v2263
    %v2265 = vpop.f32.mrb[0].mxu0
    %v2266 = vadd.f32 %v2223, %v2265
    %2267 = vdwg.mxu0
    %v2268 = vmul.f32 %v2002, %v2002
    %v2269 = vmul.f32 %v2004, %v2004
    %v2270 = vmul.f32 %v2131, %v2131
    %v2271 = vmul.f32 %v2133, %v2133
    %v2272 = vmul.f32 %v2260, %v2260
    %v2273 = vmul.f32 %v2262, %v2262
    %v2274 = vmul.f32 %v2006, %v2006
    %v2275 = vmul.f32 %v2008, %v2008
    %v2276 = vmul.f32 %v2135, %v2135
    %v2277 = vmul.f32 %v2137, %v2137
    %v2278 = vmul.f32 %v2264, %v2264
    %v2279 = vmul.f32 %v2266, %v2266
    %v2280 = vpack.c.bf16 %v2274, %v2268
    %v2281 = vpack.c.bf16 %v2275, %v2269
    %v2282 = vpack.c.bf16 %v2276, %v2270
    %v2283 = vpack.c.bf16 %v2277, %v2271
    %v2284 = vpack.c.bf16 %v2278, %v2272
    %v2285 = vpack.c.bf16 %v2279, %v2273
    %v2286 = vld [vmem:[#allocation6] sm:$0xff]
    %v2287 = vld [vmem:[#allocation6 + $0x8] sm:$0xff]
    %v2288 = vld [vmem:[#allocation6 + $0x10] sm:$0xff]
    %v2289 = vld [vmem:[#allocation6 + $0x18] sm:$0xf]
    %v2290 = vld [vmem:[#allocation6 + $0x1c] sm:$0xff]
    %v2291 = vld [vmem:[#allocation6 + $0x24] sm:$0xff]
    %v2292 = vld [vmem:[#allocation6 + $0x2c] sm:$0xff]
    %v2293 = vld [vmem:[#allocation6 + $0x34] sm:$0xf]
    %v2294 = vld [vmem:[#allocation6 + $0x38] sm:$0xff]
    %v2295 = vld [vmem:[#allocation6 + $0x40] sm:$0xff]
    %v2296 = vld [vmem:[#allocation6 + $0x48] sm:$0xff]
    %v2297 = vld [vmem:[#allocation6 + $0x50] sm:$0xf]
    %v2298 = vld [vmem:[#allocation6 + $0x54] sm:$0xff]
    %v2299 = vld [vmem:[#allocation6 + $0x5c] sm:$0xff]
    %v2300 = vld [vmem:[#allocation6 + $0x64] sm:$0xff]
    %v2301 = vld [vmem:[#allocation6 + $0x6c] sm:$0xf]
    %v2302 = vld [vmem:[#allocation6 + $0x70] sm:$0xff]
    %v2303 = vld [vmem:[#allocation6 + $0x78] sm:$0xff]
    %v2304 = vld [vmem:[#allocation6 + $0x80] sm:$0xff]
    %v2305 = vld [vmem:[#allocation6 + $0x88] sm:$0xf]
    %v2306 = vld [vmem:[#allocation6 + $0x8c] sm:$0xff]
    %v2307 = vld [vmem:[#allocation6 + $0x94] sm:$0xff]
    %v2308 = vld [vmem:[#allocation6 + $0x9c] sm:$0xff]
    %v2309 = vld [vmem:[#allocation6 + $0xa4] sm:$0xf]
    %v2310 = vld [vmem:[#allocation6 + $0xa8] sm:$0xff]
    %v2311 = vld [vmem:[#allocation6 + $0xb0] sm:$0xff]
    %v2312 = vld [vmem:[#allocation6 + $0xb8] sm:$0xff]
    %v2313 = vld [vmem:[#allocation6 + $0xc0] sm:$0xf]
    %v2314 = vld [vmem:[#allocation6 + $0xc4] sm:$0xff]
    %v2315 = vld [vmem:[#allocation6 + $0xcc] sm:$0xff]
    %v2316 = vld [vmem:[#allocation6 + $0xd4] sm:$0xff]
    %v2317 = vld [vmem:[#allocation6 + $0xdc] sm:$0xf]
    %v2318 = vld [vmem:[#allocation6 + $0xe0] sm:$0xff]
    %v2319 = vld [vmem:[#allocation6 + $0xe8] sm:$0xff]
    %v2320 = vld [vmem:[#allocation6 + $0xf0] sm:$0xff]
    %v2321 = vld [vmem:[#allocation6 + $0xf8] sm:$0xf]
    %v2322 = vld [vmem:[#allocation6 + $0xfc] sm:$0xff]
    %v2323 = vld [vmem:[#allocation6 + $0x104] sm:$0xff]
    %v2324 = vld [vmem:[#allocation6 + $0x10c] sm:$0xff]
    %v2325 = vld [vmem:[#allocation6 + $0x114] sm:$0xf]
    %v2326 = vld [vmem:[#allocation6 + $0x118] sm:$0xff]
    %v2327 = vld [vmem:[#allocation6 + $0x120] sm:$0xff]
    %v2328 = vld [vmem:[#allocation6 + $0x128] sm:$0xff]
    %v2329 = vld [vmem:[#allocation6 + $0x130] sm:$0xf]
    %v2330 = vld [vmem:[#allocation6 + $0x134] sm:$0xff]
    %v2331 = vld [vmem:[#allocation6 + $0x13c] sm:$0xff]
    %v2332 = vld [vmem:[#allocation6 + $0x144] sm:$0xff]
    %v2333 = vld [vmem:[#allocation6 + $0x14c] sm:$0xf]
    %v2334 = vld [vmem:[#allocation6 + $0x150] sm:$0xff]
    %v2335 = vld [vmem:[#allocation6 + $0x158] sm:$0xff]
    %v2336 = vld [vmem:[#allocation6 + $0x160] sm:$0xff]
    %v2337 = vld [vmem:[#allocation6 + $0x168] sm:$0xf]
    %v2338 = vld [vmem:[#allocation6 + $0x16c] sm:$0xff]
    %v2339 = vld [vmem:[#allocation6 + $0x174] sm:$0xff]
    %v2340 = vld [vmem:[#allocation6 + $0x17c] sm:$0xff]
    %v2341 = vld [vmem:[#allocation6 + $0x184] sm:$0xf]
    %v2342 = vld [vmem:[#allocation6 + $0x188] sm:$0xff]
    %v2343 = vld [vmem:[#allocation6 + $0x190] sm:$0xff]
    %v2344 = vld [vmem:[#allocation6 + $0x198] sm:$0xff]
    %v2345 = vld [vmem:[#allocation6 + $0x1a0] sm:$0xf]
    %v2346 = vld [vmem:[#allocation6 + $0x1a4] sm:$0xff]
    %v2347 = vld [vmem:[#allocation6 + $0x1ac] sm:$0xff]
    %v2348 = vld [vmem:[#allocation6 + $0x1b4] sm:$0xff]
    %v2349 = vld [vmem:[#allocation6 + $0x1bc] sm:$0xf]
    %v2350 = vld [vmem:[#allocation6 + $0x1c0] sm:$0xff]
    %v2351 = vld [vmem:[#allocation6 + $0x1c8] sm:$0xff]
    %v2352 = vld [vmem:[#allocation6 + $0x1d0] sm:$0xff]
    %v2353 = vld [vmem:[#allocation6 + $0x1d8] sm:$0xf]
    %v2354 = vld [vmem:[#allocation6 + $0x1dc] sm:$0xff]
    %v2355 = vld [vmem:[#allocation6 + $0x1e4] sm:$0xff]
    %v2356 = vld [vmem:[#allocation6 + $0x1ec] sm:$0xff]
    %v2357 = vld [vmem:[#allocation6 + $0x1f4] sm:$0xf]
    %v2358 = vld [vmem:[#allocation6 + $0x1f8] sm:$0xff]
    %v2359 = vld [vmem:[#allocation6 + $0x200] sm:$0xff]
    %v2360 = vld [vmem:[#allocation6 + $0x208] sm:$0xff]
    %v2361 = vld [vmem:[#allocation6 + $0x210] sm:$0xf]
    %v2362 = vld [vmem:[#allocation6 + $0x214] sm:$0xff]
    %v2363 = vld [vmem:[#allocation6 + $0x21c] sm:$0xff]
    %v2364 = vld [vmem:[#allocation6 + $0x224] sm:$0xff]
    %v2365 = vld [vmem:[#allocation6 + $0x22c] sm:$0xf]
    %v2366 = vld [vmem:[#allocation6 + $0x230] sm:$0xff]
    %v2367 = vld [vmem:[#allocation6 + $0x238] sm:$0xff]
    %v2368 = vld [vmem:[#allocation6 + $0x240] sm:$0xff]
    %v2369 = vld [vmem:[#allocation6 + $0x248] sm:$0xf]
    %v2370 = vld [vmem:[#allocation6 + $0x24c] sm:$0xff]
    %v2371 = vld [vmem:[#allocation6 + $0x254] sm:$0xff]
    %v2372 = vld [vmem:[#allocation6 + $0x25c] sm:$0xff]
    %v2373 = vld [vmem:[#allocation6 + $0x264] sm:$0xf]
    %v2374 = vld [vmem:[#allocation6 + $0x268] sm:$0xff]
    %v2375 = vld [vmem:[#allocation6 + $0x270] sm:$0xff]
    %v2376 = vld [vmem:[#allocation6 + $0x278] sm:$0xff]
    %v2377 = vld [vmem:[#allocation6 + $0x280] sm:$0xf]
    %v2378 = vld [vmem:[#allocation6 + $0x284] sm:$0xff]
    %v2379 = vld [vmem:[#allocation6 + $0x28c] sm:$0xff]
    %v2380 = vld [vmem:[#allocation6 + $0x294] sm:$0xff]
    %v2381 = vld [vmem:[#allocation6 + $0x29c] sm:$0xf]
    %v2382 = vld [vmem:[#allocation6 + $0x2a0] sm:$0xff]
    %v2383 = vld [vmem:[#allocation6 + $0x2a8] sm:$0xff]
    %v2384 = vld [vmem:[#allocation6 + $0x2b0] sm:$0xff]
    %v2385 = vld [vmem:[#allocation6 + $0x2b8] sm:$0xf]
    %v2386 = vld [vmem:[#allocation6 + $0x2bc] sm:$0xff]
    %v2387 = vld [vmem:[#allocation6 + $0x2c4] sm:$0xff]
    %v2388 = vld [vmem:[#allocation6 + $0x2cc] sm:$0xff]
    %v2389 = vld [vmem:[#allocation6 + $0x2d4] sm:$0xf]
    %v2390 = vld [vmem:[#allocation6 + $0x2d8] sm:$0xff]
    %v2391 = vld [vmem:[#allocation6 + $0x2e0] sm:$0xff]
    %v2392 = vld [vmem:[#allocation6 + $0x2e8] sm:$0xff]
    %v2393 = vld [vmem:[#allocation6 + $0x2f0] sm:$0xf]
    %v2394 = vld [vmem:[#allocation6 + $0x2f4] sm:$0xff]
    %v2395 = vld [vmem:[#allocation6 + $0x2fc] sm:$0xff]
    %v2396 = vld [vmem:[#allocation6 + $0x304] sm:$0xff]
    %v2397 = vld [vmem:[#allocation6 + $0x30c] sm:$0xf]
    %v2398 = vld [vmem:[#allocation6 + $0x310] sm:$0xff]
    %v2399 = vld [vmem:[#allocation6 + $0x318] sm:$0xff]
    %v2400 = vld [vmem:[#allocation6 + $0x320] sm:$0xff]
    %v2401 = vld [vmem:[#allocation6 + $0x328] sm:$0xf]
    %v2402 = vld [vmem:[#allocation6 + $0x32c] sm:$0xff]
    %v2403 = vld [vmem:[#allocation6 + $0x334] sm:$0xff]
    %v2404 = vld [vmem:[#allocation6 + $0x33c] sm:$0xff]
    %v2405 = vld [vmem:[#allocation6 + $0x344] sm:$0xf]
    %v2406 = vld [vmem:[#allocation6 + $0x348] sm:$0xff]
    %v2407 = vld [vmem:[#allocation6 + $0x350] sm:$0xff]
    %v2408 = vld [vmem:[#allocation6 + $0x358] sm:$0xff]
    %v2409 = vld [vmem:[#allocation6 + $0x360] sm:$0xf]
    %v2410 = vld [vmem:[#allocation6 + $0x364] sm:$0xff]
    %v2411 = vld [vmem:[#allocation6 + $0x36c] sm:$0xff]
    %v2412 = vld [vmem:[#allocation6 + $0x374] sm:$0xff]
    %v2413 = vld [vmem:[#allocation6 + $0x37c] sm:$0xf]
    %v2414 = vld [vmem:[#allocation6 + $0x380] sm:$0xff]
    %v2415 = vld [vmem:[#allocation6 + $0x388] sm:$0xff]
    %v2416 = vld [vmem:[#allocation6 + $0x390] sm:$0xff]
    %v2417 = vld [vmem:[#allocation6 + $0x398] sm:$0xf]
    %v2418 = vld [vmem:[#allocation6 + $0x39c] sm:$0xff]
    %v2419 = vld [vmem:[#allocation6 + $0x3a4] sm:$0xff]
    %v2420 = vld [vmem:[#allocation6 + $0x3ac] sm:$0xff]
    %v2421 = vld [vmem:[#allocation6 + $0x3b4] sm:$0xf]
    %v2422 = vld [vmem:[#allocation6 + $0x3b8] sm:$0xff]
    %v2423 = vld [vmem:[#allocation6 + $0x3c0] sm:$0xff]
    %v2424 = vld [vmem:[#allocation6 + $0x3c8] sm:$0xff]
    %v2425 = vld [vmem:[#allocation6 + $0x3d0] sm:$0xf]
    %v2426 = vld [vmem:[#allocation6 + $0x3d4] sm:$0xff]
    %v2427 = vld [vmem:[#allocation6 + $0x3dc] sm:$0xff]
    %v2428 = vld [vmem:[#allocation6 + $0x3e4] sm:$0xff]
    %v2429 = vld [vmem:[#allocation6 + $0x3ec] sm:$0xf]
    %v2430 = vld [vmem:[#allocation6 + $0x3f0] sm:$0xff]
    %v2431 = vld [vmem:[#allocation6 + $0x3f8] sm:$0xff]
    %v2432 = vld [vmem:[#allocation6 + $0x400] sm:$0xff]
    %v2433 = vld [vmem:[#allocation6 + $0x408] sm:$0xf]
    %v2434 = vld [vmem:[#allocation6 + $0x40c] sm:$0xff]
    %v2435 = vld [vmem:[#allocation6 + $0x414] sm:$0xff]
    %v2436 = vld [vmem:[#allocation6 + $0x41c] sm:$0xff]
    %v2437 = vld [vmem:[#allocation6 + $0x424] sm:$0xf]
    %v2438 = vld [vmem:[#allocation6 + $0x428] sm:$0xff]
    %v2439 = vld [vmem:[#allocation6 + $0x430] sm:$0xff]
    %v2440 = vld [vmem:[#allocation6 + $0x438] sm:$0xff]
    %v2441 = vld [vmem:[#allocation6 + $0x440] sm:$0xf]
    %v2442 = vld [vmem:[#allocation6 + $0x444] sm:$0xff]
    %v2443 = vld [vmem:[#allocation6 + $0x44c] sm:$0xff]
    %v2444 = vld [vmem:[#allocation6 + $0x454] sm:$0xff]
    %v2445 = vld [vmem:[#allocation6 + $0x45c] sm:$0xf]
    %v2446 = vld [vmem:[#allocation6 + $0x460] sm:$0xff]
    %v2447 = vld [vmem:[#allocation6 + $0x468] sm:$0xff]
    %v2448 = vld [vmem:[#allocation6 + $0x470] sm:$0xff]
    %v2449 = vld [vmem:[#allocation6 + $0x478] sm:$0xf]
    %v2450 = vld [vmem:[#allocation6 + $0x47c] sm:$0xff]
    %v2451 = vld [vmem:[#allocation6 + $0x484] sm:$0xff]
    %v2452 = vld [vmem:[#allocation6 + $0x48c] sm:$0xff]
    %v2453 = vld [vmem:[#allocation6 + $0x494] sm:$0xf]
    %v2454 = vld [vmem:[#allocation6 + $0x498] sm:$0xff]
    %v2455 = vld [vmem:[#allocation6 + $0x4a0] sm:$0xff]
    %v2456 = vld [vmem:[#allocation6 + $0x4a8] sm:$0xff]
    %v2457 = vld [vmem:[#allocation6 + $0x4b0] sm:$0xf]
    %v2458 = vld [vmem:[#allocation6 + $0x4b4] sm:$0xff]
    %v2459 = vld [vmem:[#allocation6 + $0x4bc] sm:$0xff]
    %v2460 = vld [vmem:[#allocation6 + $0x4c4] sm:$0xff]
    %v2461 = vld [vmem:[#allocation6 + $0x4cc] sm:$0xf]
    %v2462 = vld [vmem:[#allocation6 + $0x4d0] sm:$0xff]
    %v2463 = vld [vmem:[#allocation6 + $0x4d8] sm:$0xff]
    %v2464 = vld [vmem:[#allocation6 + $0x4e0] sm:$0xff]
    %v2465 = vld [vmem:[#allocation6 + $0x4e8] sm:$0xf]
    %v2466 = vld [vmem:[#allocation6 + $0x4ec] sm:$0xff]
    %v2467 = vld [vmem:[#allocation6 + $0x4f4] sm:$0xff]
    %v2468 = vld [vmem:[#allocation6 + $0x4fc] sm:$0xff]
    %v2469 = vld [vmem:[#allocation6 + $0x504] sm:$0xf]
    %v2470 = vld [vmem:[#allocation6 + $0x508] sm:$0xff]
    %v2471 = vld [vmem:[#allocation6 + $0x510] sm:$0xff]
    %v2472 = vld [vmem:[#allocation6 + $0x518] sm:$0xff]
    %v2473 = vld [vmem:[#allocation6 + $0x520] sm:$0xf]
    %v2474 = vld [vmem:[#allocation6 + $0x524] sm:$0xff]
    %v2475 = vld [vmem:[#allocation6 + $0x52c] sm:$0xff]
    %v2476 = vld [vmem:[#allocation6 + $0x534] sm:$0xff]
    %v2477 = vld [vmem:[#allocation6 + $0x53c] sm:$0xf]
    %v2478 = vld [vmem:[#allocation6 + $0x540] sm:$0xff]
    %v2479 = vld [vmem:[#allocation6 + $0x548] sm:$0xff]
    %v2480 = vld [vmem:[#allocation6 + $0x550] sm:$0xff]
    %v2481 = vld [vmem:[#allocation6 + $0x558] sm:$0xf]
    %v2482 = vld [vmem:[#allocation6 + $0x55c] sm:$0xff]
    %v2483 = vld [vmem:[#allocation6 + $0x564] sm:$0xff]
    %v2484 = vld [vmem:[#allocation6 + $0x56c] sm:$0xff]
    %v2485 = vld [vmem:[#allocation6 + $0x574] sm:$0xf]
    %v2486 = vld [vmem:[#allocation6 + $0x578] sm:$0xff]
    %v2487 = vld [vmem:[#allocation6 + $0x580] sm:$0xff]
    %v2488 = vld [vmem:[#allocation6 + $0x588] sm:$0xff]
    %v2489 = vld [vmem:[#allocation6 + $0x590] sm:$0xf]
    %v2490 = vld [vmem:[#allocation6 + $0x594] sm:$0xff]
    %v2491 = vld [vmem:[#allocation6 + $0x59c] sm:$0xff]
    %v2492 = vld [vmem:[#allocation6 + $0x5a4] sm:$0xff]
    %v2493 = vld [vmem:[#allocation6 + $0x5ac] sm:$0xf]
    %v2494 = vld [vmem:[#allocation6 + $0x5b0] sm:$0xff]
    %v2495 = vld [vmem:[#allocation6 + $0x5b8] sm:$0xff]
    %v2496 = vld [vmem:[#allocation6 + $0x5c0] sm:$0xff]
    %v2497 = vld [vmem:[#allocation6 + $0x5c8] sm:$0xf]
    %v2498 = vld [vmem:[#allocation6 + $0x5cc] sm:$0xff]
    %v2499 = vld [vmem:[#allocation6 + $0x5d4] sm:$0xff]
    %v2500 = vld [vmem:[#allocation6 + $0x5dc] sm:$0xff]
    %v2501 = vld [vmem:[#allocation6 + $0x5e4] sm:$0xf]
    %v2502 = vld [vmem:[#allocation6 + $0x5e8] sm:$0xff]
    %v2503 = vld [vmem:[#allocation6 + $0x5f0] sm:$0xff]
    %v2504 = vld [vmem:[#allocation6 + $0x5f8] sm:$0xff]
    %v2505 = vld [vmem:[#allocation6 + $0x600] sm:$0xf]
    %v2506 = vld [vmem:[#allocation6 + $0x604] sm:$0xff]
    %v2507 = vld [vmem:[#allocation6 + $0x60c] sm:$0xff]
    %v2508 = vld [vmem:[#allocation6 + $0x614] sm:$0xff]
    %v2509 = vld [vmem:[#allocation6 + $0x61c] sm:$0xf]
    %v2510 = vld [vmem:[#allocation6 + $0x620] sm:$0xff]
    %v2511 = vld [vmem:[#allocation6 + $0x628] sm:$0xff]
    %v2512 = vld [vmem:[#allocation6 + $0x630] sm:$0xff]
    %v2513 = vld [vmem:[#allocation6 + $0x638] sm:$0xf]
    %v2514 = vld [vmem:[#allocation6 + $0x63c] sm:$0xff]
    %v2515 = vld [vmem:[#allocation6 + $0x644] sm:$0xff]
    %v2516 = vld [vmem:[#allocation6 + $0x64c] sm:$0xff]
    %v2517 = vld [vmem:[#allocation6 + $0x654] sm:$0xf]
    %v2518 = vld [vmem:[#allocation6 + $0x658] sm:$0xff]
    %v2519 = vld [vmem:[#allocation6 + $0x660] sm:$0xff]
    %v2520 = vld [vmem:[#allocation6 + $0x668] sm:$0xff]
    %v2521 = vld [vmem:[#allocation6 + $0x670] sm:$0xf]
    %v2522 = vld [vmem:[#allocation6 + $0x674] sm:$0xff]
    %v2523 = vld [vmem:[#allocation6 + $0x67c] sm:$0xff]
    %v2524 = vld [vmem:[#allocation6 + $0x684] sm:$0xff]
    %v2525 = vld [vmem:[#allocation6 + $0x68c] sm:$0xf]
    %v2526 = vld [vmem:[#allocation6 + $0x690] sm:$0xff]
    %v2527 = vld [vmem:[#allocation6 + $0x698] sm:$0xff]
    %v2528 = vld [vmem:[#allocation6 + $0x6a0] sm:$0xff]
    %v2529 = vld [vmem:[#allocation6 + $0x6a8] sm:$0xf]
    %v2530 = vld [vmem:[#allocation6 + $0x6ac] sm:$0xff]
    %v2531 = vld [vmem:[#allocation6 + $0x6b4] sm:$0xff]
    %v2532 = vld [vmem:[#allocation6 + $0x6bc] sm:$0xff]
    %v2533 = vld [vmem:[#allocation6 + $0x6c4] sm:$0xf]
    %v2534 = vld [vmem:[#allocation6 + $0x6c8] sm:$0xff]
    %v2535 = vld [vmem:[#allocation6 + $0x6d0] sm:$0xff]
    %v2536 = vld [vmem:[#allocation6 + $0x6d8] sm:$0xff]
    %v2537 = vld [vmem:[#allocation6 + $0x6e0] sm:$0xf]
    %v2538 = vld [vmem:[#allocation6 + $0x6e4] sm:$0xff]
    %v2539 = vld [vmem:[#allocation6 + $0x6ec] sm:$0xff]
    %v2540 = vld [vmem:[#allocation6 + $0x6f4] sm:$0xff]
    %v2541 = vld [vmem:[#allocation6 + $0x6fc] sm:$0xf]
    %v2542 = vld [vmem:[#allocation6 + $0x700] sm:$0xff]
    %v2543 = vld [vmem:[#allocation6 + $0x708] sm:$0xff]
    %v2544 = vld [vmem:[#allocation6 + $0x710] sm:$0xff]
    %v2545 = vld [vmem:[#allocation6 + $0x718] sm:$0xf]
    %v2546 = vld [vmem:[#allocation6 + $0x71c] sm:$0xff]
    %v2547 = vld [vmem:[#allocation6 + $0x724] sm:$0xff]
    %v2548 = vld [vmem:[#allocation6 + $0x72c] sm:$0xff]
    %v2549 = vld [vmem:[#allocation6 + $0x734] sm:$0xf]
    %v2550 = vld [vmem:[#allocation6 + $0x738] sm:$0xff]
    %v2551 = vld [vmem:[#allocation6 + $0x740] sm:$0xff]
    %v2552 = vld [vmem:[#allocation6 + $0x748] sm:$0xff]
    %v2553 = vld [vmem:[#allocation6 + $0x750] sm:$0xf]
    %v2554 = vld [vmem:[#allocation6 + $0x754] sm:$0xff]
    %v2555 = vld [vmem:[#allocation6 + $0x75c] sm:$0xff]
    %v2556 = vld [vmem:[#allocation6 + $0x764] sm:$0xff]
    %v2557 = vld [vmem:[#allocation6 + $0x76c] sm:$0xf]
    %v2558 = vld [vmem:[#allocation6 + $0x770] sm:$0xff]
    %v2559 = vld [vmem:[#allocation6 + $0x778] sm:$0xff]
    %v2560 = vld [vmem:[#allocation6 + $0x780] sm:$0xff]
    %v2561 = vld [vmem:[#allocation6 + $0x788] sm:$0xf]
    %v2562 = vld [vmem:[#allocation6 + $0x78c] sm:$0xff]
    %v2563 = vld [vmem:[#allocation6 + $0x794] sm:$0xff]
    %v2564 = vld [vmem:[#allocation6 + $0x79c] sm:$0xff]
    %v2565 = vld [vmem:[#allocation6 + $0x7a4] sm:$0xf]
    %v2566 = vld [vmem:[#allocation6 + $0x7a8] sm:$0xff]
    %v2567 = vld [vmem:[#allocation6 + $0x7b0] sm:$0xff]
    %v2568 = vld [vmem:[#allocation6 + $0x7b8] sm:$0xff]
    %v2569 = vld [vmem:[#allocation6 + $0x7c0] sm:$0xf]
    %v2570 = vld [vmem:[#allocation6 + $0x7c4] sm:$0xff]
    %v2571 = vld [vmem:[#allocation6 + $0x7cc] sm:$0xff]
    %v2572 = vld [vmem:[#allocation6 + $0x7d4] sm:$0xff]
    %v2573 = vld [vmem:[#allocation6 + $0x7dc] sm:$0xf]
    %v2574 = vld [vmem:[#allocation6 + $0x7e0] sm:$0xff]
    %v2575 = vld [vmem:[#allocation6 + $0x7e8] sm:$0xff]
    %v2576 = vld [vmem:[#allocation6 + $0x7f0] sm:$0xff]
    %v2577 = vld [vmem:[#allocation6 + $0x7f8] sm:$0xf]
    %v2578 = vld [vmem:[#allocation6 + $0x7fc] sm:$0xff]
    %v2579 = vld [vmem:[#allocation6 + $0x804] sm:$0xff]
    %v2580 = vld [vmem:[#allocation6 + $0x80c] sm:$0xff]
    %v2581 = vld [vmem:[#allocation6 + $0x814] sm:$0xf]
    %v2582 = vld [vmem:[#allocation6 + $0x818] sm:$0xff]
    %v2583 = vld [vmem:[#allocation6 + $0x820] sm:$0xff]
    %v2584 = vld [vmem:[#allocation6 + $0x828] sm:$0xff]
    %v2585 = vld [vmem:[#allocation6 + $0x830] sm:$0xf]
    %v2586 = vld [vmem:[#allocation6 + $0x834] sm:$0xff]
    %v2587 = vld [vmem:[#allocation6 + $0x83c] sm:$0xff]
    %v2588 = vld [vmem:[#allocation6 + $0x844] sm:$0xff]
    %v2589 = vld [vmem:[#allocation6 + $0x84c] sm:$0xf]
    %v2590 = vld [vmem:[#allocation6 + $0x850] sm:$0xff]
    %v2591 = vld [vmem:[#allocation6 + $0x858] sm:$0xff]
    %v2592 = vld [vmem:[#allocation6 + $0x860] sm:$0xff]
    %v2593 = vld [vmem:[#allocation6 + $0x868] sm:$0xf]
    %v2594 = vld [vmem:[#allocation6 + $0x86c] sm:$0xff]
    %v2595 = vld [vmem:[#allocation6 + $0x874] sm:$0xff]
    %v2596 = vld [vmem:[#allocation6 + $0x87c] sm:$0xff]
    %v2597 = vld [vmem:[#allocation6 + $0x884] sm:$0xf]
    %v2598 = vld [vmem:[#allocation6 + $0x888] sm:$0xff]
    %v2599 = vld [vmem:[#allocation6 + $0x890] sm:$0xff]
    %v2600 = vld [vmem:[#allocation6 + $0x898] sm:$0xff]
    %v2601 = vld [vmem:[#allocation6 + $0x8a0] sm:$0xf]
    %v2602 = vld [vmem:[#allocation6 + $0x8a4] sm:$0xff]
    %v2603 = vld [vmem:[#allocation6 + $0x8ac] sm:$0xff]
    %v2604 = vld [vmem:[#allocation6 + $0x8b4] sm:$0xff]
    %v2605 = vld [vmem:[#allocation6 + $0x8bc] sm:$0xf]
    %v2606 = vld [vmem:[#allocation6 + $0x8c0] sm:$0xff]
    %v2607 = vld [vmem:[#allocation6 + $0x8c8] sm:$0xff]
    %v2608 = vld [vmem:[#allocation6 + $0x8d0] sm:$0xff]
    %v2609 = vld [vmem:[#allocation6 + $0x8d8] sm:$0xf]
    %v2610 = vld [vmem:[#allocation6 + $0x8dc] sm:$0xff]
    %v2611 = vld [vmem:[#allocation6 + $0x8e4] sm:$0xff]
    %v2612 = vld [vmem:[#allocation6 + $0x8ec] sm:$0xff]
    %v2613 = vld [vmem:[#allocation6 + $0x8f4] sm:$0xf]
    %v2614 = vld [vmem:[#allocation6 + $0x8f8] sm:$0xff]
    %v2615 = vld [vmem:[#allocation6 + $0x900] sm:$0xff]
    %v2616 = vld [vmem:[#allocation6 + $0x908] sm:$0xff]
    %v2617 = vld [vmem:[#allocation6 + $0x910] sm:$0xf]
    %v2618 = vld [vmem:[#allocation6 + $0x914] sm:$0xff]
    %v2619 = vld [vmem:[#allocation6 + $0x91c] sm:$0xff]
    %v2620 = vld [vmem:[#allocation6 + $0x924] sm:$0xff]
    %v2621 = vld [vmem:[#allocation6 + $0x92c] sm:$0xf]
    %v2622 = vld [vmem:[#allocation6 + $0x930] sm:$0xff]
    %v2623 = vld [vmem:[#allocation6 + $0x938] sm:$0xff]
    %v2624 = vld [vmem:[#allocation6 + $0x940] sm:$0xff]
    %v2625 = vld [vmem:[#allocation6 + $0x948] sm:$0xf]
    %v2626 = vld [vmem:[#allocation6 + $0x94c] sm:$0xff]
    %v2627 = vld [vmem:[#allocation6 + $0x954] sm:$0xff]
    %v2628 = vld [vmem:[#allocation6 + $0x95c] sm:$0xff]
    %v2629 = vld [vmem:[#allocation6 + $0x964] sm:$0xf]
    %v2630 = vld [vmem:[#allocation6 + $0x968] sm:$0xff]
    %v2631 = vld [vmem:[#allocation6 + $0x970] sm:$0xff]
    %v2632 = vld [vmem:[#allocation6 + $0x978] sm:$0xff]
    %v2633 = vld [vmem:[#allocation6 + $0x980] sm:$0xf]
    %v2634 = vld [vmem:[#allocation6 + $0x984] sm:$0xff]
    %v2635 = vld [vmem:[#allocation6 + $0x98c] sm:$0xff]
    %v2636 = vld [vmem:[#allocation6 + $0x994] sm:$0xff]
    %v2637 = vld [vmem:[#allocation6 + $0x99c] sm:$0xf]
    %v2638 = vld [vmem:[#allocation6 + $0x9a0] sm:$0xff]
    %v2639 = vld [vmem:[#allocation6 + $0x9a8] sm:$0xff]
    %v2640 = vld [vmem:[#allocation6 + $0x9b0] sm:$0xff]
    %v2641 = vld [vmem:[#allocation6 + $0x9b8] sm:$0xf]
    %v2642 = vld [vmem:[#allocation6 + $0x9bc] sm:$0xff]
    %v2643 = vld [vmem:[#allocation6 + $0x9c4] sm:$0xff]
    %v2644 = vld [vmem:[#allocation6 + $0x9cc] sm:$0xff]
    %v2645 = vld [vmem:[#allocation6 + $0x9d4] sm:$0xf]
    %v2646 = vld [vmem:[#allocation6 + $0x9d8] sm:$0xff]
    %v2647 = vld [vmem:[#allocation6 + $0x9e0] sm:$0xff]
    %v2648 = vld [vmem:[#allocation6 + $0x9e8] sm:$0xff]
    %v2649 = vld [vmem:[#allocation6 + $0x9f0] sm:$0xf]
    %v2650 = vld [vmem:[#allocation6 + $0x9f4] sm:$0xff]
    %v2651 = vld [vmem:[#allocation6 + $0x9fc] sm:$0xff]
    %v2652 = vld [vmem:[#allocation6 + $0xa04] sm:$0xff]
    %v2653 = vld [vmem:[#allocation6 + $0xa0c] sm:$0xf]
    %v2654 = vld [vmem:[#allocation6 + $0xa10] sm:$0xff]
    %v2655 = vld [vmem:[#allocation6 + $0xa18] sm:$0xff]
    %v2656 = vld [vmem:[#allocation6 + $0xa20] sm:$0xff]
    %v2657 = vld [vmem:[#allocation6 + $0xa28] sm:$0xf]
    %v2658 = vld [vmem:[#allocation6 + $0xa2c] sm:$0xff]
    %v2659 = vld [vmem:[#allocation6 + $0xa34] sm:$0xff]
    %v2660 = vld [vmem:[#allocation6 + $0xa3c] sm:$0xff]
    %v2661 = vld [vmem:[#allocation6 + $0xa44] sm:$0xf]
    %v2662 = vld [vmem:[#allocation6 + $0xa48] sm:$0xff]
    %v2663 = vld [vmem:[#allocation6 + $0xa50] sm:$0xff]
    %v2664 = vld [vmem:[#allocation6 + $0xa58] sm:$0xff]
    %v2665 = vld [vmem:[#allocation6 + $0xa60] sm:$0xf]
    %v2666 = vld [vmem:[#allocation6 + $0xa64] sm:$0xff]
    %v2667 = vld [vmem:[#allocation6 + $0xa6c] sm:$0xff]
    %v2668 = vld [vmem:[#allocation6 + $0xa74] sm:$0xff]
    %v2669 = vld [vmem:[#allocation6 + $0xa7c] sm:$0xf]
    %v2670 = vld [vmem:[#allocation7] sm:$0xff]
    %v2672 = vlaneseq
    %v2673 = vshrl.u32 %v2672, 7
    %v2674 = vsub.s32 0, %v2673
    %v2675 = vrot.slane %v2670, %v2674
    %v2676 = vlaneseq
    %v2677 = vshrl.u32 %v2676, 7
    %v2678 = vsub.s32 1, %v2677
    %v2679 = vrot.slane %v2670, %v2678
    %v2680 = vlaneseq
    %v2681 = vshrl.u32 %v2680, 7
    %v2682 = vsub.s32 2, %v2681
    %v2683 = vrot.slane %v2670, %v2682
    %v2684 = vlaneseq
    %v2685 = vshrl.u32 %v2684, 7
    %v2686 = vsub.s32 3, %v2685
    %v2687 = vrot.slane %v2670, %v2686
    %v2688 = vlaneseq
    %v2689 = vshrl.u32 %v2688, 7
    %v2690 = vsub.s32 4, %v2689
    %v2691 = vrot.slane %v2670, %v2690
    %v2692 = vlaneseq
    %v2693 = vshrl.u32 %v2692, 7
    %v2694 = vsub.s32 5, %v2693
    %v2695 = vrot.slane %v2670, %v2694
    %v2696 = vlaneseq
    %v2697 = vshrl.u32 %v2696, 7
    %v2698 = vsub.s32 6, %v2697
    %v2699 = vrot.slane %v2670, %v2698
    %v3091 = vunpack.c.l.b16 %v2286
    %v3092 = vunpack.c.h.b16 %v2286
    %v3093 = vunpack.c.l.b16 %v2287
    %v3094 = vunpack.c.h.b16 %v2287
    %v3095 = vunpack.c.l.b16 %v2288
    %v3096 = vunpack.c.h.b16 %v2288
    %v3097 = vunpack.c.l.b16 %v2289
    %v3098 = vunpack.c.l.b16 %v2290
    %v3099 = vunpack.c.h.b16 %v2290
    %v3100 = vunpack.c.l.b16 %v2291
    %v3101 = vunpack.c.h.b16 %v2291
    %v3102 = vunpack.c.l.b16 %v2292
    %v3103 = vunpack.c.h.b16 %v2292
    %v3104 = vunpack.c.l.b16 %v2293
    %v3105 = vunpack.c.l.b16 %v2294
    %v3106 = vunpack.c.h.b16 %v2294
    %v3107 = vunpack.c.l.b16 %v2295
    %v3108 = vunpack.c.h.b16 %v2295
    %v3109 = vunpack.c.l.b16 %v2296
    %v3110 = vunpack.c.h.b16 %v2296
    %v3111 = vunpack.c.l.b16 %v2297
    %v3112 = vunpack.c.l.b16 %v2298
    %v3113 = vunpack.c.h.b16 %v2298
    %v3114 = vunpack.c.l.b16 %v2299
    %v3115 = vunpack.c.h.b16 %v2299
    %v3116 = vunpack.c.l.b16 %v2300
    %v3117 = vunpack.c.h.b16 %v2300
    %v3118 = vunpack.c.l.b16 %v2301
    %v3119 = vunpack.c.l.b16 %v2302
    %v3120 = vunpack.c.h.b16 %v2302
    %v3121 = vunpack.c.l.b16 %v2303
    %v3122 = vunpack.c.h.b16 %v2303
    %v3123 = vunpack.c.l.b16 %v2304
    %v3124 = vunpack.c.h.b16 %v2304
    %v3125 = vunpack.c.l.b16 %v2305
    %v3126 = vunpack.c.l.b16 %v2306
    %v3127 = vunpack.c.h.b16 %v2306
    %v3128 = vunpack.c.l.b16 %v2307
    %v3129 = vunpack.c.h.b16 %v2307
    %v3130 = vunpack.c.l.b16 %v2308
    %v3131 = vunpack.c.h.b16 %v2308
    %v3132 = vunpack.c.l.b16 %v2309
    %v3133 = vunpack.c.l.b16 %v2310
    %v3134 = vunpack.c.h.b16 %v2310
    %v3135 = vunpack.c.l.b16 %v2311
    %v3136 = vunpack.c.h.b16 %v2311
    %v3137 = vunpack.c.l.b16 %v2312
    %v3138 = vunpack.c.h.b16 %v2312
    %v3139 = vunpack.c.l.b16 %v2313
    %v3140 = vunpack.c.l.b16 %v2314
    %v3141 = vunpack.c.h.b16 %v2314
    %v3142 = vunpack.c.l.b16 %v2315
    %v3143 = vunpack.c.h.b16 %v2315
    %v3144 = vunpack.c.l.b16 %v2316
    %v3145 = vunpack.c.h.b16 %v2316
    %v3146 = vunpack.c.l.b16 %v2317
    %v3147 = vunpack.c.l.b16 %v2318
    %v3148 = vunpack.c.h.b16 %v2318
    %v3149 = vunpack.c.l.b16 %v2319
    %v3150 = vunpack.c.h.b16 %v2319
    %v3151 = vunpack.c.l.b16 %v2320
    %v3152 = vunpack.c.h.b16 %v2320
    %v3153 = vunpack.c.l.b16 %v2321
    %v3154 = vunpack.c.l.b16 %v2322
    %v3155 = vunpack.c.h.b16 %v2322
    %v3156 = vunpack.c.l.b16 %v2323
    %v3157 = vunpack.c.h.b16 %v2323
    %v3158 = vunpack.c.l.b16 %v2324
    %v3159 = vunpack.c.h.b16 %v2324
    %v3160 = vunpack.c.l.b16 %v2325
    %v3161 = vunpack.c.l.b16 %v2326
    %v3162 = vunpack.c.h.b16 %v2326
    %v3163 = vunpack.c.l.b16 %v2327
    %v3164 = vunpack.c.h.b16 %v2327
    %v3165 = vunpack.c.l.b16 %v2328
    %v3166 = vunpack.c.h.b16 %v2328
    %v3167 = vunpack.c.l.b16 %v2329
    %v3168 = vunpack.c.l.b16 %v2330
    %v3169 = vunpack.c.h.b16 %v2330
    %v3170 = vunpack.c.l.b16 %v2331
    %v3171 = vunpack.c.h.b16 %v2331
    %v3172 = vunpack.c.l.b16 %v2332
    %v3173 = vunpack.c.h.b16 %v2332
    %v3174 = vunpack.c.l.b16 %v2333
    %v3175 = vunpack.c.l.b16 %v2334
    %v3176 = vunpack.c.h.b16 %v2334
    %v3177 = vunpack.c.l.b16 %v2335
    %v3178 = vunpack.c.h.b16 %v2335
    %v3179 = vunpack.c.l.b16 %v2336
    %v3180 = vunpack.c.h.b16 %v2336
    %v3181 = vunpack.c.l.b16 %v2337
    %v3182 = vunpack.c.l.b16 %v2338
    %v3183 = vunpack.c.h.b16 %v2338
    %v3184 = vunpack.c.l.b16 %v2339
    %v3185 = vunpack.c.h.b16 %v2339
    %v3186 = vunpack.c.l.b16 %v2340
    %v3187 = vunpack.c.h.b16 %v2340
    %v3188 = vunpack.c.l.b16 %v2341
    %v3189 = vunpack.c.l.b16 %v2342
    %v3190 = vunpack.c.h.b16 %v2342
    %v3191 = vunpack.c.l.b16 %v2343
    %v3192 = vunpack.c.h.b16 %v2343
    %v3193 = vunpack.c.l.b16 %v2344
    %v3194 = vunpack.c.h.b16 %v2344
    %v3195 = vunpack.c.l.b16 %v2345
    %v3196 = vunpack.c.l.b16 %v2346
    %v3197 = vunpack.c.h.b16 %v2346
    %v3198 = vunpack.c.l.b16 %v2347
    %v3199 = vunpack.c.h.b16 %v2347
    %v3200 = vunpack.c.l.b16 %v2348
    %v3201 = vunpack.c.h.b16 %v2348
    %v3202 = vunpack.c.l.b16 %v2349
    %v3203 = vunpack.c.l.b16 %v2350
    %v3204 = vunpack.c.h.b16 %v2350
    %v3205 = vunpack.c.l.b16 %v2351
    %v3206 = vunpack.c.h.b16 %v2351
    %v3207 = vunpack.c.l.b16 %v2352
    %v3208 = vunpack.c.h.b16 %v2352
    %v3209 = vunpack.c.l.b16 %v2353
    %v3210 = vunpack.c.l.b16 %v2354
    %v3211 = vunpack.c.h.b16 %v2354
    %v3212 = vunpack.c.l.b16 %v2355
    %v3213 = vunpack.c.h.b16 %v2355
    %v3214 = vunpack.c.l.b16 %v2356
    %v3215 = vunpack.c.h.b16 %v2356
    %v3216 = vunpack.c.l.b16 %v2357
    %v3217 = vunpack.c.l.b16 %v2358
    %v3218 = vunpack.c.h.b16 %v2358
    %v3219 = vunpack.c.l.b16 %v2359
    %v3220 = vunpack.c.h.b16 %v2359
    %v3221 = vunpack.c.l.b16 %v2360
    %v3222 = vunpack.c.h.b16 %v2360
    %v3223 = vunpack.c.l.b16 %v2361
    %v3224 = vunpack.c.l.b16 %v2362
    %v3225 = vunpack.c.h.b16 %v2362
    %v3226 = vunpack.c.l.b16 %v2363
    %v3227 = vunpack.c.h.b16 %v2363
    %v3228 = vunpack.c.l.b16 %v2364
    %v3229 = vunpack.c.h.b16 %v2364
    %v3230 = vunpack.c.l.b16 %v2365
    %v3231 = vunpack.c.l.b16 %v2366
    %v3232 = vunpack.c.h.b16 %v2366
    %v3233 = vunpack.c.l.b16 %v2367
    %v3234 = vunpack.c.h.b16 %v2367
    %v3235 = vunpack.c.l.b16 %v2368
    %v3236 = vunpack.c.h.b16 %v2368
    %v3237 = vunpack.c.l.b16 %v2369
    %v3238 = vunpack.c.l.b16 %v2370
    %v3239 = vunpack.c.h.b16 %v2370
    %v3240 = vunpack.c.l.b16 %v2371
    %v3241 = vunpack.c.h.b16 %v2371
    %v3242 = vunpack.c.l.b16 %v2372
    %v3243 = vunpack.c.h.b16 %v2372
    %v3244 = vunpack.c.l.b16 %v2373
    %v3245 = vunpack.c.l.b16 %v2374
    %v3246 = vunpack.c.h.b16 %v2374
    %v3247 = vunpack.c.l.b16 %v2375
    %v3248 = vunpack.c.h.b16 %v2375
    %v3249 = vunpack.c.l.b16 %v2376
    %v3250 = vunpack.c.h.b16 %v2376
    %v3251 = vunpack.c.l.b16 %v2377
    %v3252 = vunpack.c.l.b16 %v2378
    %v3253 = vunpack.c.h.b16 %v2378
    %v3254 = vunpack.c.l.b16 %v2379
    %v3255 = vunpack.c.h.b16 %v2379
    %v3256 = vunpack.c.l.b16 %v2380
    %v3257 = vunpack.c.h.b16 %v2380
    %v3258 = vunpack.c.l.b16 %v2381
    %v3259 = vunpack.c.l.b16 %v2382
    %v3260 = vunpack.c.h.b16 %v2382
    %v3261 = vunpack.c.l.b16 %v2383
    %v3262 = vunpack.c.h.b16 %v2383
    %v3263 = vunpack.c.l.b16 %v2384
    %v3264 = vunpack.c.h.b16 %v2384
    %v3265 = vunpack.c.l.b16 %v2385
    %v3266 = vunpack.c.l.b16 %v2386
    %v3267 = vunpack.c.h.b16 %v2386
    %v3268 = vunpack.c.l.b16 %v2387
    %v3269 = vunpack.c.h.b16 %v2387
    %v3270 = vunpack.c.l.b16 %v2388
    %v3271 = vunpack.c.h.b16 %v2388
    %v3272 = vunpack.c.l.b16 %v2389
    %v3273 = vunpack.c.l.b16 %v2390
    %v3274 = vunpack.c.h.b16 %v2390
    %v3275 = vunpack.c.l.b16 %v2391
    %v3276 = vunpack.c.h.b16 %v2391
    %v3277 = vunpack.c.l.b16 %v2392
    %v3278 = vunpack.c.h.b16 %v2392
    %v3279 = vunpack.c.l.b16 %v2393
    %v3280 = vunpack.c.l.b16 %v2394
    %v3281 = vunpack.c.h.b16 %v2394
    %v3282 = vunpack.c.l.b16 %v2395
    %v3283 = vunpack.c.h.b16 %v2395
    %v3284 = vunpack.c.l.b16 %v2396
    %v3285 = vunpack.c.h.b16 %v2396
    %v3286 = vunpack.c.l.b16 %v2397
    %v3287 = vunpack.c.l.b16 %v2398
    %v3288 = vunpack.c.h.b16 %v2398
    %v3289 = vunpack.c.l.b16 %v2399
    %v3290 = vunpack.c.h.b16 %v2399
    %v3291 = vunpack.c.l.b16 %v2400
    %v3292 = vunpack.c.h.b16 %v2400
    %v3293 = vunpack.c.l.b16 %v2401
    %v3294 = vunpack.c.l.b16 %v2402
    %v3295 = vunpack.c.h.b16 %v2402
    %v3296 = vunpack.c.l.b16 %v2403
    %v3297 = vunpack.c.h.b16 %v2403
    %v3298 = vunpack.c.l.b16 %v2404
    %v3299 = vunpack.c.h.b16 %v2404
    %v3300 = vunpack.c.l.b16 %v2405
    %v3301 = vunpack.c.l.b16 %v2406
    %v3302 = vunpack.c.h.b16 %v2406
    %v3303 = vunpack.c.l.b16 %v2407
    %v3304 = vunpack.c.h.b16 %v2407
    %v3305 = vunpack.c.l.b16 %v2408
    %v3306 = vunpack.c.h.b16 %v2408
    %v3307 = vunpack.c.l.b16 %v2409
    %v3308 = vunpack.c.l.b16 %v2410
    %v3309 = vunpack.c.h.b16 %v2410
    %v3310 = vunpack.c.l.b16 %v2411
    %v3311 = vunpack.c.h.b16 %v2411
    %v3312 = vunpack.c.l.b16 %v2412
    %v3313 = vunpack.c.h.b16 %v2412
    %v3314 = vunpack.c.l.b16 %v2413
    %v3315 = vunpack.c.l.b16 %v2414
    %v3316 = vunpack.c.h.b16 %v2414
    %v3317 = vunpack.c.l.b16 %v2415
    %v3318 = vunpack.c.h.b16 %v2415
    %v3319 = vunpack.c.l.b16 %v2416
    %v3320 = vunpack.c.h.b16 %v2416
    %v3321 = vunpack.c.l.b16 %v2417
    %v3322 = vunpack.c.l.b16 %v2418
    %v3323 = vunpack.c.h.b16 %v2418
    %v3324 = vunpack.c.l.b16 %v2419
    %v3325 = vunpack.c.h.b16 %v2419
    %v3326 = vunpack.c.l.b16 %v2420
    %v3327 = vunpack.c.h.b16 %v2420
    %v3328 = vunpack.c.l.b16 %v2421
    %v3329 = vunpack.c.l.b16 %v2422
    %v3330 = vunpack.c.h.b16 %v2422
    %v3331 = vunpack.c.l.b16 %v2423
    %v3332 = vunpack.c.h.b16 %v2423
    %v3333 = vunpack.c.l.b16 %v2424
    %v3334 = vunpack.c.h.b16 %v2424
    %v3335 = vunpack.c.l.b16 %v2425
    %v3336 = vunpack.c.l.b16 %v2426
    %v3337 = vunpack.c.h.b16 %v2426
    %v3338 = vunpack.c.l.b16 %v2427
    %v3339 = vunpack.c.h.b16 %v2427
    %v3340 = vunpack.c.l.b16 %v2428
    %v3341 = vunpack.c.h.b16 %v2428
    %v3342 = vunpack.c.l.b16 %v2429
    %v3343 = vunpack.c.l.b16 %v2430
    %v3344 = vunpack.c.h.b16 %v2430
    %v3345 = vunpack.c.l.b16 %v2431
    %v3346 = vunpack.c.h.b16 %v2431
    %v3347 = vunpack.c.l.b16 %v2432
    %v3348 = vunpack.c.h.b16 %v2432
    %v3349 = vunpack.c.l.b16 %v2433
    %v3350 = vunpack.c.l.b16 %v2434
    %v3351 = vunpack.c.h.b16 %v2434
    %v3352 = vunpack.c.l.b16 %v2435
    %v3353 = vunpack.c.h.b16 %v2435
    %v3354 = vunpack.c.l.b16 %v2436
    %v3355 = vunpack.c.h.b16 %v2436
    %v3356 = vunpack.c.l.b16 %v2437
    %v3357 = vunpack.c.l.b16 %v2438
    %v3358 = vunpack.c.h.b16 %v2438
    %v3359 = vunpack.c.l.b16 %v2439
    %v3360 = vunpack.c.h.b16 %v2439
    %v3361 = vunpack.c.l.b16 %v2440
    %v3362 = vunpack.c.h.b16 %v2440
    %v3363 = vunpack.c.l.b16 %v2441
    %v3364 = vunpack.c.l.b16 %v2442
    %v3365 = vunpack.c.h.b16 %v2442
    %v3366 = vunpack.c.l.b16 %v2443
    %v3367 = vunpack.c.h.b16 %v2443
    %v3368 = vunpack.c.l.b16 %v2444
    %v3369 = vunpack.c.h.b16 %v2444
    %v3370 = vunpack.c.l.b16 %v2445
    %v3371 = vunpack.c.l.b16 %v2446
    %v3372 = vunpack.c.h.b16 %v2446
    %v3373 = vunpack.c.l.b16 %v2447
    %v3374 = vunpack.c.h.b16 %v2447
    %v3375 = vunpack.c.l.b16 %v2448
    %v3376 = vunpack.c.h.b16 %v2448
    %v3377 = vunpack.c.l.b16 %v2449
    %v3378 = vunpack.c.l.b16 %v2450
    %v3379 = vunpack.c.h.b16 %v2450
    %v3380 = vunpack.c.l.b16 %v2451
    %v3381 = vunpack.c.h.b16 %v2451
    %v3382 = vunpack.c.l.b16 %v2452
    %v3383 = vunpack.c.h.b16 %v2452
    %v3384 = vunpack.c.l.b16 %v2453
    %v3385 = vunpack.c.l.b16 %v2454
    %v3386 = vunpack.c.h.b16 %v2454
    %v3387 = vunpack.c.l.b16 %v2455
    %v3388 = vunpack.c.h.b16 %v2455
    %v3389 = vunpack.c.l.b16 %v2456
    %v3390 = vunpack.c.h.b16 %v2456
    %v3391 = vunpack.c.l.b16 %v2457
    %v3392 = vunpack.c.l.b16 %v2458
    %v3393 = vunpack.c.h.b16 %v2458
    %v3394 = vunpack.c.l.b16 %v2459
    %v3395 = vunpack.c.h.b16 %v2459
    %v3396 = vunpack.c.l.b16 %v2460
    %v3397 = vunpack.c.h.b16 %v2460
    %v3398 = vunpack.c.l.b16 %v2461
    %v3399 = vunpack.c.l.b16 %v2462
    %v3400 = vunpack.c.h.b16 %v2462
    %v3401 = vunpack.c.l.b16 %v2463
    %v3402 = vunpack.c.h.b16 %v2463
    %v3403 = vunpack.c.l.b16 %v2464
    %v3404 = vunpack.c.h.b16 %v2464
    %v3405 = vunpack.c.l.b16 %v2465
    %v3406 = vunpack.c.l.b16 %v2466
    %v3407 = vunpack.c.h.b16 %v2466
    %v3408 = vunpack.c.l.b16 %v2467
    %v3409 = vunpack.c.h.b16 %v2467
    %v3410 = vunpack.c.l.b16 %v2468
    %v3411 = vunpack.c.h.b16 %v2468
    %v3412 = vunpack.c.l.b16 %v2469
    %v3413 = vunpack.c.l.b16 %v2470
    %v3414 = vunpack.c.h.b16 %v2470
    %v3415 = vunpack.c.l.b16 %v2471
    %v3416 = vunpack.c.h.b16 %v2471
    %v3417 = vunpack.c.l.b16 %v2472
    %v3418 = vunpack.c.h.b16 %v2472
    %v3419 = vunpack.c.l.b16 %v2473
    %v3420 = vunpack.c.l.b16 %v2474
    %v3421 = vunpack.c.h.b16 %v2474
    %v3422 = vunpack.c.l.b16 %v2475
    %v3423 = vunpack.c.h.b16 %v2475
    %v3424 = vunpack.c.l.b16 %v2476
    %v3425 = vunpack.c.h.b16 %v2476
    %v3426 = vunpack.c.l.b16 %v2477
    %v3427 = vunpack.c.l.b16 %v2478
    %v3428 = vunpack.c.h.b16 %v2478
    %v3429 = vunpack.c.l.b16 %v2479
    %v3430 = vunpack.c.h.b16 %v2479
    %v3431 = vunpack.c.l.b16 %v2480
    %v3432 = vunpack.c.h.b16 %v2480
    %v3433 = vunpack.c.l.b16 %v2481
    %v3434 = vunpack.c.l.b16 %v2482
    %v3435 = vunpack.c.h.b16 %v2482
    %v3436 = vunpack.c.l.b16 %v2483
    %v3437 = vunpack.c.h.b16 %v2483
    %v3438 = vunpack.c.l.b16 %v2484
    %v3439 = vunpack.c.h.b16 %v2484
    %v3440 = vunpack.c.l.b16 %v2485
    %v3441 = vunpack.c.l.b16 %v2486
    %v3442 = vunpack.c.h.b16 %v2486
    %v3443 = vunpack.c.l.b16 %v2487
    %v3444 = vunpack.c.h.b16 %v2487
    %v3445 = vunpack.c.l.b16 %v2488
    %v3446 = vunpack.c.h.b16 %v2488
    %v3447 = vunpack.c.l.b16 %v2489
    %v3448 = vunpack.c.l.b16 %v2490
    %v3449 = vunpack.c.h.b16 %v2490
    %v3450 = vunpack.c.l.b16 %v2491
    %v3451 = vunpack.c.h.b16 %v2491
    %v3452 = vunpack.c.l.b16 %v2492
    %v3453 = vunpack.c.h.b16 %v2492
    %v3454 = vunpack.c.l.b16 %v2493
    %v3455 = vunpack.c.l.b16 %v2494
    %v3456 = vunpack.c.h.b16 %v2494
    %v3457 = vunpack.c.l.b16 %v2495
    %v3458 = vunpack.c.h.b16 %v2495
    %v3459 = vunpack.c.l.b16 %v2496
    %v3460 = vunpack.c.h.b16 %v2496
    %v3461 = vunpack.c.l.b16 %v2497
    %v3462 = vunpack.c.l.b16 %v2498
    %v3463 = vunpack.c.h.b16 %v2498
    %v3464 = vunpack.c.l.b16 %v2499
    %v3465 = vunpack.c.h.b16 %v2499
    %v3466 = vunpack.c.l.b16 %v2500
    %v3467 = vunpack.c.h.b16 %v2500
    %v3468 = vunpack.c.l.b16 %v2501
    %v3469 = vunpack.c.l.b16 %v2502
    %v3470 = vunpack.c.h.b16 %v2502
    %v3471 = vunpack.c.l.b16 %v2503
    %v3472 = vunpack.c.h.b16 %v2503
    %v3473 = vunpack.c.l.b16 %v2504
    %v3474 = vunpack.c.h.b16 %v2504
    %v3475 = vunpack.c.l.b16 %v2505
    %v3476 = vunpack.c.l.b16 %v2506
    %v3477 = vunpack.c.h.b16 %v2506
    %v3478 = vunpack.c.l.b16 %v2507
    %v3479 = vunpack.c.h.b16 %v2507
    %v3480 = vunpack.c.l.b16 %v2508
    %v3481 = vunpack.c.h.b16 %v2508
    %v3482 = vunpack.c.l.b16 %v2509
    %v3483 = vunpack.c.l.b16 %v2510
    %v3484 = vunpack.c.h.b16 %v2510
    %v3485 = vunpack.c.l.b16 %v2511
    %v3486 = vunpack.c.h.b16 %v2511
    %v3487 = vunpack.c.l.b16 %v2512
    %v3488 = vunpack.c.h.b16 %v2512
    %v3489 = vunpack.c.l.b16 %v2513
    %v3490 = vunpack.c.l.b16 %v2514
    %v3491 = vunpack.c.h.b16 %v2514
    %v3492 = vunpack.c.l.b16 %v2515
    %v3493 = vunpack.c.h.b16 %v2515
    %v3494 = vunpack.c.l.b16 %v2516
    %v3495 = vunpack.c.h.b16 %v2516
    %v3496 = vunpack.c.l.b16 %v2517
    %v3497 = vunpack.c.l.b16 %v2518
    %v3498 = vunpack.c.h.b16 %v2518
    %v3499 = vunpack.c.l.b16 %v2519
    %v3500 = vunpack.c.h.b16 %v2519
    %v3501 = vunpack.c.l.b16 %v2520
    %v3502 = vunpack.c.h.b16 %v2520
    %v3503 = vunpack.c.l.b16 %v2521
    %v3504 = vunpack.c.l.b16 %v2522
    %v3505 = vunpack.c.h.b16 %v2522
    %v3506 = vunpack.c.l.b16 %v2523
    %v3507 = vunpack.c.h.b16 %v2523
    %v3508 = vunpack.c.l.b16 %v2524
    %v3509 = vunpack.c.h.b16 %v2524
    %v3510 = vunpack.c.l.b16 %v2525
    %v3511 = vunpack.c.l.b16 %v2526
    %v3512 = vunpack.c.h.b16 %v2526
    %v3513 = vunpack.c.l.b16 %v2527
    %v3514 = vunpack.c.h.b16 %v2527
    %v3515 = vunpack.c.l.b16 %v2528
    %v3516 = vunpack.c.h.b16 %v2528
    %v3517 = vunpack.c.l.b16 %v2529
    %v3518 = vunpack.c.l.b16 %v2530
    %v3519 = vunpack.c.h.b16 %v2530
    %v3520 = vunpack.c.l.b16 %v2531
    %v3521 = vunpack.c.h.b16 %v2531
    %v3522 = vunpack.c.l.b16 %v2532
    %v3523 = vunpack.c.h.b16 %v2532
    %v3524 = vunpack.c.l.b16 %v2533
    %v3525 = vunpack.c.l.b16 %v2534
    %v3526 = vunpack.c.h.b16 %v2534
    %v3527 = vunpack.c.l.b16 %v2535
    %v3528 = vunpack.c.h.b16 %v2535
    %v3529 = vunpack.c.l.b16 %v2536
    %v3530 = vunpack.c.h.b16 %v2536
    %v3531 = vunpack.c.l.b16 %v2537
    %v3532 = vunpack.c.l.b16 %v2538
    %v3533 = vunpack.c.h.b16 %v2538
    %v3534 = vunpack.c.l.b16 %v2539
    %v3535 = vunpack.c.h.b16 %v2539
    %v3536 = vunpack.c.l.b16 %v2540
    %v3537 = vunpack.c.h.b16 %v2540
    %v3538 = vunpack.c.l.b16 %v2541
    %v3539 = vunpack.c.l.b16 %v2542
    %v3540 = vunpack.c.h.b16 %v2542
    %v3541 = vunpack.c.l.b16 %v2543
    %v3542 = vunpack.c.h.b16 %v2543
    %v3543 = vunpack.c.l.b16 %v2544
    %v3544 = vunpack.c.h.b16 %v2544
    %v3545 = vunpack.c.l.b16 %v2545
    %v3546 = vunpack.c.l.b16 %v2546
    %v3547 = vunpack.c.h.b16 %v2546
    %v3548 = vunpack.c.l.b16 %v2547
    %v3549 = vunpack.c.h.b16 %v2547
    %v3550 = vunpack.c.l.b16 %v2548
    %v3551 = vunpack.c.h.b16 %v2548
    %v3552 = vunpack.c.l.b16 %v2549
    %v3553 = vunpack.c.l.b16 %v2550
    %v3554 = vunpack.c.h.b16 %v2550
    %v3555 = vunpack.c.l.b16 %v2551
    %v3556 = vunpack.c.h.b16 %v2551
    %v3557 = vunpack.c.l.b16 %v2552
    %v3558 = vunpack.c.h.b16 %v2552
    %v3559 = vunpack.c.l.b16 %v2553
    %v3560 = vunpack.c.l.b16 %v2554
    %v3561 = vunpack.c.h.b16 %v2554
    %v3562 = vunpack.c.l.b16 %v2555
    %v3563 = vunpack.c.h.b16 %v2555
    %v3564 = vunpack.c.l.b16 %v2556
    %v3565 = vunpack.c.h.b16 %v2556
    %v3566 = vunpack.c.l.b16 %v2557
    %v3567 = vunpack.c.l.b16 %v2558
    %v3568 = vunpack.c.h.b16 %v2558
    %v3569 = vunpack.c.l.b16 %v2559
    %v3570 = vunpack.c.h.b16 %v2559
    %v3571 = vunpack.c.l.b16 %v2560
    %v3572 = vunpack.c.h.b16 %v2560
    %v3573 = vunpack.c.l.b16 %v2561
    %v3574 = vunpack.c.l.b16 %v2562
    %v3575 = vunpack.c.h.b16 %v2562
    %v3576 = vunpack.c.l.b16 %v2563
    %v3577 = vunpack.c.h.b16 %v2563
    %v3578 = vunpack.c.l.b16 %v2564
    %v3579 = vunpack.c.h.b16 %v2564
    %v3580 = vunpack.c.l.b16 %v2565
    %v3581 = vunpack.c.l.b16 %v2566
    %v3582 = vunpack.c.h.b16 %v2566
    %v3583 = vunpack.c.l.b16 %v2567
    %v3584 = vunpack.c.h.b16 %v2567
    %v3585 = vunpack.c.l.b16 %v2568
    %v3586 = vunpack.c.h.b16 %v2568
    %v3587 = vunpack.c.l.b16 %v2569
    %v3588 = vunpack.c.l.b16 %v2570
    %v3589 = vunpack.c.h.b16 %v2570
    %v3590 = vunpack.c.l.b16 %v2571
    %v3591 = vunpack.c.h.b16 %v2571
    %v3592 = vunpack.c.l.b16 %v2572
    %v3593 = vunpack.c.h.b16 %v2572
    %v3594 = vunpack.c.l.b16 %v2573
    %v3595 = vunpack.c.l.b16 %v2574
    %v3596 = vunpack.c.h.b16 %v2574
    %v3597 = vunpack.c.l.b16 %v2575
    %v3598 = vunpack.c.h.b16 %v2575
    %v3599 = vunpack.c.l.b16 %v2576
    %v3600 = vunpack.c.h.b16 %v2576
    %v3601 = vunpack.c.l.b16 %v2577
    %v3602 = vunpack.c.l.b16 %v2578
    %v3603 = vunpack.c.h.b16 %v2578
    %v3604 = vunpack.c.l.b16 %v2579
    %v3605 = vunpack.c.h.b16 %v2579
    %v3606 = vunpack.c.l.b16 %v2580
    %v3607 = vunpack.c.h.b16 %v2580
    %v3608 = vunpack.c.l.b16 %v2581
    %v3609 = vunpack.c.l.b16 %v2582
    %v3610 = vunpack.c.h.b16 %v2582
    %v3611 = vunpack.c.l.b16 %v2583
    %v3612 = vunpack.c.h.b16 %v2583
    %v3613 = vunpack.c.l.b16 %v2584
    %v3614 = vunpack.c.h.b16 %v2584
    %v3615 = vunpack.c.l.b16 %v2585
    %v3616 = vunpack.c.l.b16 %v2586
    %v3617 = vunpack.c.h.b16 %v2586
    %v3618 = vunpack.c.l.b16 %v2587
    %v3619 = vunpack.c.h.b16 %v2587
    %v3620 = vunpack.c.l.b16 %v2588
    %v3621 = vunpack.c.h.b16 %v2588
    %v3622 = vunpack.c.l.b16 %v2589
    %v3623 = vunpack.c.l.b16 %v2590
    %v3624 = vunpack.c.h.b16 %v2590
    %v3625 = vunpack.c.l.b16 %v2591
    %v3626 = vunpack.c.h.b16 %v2591
    %v3627 = vunpack.c.l.b16 %v2592
    %v3628 = vunpack.c.h.b16 %v2592
    %v3629 = vunpack.c.l.b16 %v2593
    %v3630 = vunpack.c.l.b16 %v2594
    %v3631 = vunpack.c.h.b16 %v2594
    %v3632 = vunpack.c.l.b16 %v2595
    %v3633 = vunpack.c.h.b16 %v2595
    %v3634 = vunpack.c.l.b16 %v2596
    %v3635 = vunpack.c.h.b16 %v2596
    %v3636 = vunpack.c.l.b16 %v2597
    %v3637 = vunpack.c.l.b16 %v2598
    %v3638 = vunpack.c.h.b16 %v2598
    %v3639 = vunpack.c.l.b16 %v2599
    %v3640 = vunpack.c.h.b16 %v2599
    %v3641 = vunpack.c.l.b16 %v2600
    %v3642 = vunpack.c.h.b16 %v2600
    %v3643 = vunpack.c.l.b16 %v2601
    %v3644 = vunpack.c.l.b16 %v2602
    %v3645 = vunpack.c.h.b16 %v2602
    %v3646 = vunpack.c.l.b16 %v2603
    %v3647 = vunpack.c.h.b16 %v2603
    %v3648 = vunpack.c.l.b16 %v2604
    %v3649 = vunpack.c.h.b16 %v2604
    %v3650 = vunpack.c.l.b16 %v2605
    %v3651 = vunpack.c.l.b16 %v2606
    %v3652 = vunpack.c.h.b16 %v2606
    %v3653 = vunpack.c.l.b16 %v2607
    %v3654 = vunpack.c.h.b16 %v2607
    %v3655 = vunpack.c.l.b16 %v2608
    %v3656 = vunpack.c.h.b16 %v2608
    %v3657 = vunpack.c.l.b16 %v2609
    %v3658 = vunpack.c.l.b16 %v2610
    %v3659 = vunpack.c.h.b16 %v2610
    %v3660 = vunpack.c.l.b16 %v2611
    %v3661 = vunpack.c.h.b16 %v2611
    %v3662 = vunpack.c.l.b16 %v2612
    %v3663 = vunpack.c.h.b16 %v2612
    %v3664 = vunpack.c.l.b16 %v2613
    %v3665 = vunpack.c.l.b16 %v2614
    %v3666 = vunpack.c.h.b16 %v2614
    %v3667 = vunpack.c.l.b16 %v2615
    %v3668 = vunpack.c.h.b16 %v2615
    %v3669 = vunpack.c.l.b16 %v2616
    %v3670 = vunpack.c.h.b16 %v2616
    %v3671 = vunpack.c.l.b16 %v2617
    %v3672 = vunpack.c.l.b16 %v2618
    %v3673 = vunpack.c.h.b16 %v2618
    %v3674 = vunpack.c.l.b16 %v2619
    %v3675 = vunpack.c.h.b16 %v2619
    %v3676 = vunpack.c.l.b16 %v2620
    %v3677 = vunpack.c.h.b16 %v2620
    %v3678 = vunpack.c.l.b16 %v2621
    %v3679 = vunpack.c.l.b16 %v2622
    %v3680 = vunpack.c.h.b16 %v2622
    %v3681 = vunpack.c.l.b16 %v2623
    %v3682 = vunpack.c.h.b16 %v2623
    %v3683 = vunpack.c.l.b16 %v2624
    %v3684 = vunpack.c.h.b16 %v2624
    %v3685 = vunpack.c.l.b16 %v2625
    %v3686 = vunpack.c.l.b16 %v2626
    %v3687 = vunpack.c.h.b16 %v2626
    %v3688 = vunpack.c.l.b16 %v2627
    %v3689 = vunpack.c.h.b16 %v2627
    %v3690 = vunpack.c.l.b16 %v2628
    %v3691 = vunpack.c.h.b16 %v2628
    %v3692 = vunpack.c.l.b16 %v2629
    %v3693 = vunpack.c.l.b16 %v2630
    %v3694 = vunpack.c.h.b16 %v2630
    %v3695 = vunpack.c.l.b16 %v2631
    %v3696 = vunpack.c.h.b16 %v2631
    %v3697 = vunpack.c.l.b16 %v2632
    %v3698 = vunpack.c.h.b16 %v2632
    %v3699 = vunpack.c.l.b16 %v2633
    %v3700 = vunpack.c.l.b16 %v2634
    %v3701 = vunpack.c.h.b16 %v2634
    %v3702 = vunpack.c.l.b16 %v2635
    %v3703 = vunpack.c.h.b16 %v2635
    %v3704 = vunpack.c.l.b16 %v2636
    %v3705 = vunpack.c.h.b16 %v2636
    %v3706 = vunpack.c.l.b16 %v2637
    %v3707 = vunpack.c.l.b16 %v2638
    %v3708 = vunpack.c.h.b16 %v2638
    %v3709 = vunpack.c.l.b16 %v2639
    %v3710 = vunpack.c.h.b16 %v2639
    %v3711 = vunpack.c.l.b16 %v2640
    %v3712 = vunpack.c.h.b16 %v2640
    %v3713 = vunpack.c.l.b16 %v2641
    %v3714 = vunpack.c.l.b16 %v2642
    %v3715 = vunpack.c.h.b16 %v2642
    %v3716 = vunpack.c.l.b16 %v2643
    %v3717 = vunpack.c.h.b16 %v2643
    %v3718 = vunpack.c.l.b16 %v2644
    %v3719 = vunpack.c.h.b16 %v2644
    %v3720 = vunpack.c.l.b16 %v2645
    %v3721 = vunpack.c.l.b16 %v2646
    %v3722 = vunpack.c.h.b16 %v2646
    %v3723 = vunpack.c.l.b16 %v2647
    %v3724 = vunpack.c.h.b16 %v2647
    %v3725 = vunpack.c.l.b16 %v2648
    %v3726 = vunpack.c.h.b16 %v2648
    %v3727 = vunpack.c.l.b16 %v2649
    %v3728 = vunpack.c.l.b16 %v2650
    %v3729 = vunpack.c.h.b16 %v2650
    %v3730 = vunpack.c.l.b16 %v2651
    %v3731 = vunpack.c.h.b16 %v2651
    %v3732 = vunpack.c.l.b16 %v2652
    %v3733 = vunpack.c.h.b16 %v2652
    %v3734 = vunpack.c.l.b16 %v2653
    %v3735 = vunpack.c.l.b16 %v2654
    %v3736 = vunpack.c.h.b16 %v2654
    %v3737 = vunpack.c.l.b16 %v2655
    %v3738 = vunpack.c.h.b16 %v2655
    %v3739 = vunpack.c.l.b16 %v2656
    %v3740 = vunpack.c.h.b16 %v2656
    %v3741 = vunpack.c.l.b16 %v2657
    %v3742 = vunpack.c.l.b16 %v2658
    %v3743 = vunpack.c.h.b16 %v2658
    %v3744 = vunpack.c.l.b16 %v2659
    %v3745 = vunpack.c.h.b16 %v2659
    %v3746 = vunpack.c.l.b16 %v2660
    %v3747 = vunpack.c.h.b16 %v2660
    %v3748 = vunpack.c.l.b16 %v2661
    %v3749 = vunpack.c.l.b16 %v2662
    %v3750 = vunpack.c.h.b16 %v2662
    %v3751 = vunpack.c.l.b16 %v2663
    %v3752 = vunpack.c.h.b16 %v2663
    %v3753 = vunpack.c.l.b16 %v2664
    %v3754 = vunpack.c.h.b16 %v2664
    %v3755 = vunpack.c.l.b16 %v2665
    %v3756 = vunpack.c.l.b16 %v2666
    %v3757 = vunpack.c.h.b16 %v2666
    %v3758 = vunpack.c.l.b16 %v2667
    %v3759 = vunpack.c.h.b16 %v2667
    %v3760 = vunpack.c.l.b16 %v2668
    %v3761 = vunpack.c.h.b16 %v2668
    %v3762 = vunpack.c.l.b16 %v2669
    %v3763 = vpack.c.b16 %v3098, %v3091
    %v3764 = vpack.c.b16 %v3099, %v3092
    %v3765 = vpack.c.b16 %v3100, %v3093
    %v3766 = vpack.c.b16 %v3101, %v3094
    %v3767 = vpack.c.b16 %v3102, %v3095
    %v3768 = vpack.c.b16 %v3103, %v3096
    %v3769 = vpack.c.b16 %v3104, %v3097
    %v3770 = vpack.c.b16 %v3112, %v3105
    %v3771 = vpack.c.b16 %v3113, %v3106
    %v3772 = vpack.c.b16 %v3114, %v3107
    %v3773 = vpack.c.b16 %v3115, %v3108
    %v3774 = vpack.c.b16 %v3116, %v3109
    %v3775 = vpack.c.b16 %v3117, %v3110
    %v3776 = vpack.c.b16 %v3118, %v3111
    %v3777 = vpack.c.b16 %v3126, %v3119
    %v3778 = vpack.c.b16 %v3127, %v3120
    %v3779 = vpack.c.b16 %v3128, %v3121
    %v3780 = vpack.c.b16 %v3129, %v3122
    %v3781 = vpack.c.b16 %v3130, %v3123
    %v3782 = vpack.c.b16 %v3131, %v3124
    %v3783 = vpack.c.b16 %v3132, %v3125
    %v3784 = vpack.c.b16 %v3140, %v3133
    %v3785 = vpack.c.b16 %v3141, %v3134
    %v3786 = vpack.c.b16 %v3142, %v3135
    %v3787 = vpack.c.b16 %v3143, %v3136
    %v3788 = vpack.c.b16 %v3144, %v3137
    %v3789 = vpack.c.b16 %v3145, %v3138
    %v3790 = vpack.c.b16 %v3146, %v3139
    %v3791 = vpack.c.b16 %v3154, %v3147
    %v3792 = vpack.c.b16 %v3155, %v3148
    %v3793 = vpack.c.b16 %v3156, %v3149
    %v3794 = vpack.c.b16 %v3157, %v3150
    %v3795 = vpack.c.b16 %v3158, %v3151
    %v3796 = vpack.c.b16 %v3159, %v3152
    %v3797 = vpack.c.b16 %v3160, %v3153
    %v3798 = vpack.c.b16 %v3168, %v3161
    %v3799 = vpack.c.b16 %v3169, %v3162
    %v3800 = vpack.c.b16 %v3170, %v3163
    %v3801 = vpack.c.b16 %v3171, %v3164
    %v3802 = vpack.c.b16 %v3172, %v3165
    %v3803 = vpack.c.b16 %v3173, %v3166
    %v3804 = vpack.c.b16 %v3174, %v3167
    %v3805 = vpack.c.b16 %v3182, %v3175
    %v3806 = vpack.c.b16 %v3183, %v3176
    %v3807 = vpack.c.b16 %v3184, %v3177
    %v3808 = vpack.c.b16 %v3185, %v3178
    %v3809 = vpack.c.b16 %v3186, %v3179
    %v3810 = vpack.c.b16 %v3187, %v3180
    %v3811 = vpack.c.b16 %v3188, %v3181
    %v3812 = vpack.c.b16 %v3196, %v3189
    %v3813 = vpack.c.b16 %v3197, %v3190
    %v3814 = vpack.c.b16 %v3198, %v3191
    %v3815 = vpack.c.b16 %v3199, %v3192
    %v3816 = vpack.c.b16 %v3200, %v3193
    %v3817 = vpack.c.b16 %v3201, %v3194
    %v3818 = vpack.c.b16 %v3202, %v3195
    %v3819 = vpack.c.b16 %v3210, %v3203
    %v3820 = vpack.c.b16 %v3211, %v3204
    %v3821 = vpack.c.b16 %v3212, %v3205
    %v3822 = vpack.c.b16 %v3213, %v3206
    %v3823 = vpack.c.b16 %v3214, %v3207
    %v3824 = vpack.c.b16 %v3215, %v3208
    %v3825 = vpack.c.b16 %v3216, %v3209
    %v3826 = vpack.c.b16 %v3224, %v3217
    %v3827 = vpack.c.b16 %v3225, %v3218
    %v3828 = vpack.c.b16 %v3226, %v3219
    %v3829 = vpack.c.b16 %v3227, %v3220
    %v3830 = vpack.c.b16 %v3228, %v3221
    %v3831 = vpack.c.b16 %v3229, %v3222
    %v3832 = vpack.c.b16 %v3230, %v3223
    %v3833 = vpack.c.b16 %v3238, %v3231
    %v3834 = vpack.c.b16 %v3239, %v3232
    %v3835 = vpack.c.b16 %v3240, %v3233
    %v3836 = vpack.c.b16 %v3241, %v3234
    %v3837 = vpack.c.b16 %v3242, %v3235
    %v3838 = vpack.c.b16 %v3243, %v3236
    %v3839 = vpack.c.b16 %v3244, %v3237
    %v3840 = vpack.c.b16 %v3252, %v3245
    %v3841 = vpack.c.b16 %v3253, %v3246
    %v3842 = vpack.c.b16 %v3254, %v3247
    %v3843 = vpack.c.b16 %v3255, %v3248
    %v3844 = vpack.c.b16 %v3256, %v3249
    %v3845 = vpack.c.b16 %v3257, %v3250
    %v3846 = vpack.c.b16 %v3258, %v3251
    %v3847 = vpack.c.b16 %v3266, %v3259
    %v3848 = vpack.c.b16 %v3267, %v3260
    %v3849 = vpack.c.b16 %v3268, %v3261
    %v3850 = vpack.c.b16 %v3269, %v3262
    %v3851 = vpack.c.b16 %v3270, %v3263
    %v3852 = vpack.c.b16 %v3271, %v3264
    %v3853 = vpack.c.b16 %v3272, %v3265
    %v3854 = vpack.c.b16 %v3280, %v3273
    %v3855 = vpack.c.b16 %v3281, %v3274
    %v3856 = vpack.c.b16 %v3282, %v3275
    %v3857 = vpack.c.b16 %v3283, %v3276
    %v3858 = vpack.c.b16 %v3284, %v3277
    %v3859 = vpack.c.b16 %v3285, %v3278
    %v3860 = vpack.c.b16 %v3286, %v3279
    %v3861 = vpack.c.b16 %v3294, %v3287
    %v3862 = vpack.c.b16 %v3295, %v3288
    %v3863 = vpack.c.b16 %v3296, %v3289
    %v3864 = vpack.c.b16 %v3297, %v3290
    %v3865 = vpack.c.b16 %v3298, %v3291
    %v3866 = vpack.c.b16 %v3299, %v3292
    %v3867 = vpack.c.b16 %v3300, %v3293
    %v3868 = vpack.c.b16 %v3308, %v3301
    %v3869 = vpack.c.b16 %v3309, %v3302
    %v3870 = vpack.c.b16 %v3310, %v3303
    %v3871 = vpack.c.b16 %v3311, %v3304
    %v3872 = vpack.c.b16 %v3312, %v3305
    %v3873 = vpack.c.b16 %v3313, %v3306
    %v3874 = vpack.c.b16 %v3314, %v3307
    %v3875 = vpack.c.b16 %v3322, %v3315
    %v3876 = vpack.c.b16 %v3323, %v3316
    %v3877 = vpack.c.b16 %v3324, %v3317
    %v3878 = vpack.c.b16 %v3325, %v3318
    %v3879 = vpack.c.b16 %v3326, %v3319
    %v3880 = vpack.c.b16 %v3327, %v3320
    %v3881 = vpack.c.b16 %v3328, %v3321
    %v3882 = vpack.c.b16 %v3336, %v3329
    %v3883 = vpack.c.b16 %v3337, %v3330
    %v3884 = vpack.c.b16 %v3338, %v3331
    %v3885 = vpack.c.b16 %v3339, %v3332
    %v3886 = vpack.c.b16 %v3340, %v3333
    %v3887 = vpack.c.b16 %v3341, %v3334
    %v3888 = vpack.c.b16 %v3342, %v3335
    %v3889 = vpack.c.b16 %v3350, %v3343
    %v3890 = vpack.c.b16 %v3351, %v3344
    %v3891 = vpack.c.b16 %v3352, %v3345
    %v3892 = vpack.c.b16 %v3353, %v3346
    %v3893 = vpack.c.b16 %v3354, %v3347
    %v3894 = vpack.c.b16 %v3355, %v3348
    %v3895 = vpack.c.b16 %v3356, %v3349
    %v3896 = vpack.c.b16 %v3364, %v3357
    %v3897 = vpack.c.b16 %v3365, %v3358
    %v3898 = vpack.c.b16 %v3366, %v3359
    %v3899 = vpack.c.b16 %v3367, %v3360
    %v3900 = vpack.c.b16 %v3368, %v3361
    %v3901 = vpack.c.b16 %v3369, %v3362
    %v3902 = vpack.c.b16 %v3370, %v3363
    %v3903 = vpack.c.b16 %v3378, %v3371
    %v3904 = vpack.c.b16 %v3379, %v3372
    %v3905 = vpack.c.b16 %v3380, %v3373
    %v3906 = vpack.c.b16 %v3381, %v3374
    %v3907 = vpack.c.b16 %v3382, %v3375
    %v3908 = vpack.c.b16 %v3383, %v3376
    %v3909 = vpack.c.b16 %v3384, %v3377
    %v3910 = vpack.c.b16 %v3392, %v3385
    %v3911 = vpack.c.b16 %v3393, %v3386
    %v3912 = vpack.c.b16 %v3394, %v3387
    %v3913 = vpack.c.b16 %v3395, %v3388
    %v3914 = vpack.c.b16 %v3396, %v3389
    %v3915 = vpack.c.b16 %v3397, %v3390
    %v3916 = vpack.c.b16 %v3398, %v3391
    %v3917 = vpack.c.b16 %v3406, %v3399
    %v3918 = vpack.c.b16 %v3407, %v3400
    %v3919 = vpack.c.b16 %v3408, %v3401
    %v3920 = vpack.c.b16 %v3409, %v3402
    %v3921 = vpack.c.b16 %v3410, %v3403
    %v3922 = vpack.c.b16 %v3411, %v3404
    %v3923 = vpack.c.b16 %v3412, %v3405
    %v3924 = vpack.c.b16 %v3420, %v3413
    %v3925 = vpack.c.b16 %v3421, %v3414
    %v3926 = vpack.c.b16 %v3422, %v3415
    %v3927 = vpack.c.b16 %v3423, %v3416
    %v3928 = vpack.c.b16 %v3424, %v3417
    %v3929 = vpack.c.b16 %v3425, %v3418
    %v3930 = vpack.c.b16 %v3426, %v3419
    %v3931 = vpack.c.b16 %v3434, %v3427
    %v3932 = vpack.c.b16 %v3435, %v3428
    %v3933 = vpack.c.b16 %v3436, %v3429
    %v3934 = vpack.c.b16 %v3437, %v3430
    %v3935 = vpack.c.b16 %v3438, %v3431
    %v3936 = vpack.c.b16 %v3439, %v3432
    %v3937 = vpack.c.b16 %v3440, %v3433
    %v3938 = vpack.c.b16 %v3448, %v3441
    %v3939 = vpack.c.b16 %v3449, %v3442
    %v3940 = vpack.c.b16 %v3450, %v3443
    %v3941 = vpack.c.b16 %v3451, %v3444
    %v3942 = vpack.c.b16 %v3452, %v3445
    %v3943 = vpack.c.b16 %v3453, %v3446
    %v3944 = vpack.c.b16 %v3454, %v3447
    %v3945 = vpack.c.b16 %v3462, %v3455
    %v3946 = vpack.c.b16 %v3463, %v3456
    %v3947 = vpack.c.b16 %v3464, %v3457
    %v3948 = vpack.c.b16 %v3465, %v3458
    %v3949 = vpack.c.b16 %v3466, %v3459
    %v3950 = vpack.c.b16 %v3467, %v3460
    %v3951 = vpack.c.b16 %v3468, %v3461
    %v3952 = vpack.c.b16 %v3476, %v3469
    %v3953 = vpack.c.b16 %v3477, %v3470
    %v3954 = vpack.c.b16 %v3478, %v3471
    %v3955 = vpack.c.b16 %v3479, %v3472
    %v3956 = vpack.c.b16 %v3480, %v3473
    %v3957 = vpack.c.b16 %v3481, %v3474
    %v3958 = vpack.c.b16 %v3482, %v3475
    %v3959 = vpack.c.b16 %v3490, %v3483
    %v3960 = vpack.c.b16 %v3491, %v3484
    %v3961 = vpack.c.b16 %v3492, %v3485
    %v3962 = vpack.c.b16 %v3493, %v3486
    %v3963 = vpack.c.b16 %v3494, %v3487
    %v3964 = vpack.c.b16 %v3495, %v3488
    %v3965 = vpack.c.b16 %v3496, %v3489
    %v3966 = vpack.c.b16 %v3504, %v3497
    %v3967 = vpack.c.b16 %v3505, %v3498
    %v3968 = vpack.c.b16 %v3506, %v3499
    %v3969 = vpack.c.b16 %v3507, %v3500
    %v3970 = vpack.c.b16 %v3508, %v3501
    %v3971 = vpack.c.b16 %v3509, %v3502
    %v3972 = vpack.c.b16 %v3510, %v3503
    %v3973 = vpack.c.b16 %v3518, %v3511
    %v3974 = vpack.c.b16 %v3519, %v3512
    %v3975 = vpack.c.b16 %v3520, %v3513
    %v3976 = vpack.c.b16 %v3521, %v3514
    %v3977 = vpack.c.b16 %v3522, %v3515
    %v3978 = vpack.c.b16 %v3523, %v3516
    %v3979 = vpack.c.b16 %v3524, %v3517
    %v3980 = vpack.c.b16 %v3532, %v3525
    %v3981 = vpack.c.b16 %v3533, %v3526
    %v3982 = vpack.c.b16 %v3534, %v3527
    %v3983 = vpack.c.b16 %v3535, %v3528
    %v3984 = vpack.c.b16 %v3536, %v3529
    %v3985 = vpack.c.b16 %v3537, %v3530
    %v3986 = vpack.c.b16 %v3538, %v3531
    %v3987 = vpack.c.b16 %v3546, %v3539
    %v3988 = vpack.c.b16 %v3547, %v3540
    %v3989 = vpack.c.b16 %v3548, %v3541
    %v3990 = vpack.c.b16 %v3549, %v3542
    %v3991 = vpack.c.b16 %v3550, %v3543
    %v3992 = vpack.c.b16 %v3551, %v3544
    %v3993 = vpack.c.b16 %v3552, %v3545
    %v3994 = vpack.c.b16 %v3560, %v3553
    %v3995 = vpack.c.b16 %v3561, %v3554
    %v3996 = vpack.c.b16 %v3562, %v3555
    %v3997 = vpack.c.b16 %v3563, %v3556
    %v3998 = vpack.c.b16 %v3564, %v3557
    %v3999 = vpack.c.b16 %v3565, %v3558
    %v4000 = vpack.c.b16 %v3566, %v3559
    %v4001 = vpack.c.b16 %v3574, %v3567
    %v4002 = vpack.c.b16 %v3575, %v3568
    %v4003 = vpack.c.b16 %v3576, %v3569
    %v4004 = vpack.c.b16 %v3577, %v3570
    %v4005 = vpack.c.b16 %v3578, %v3571
    %v4006 = vpack.c.b16 %v3579, %v3572
    %v4007 = vpack.c.b16 %v3580, %v3573
    %v4008 = vpack.c.b16 %v3588, %v3581
    %v4009 = vpack.c.b16 %v3589, %v3582
    %v4010 = vpack.c.b16 %v3590, %v3583
    %v4011 = vpack.c.b16 %v3591, %v3584
    %v4012 = vpack.c.b16 %v3592, %v3585
    %v4013 = vpack.c.b16 %v3593, %v3586
    %v4014 = vpack.c.b16 %v3594, %v3587
    %v4015 = vpack.c.b16 %v3602, %v3595
    %v4016 = vpack.c.b16 %v3603, %v3596
    %v4017 = vpack.c.b16 %v3604, %v3597
    %v4018 = vpack.c.b16 %v3605, %v3598
    %v4019 = vpack.c.b16 %v3606, %v3599
    %v4020 = vpack.c.b16 %v3607, %v3600
    %v4021 = vpack.c.b16 %v3608, %v3601
    %v4022 = vpack.c.b16 %v3616, %v3609
    %v4023 = vpack.c.b16 %v3617, %v3610
    %v4024 = vpack.c.b16 %v3618, %v3611
    %v4025 = vpack.c.b16 %v3619, %v3612
    %v4026 = vpack.c.b16 %v3620, %v3613
    %v4027 = vpack.c.b16 %v3621, %v3614
    %v4028 = vpack.c.b16 %v3622, %v3615
    %v4029 = vpack.c.b16 %v3630, %v3623
    %v4030 = vpack.c.b16 %v3631, %v3624
    %v4031 = vpack.c.b16 %v3632, %v3625
    %v4032 = vpack.c.b16 %v3633, %v3626
    %v4033 = vpack.c.b16 %v3634, %v3627
    %v4034 = vpack.c.b16 %v3635, %v3628
    %v4035 = vpack.c.b16 %v3636, %v3629
    %v4036 = vpack.c.b16 %v3644, %v3637
    %v4037 = vpack.c.b16 %v3645, %v3638
    %v4038 = vpack.c.b16 %v3646, %v3639
    %v4039 = vpack.c.b16 %v3647, %v3640
    %v4040 = vpack.c.b16 %v3648, %v3641
    %v4041 = vpack.c.b16 %v3649, %v3642
    %v4042 = vpack.c.b16 %v3650, %v3643
    %v4043 = vpack.c.b16 %v3658, %v3651
    %v4044 = vpack.c.b16 %v3659, %v3652
    %v4045 = vpack.c.b16 %v3660, %v3653
    %v4046 = vpack.c.b16 %v3661, %v3654
    %v4047 = vpack.c.b16 %v3662, %v3655
    %v4048 = vpack.c.b16 %v3663, %v3656
    %v4049 = vpack.c.b16 %v3664, %v3657
    %v4050 = vpack.c.b16 %v3672, %v3665
    %v4051 = vpack.c.b16 %v3673, %v3666
    %v4052 = vpack.c.b16 %v3674, %v3667
    %v4053 = vpack.c.b16 %v3675, %v3668
    %v4054 = vpack.c.b16 %v3676, %v3669
    %v4055 = vpack.c.b16 %v3677, %v3670
    %v4056 = vpack.c.b16 %v3678, %v3671
    %v4057 = vpack.c.b16 %v3686, %v3679
    %v4058 = vpack.c.b16 %v3687, %v3680
    %v4059 = vpack.c.b16 %v3688, %v3681
    %v4060 = vpack.c.b16 %v3689, %v3682
    %v4061 = vpack.c.b16 %v3690, %v3683
    %v4062 = vpack.c.b16 %v3691, %v3684
    %v4063 = vpack.c.b16 %v3692, %v3685
    %v4064 = vpack.c.b16 %v3700, %v3693
    %v4065 = vpack.c.b16 %v3701, %v3694
    %v4066 = vpack.c.b16 %v3702, %v3695
    %v4067 = vpack.c.b16 %v3703, %v3696
    %v4068 = vpack.c.b16 %v3704, %v3697
    %v4069 = vpack.c.b16 %v3705, %v3698
    %v4070 = vpack.c.b16 %v3706, %v3699
    %v4071 = vpack.c.b16 %v3714, %v3707
    %v4072 = vpack.c.b16 %v3715, %v3708
    %v4073 = vpack.c.b16 %v3716, %v3709
    %v4074 = vpack.c.b16 %v3717, %v3710
    %v4075 = vpack.c.b16 %v3718, %v3711
    %v4076 = vpack.c.b16 %v3719, %v3712
    %v4077 = vpack.c.b16 %v3720, %v3713
    %v4078 = vpack.c.b16 %v3728, %v3721
    %v4079 = vpack.c.b16 %v3729, %v3722
    %v4080 = vpack.c.b16 %v3730, %v3723
    %v4081 = vpack.c.b16 %v3731, %v3724
    %v4082 = vpack.c.b16 %v3732, %v3725
    %v4083 = vpack.c.b16 %v3733, %v3726
    %v4084 = vpack.c.b16 %v3734, %v3727
    %v4085 = vpack.c.b16 %v3742, %v3735
    %v4086 = vpack.c.b16 %v3743, %v3736
    %v4087 = vpack.c.b16 %v3744, %v3737
    %v4088 = vpack.c.b16 %v3745, %v3738
    %v4089 = vpack.c.b16 %v3746, %v3739
    %v4090 = vpack.c.b16 %v3747, %v3740
    %v4091 = vpack.c.b16 %v3748, %v3741
    %v4092 = vpack.c.b16 %v3756, %v3749
    %v4093 = vpack.c.b16 %v3757, %v3750
    %v4094 = vpack.c.b16 %v3758, %v3751
    %v4095 = vpack.c.b16 %v3759, %v3752
    %v4096 = vpack.c.b16 %v3760, %v3753
    %v4097 = vpack.c.b16 %v3761, %v3754
    %v4098 = vpack.c.b16 %v3762, %v3755
    %4435 = vmatprep.subr.bf16.mxu0 %v3764
    %4436 = vmatpush1.bf16.msra.mxu0 %v3763
    %4437 = vmatprep.subr.bf16.mxu0 %v3771
    %4438 = vmatpush1.bf16.msra.mxu0 %v3770
    %4439 = vmatprep.subr.bf16.mxu0 %v3778
    %4440 = vmatpush1.bf16.msra.mxu0 %v3777
    %4441 = vmatprep.subr.bf16.mxu0 %v3785
    %4442 = vmatpush1.bf16.msra.mxu0 %v3784
    %4443 = vmatprep.subr.bf16.mxu0 %v3792
    %4444 = vmatpush1.bf16.msra.mxu0 %v3791
    %4445 = vmatprep.subr.bf16.mxu0 %v3799
    %4446 = vmatpush1.bf16.msra.mxu0 %v3798
    %4447 = vmatprep.subr.bf16.mxu0 %v3806
    %4448 = vmatpush1.bf16.msra.mxu0 %v3805
    %4449 = vmatprep.subr.bf16.mxu0 %v3813
    %4450 = vmatpush1.bf16.msra.mxu0 %v3812
    %4451 = vmatprep.subr.bf16.mxu0 %v3820
    %4452 = vmatpush1.bf16.msra.mxu0 %v3819
    %4453 = vmatprep.subr.bf16.mxu0 %v3827
    %4454 = vmatpush1.bf16.msra.mxu0 %v3826
    %4455 = vmatprep.subr.bf16.mxu0 %v3834
    %4456 = vmatpush1.bf16.msra.mxu0 %v3833
    %4457 = vmatprep.subr.bf16.mxu0 %v3841
    %4458 = vmatpush1.bf16.msra.mxu0 %v3840
    %4459 = vmatprep.subr.bf16.mxu0 %v3848
    %4460 = vmatpush1.bf16.msra.mxu0 %v3847
    %4461 = vmatprep.subr.bf16.mxu0 %v3855
    %4462 = vmatpush1.bf16.msra.mxu0 %v3854
    %4463 = vmatprep.subr.bf16.mxu0 %v3862
    %4464 = vmatpush1.bf16.msra.mxu0 %v3861
    %4465 = vmatprep.subr.bf16.mxu0 %v3869
    %4466 = vmatpush1.bf16.msra.mxu0 %v3868
    %4467 = vmatprep.mubr.bf16.mxu0 %v2281
    %4468 = vmatmul.mubr.bf16.gmra.mrb[0].mxu0 %v2280
    %v4469 = vpop.f32.mrb[0].mxu0
    %v4470 = vadd.f32 %v2675, %v4469
    %v4471 = vpop.f32.mrb[0].mxu0
    %v4472 = vadd.f32 %v2679, %v4471
    %v4473 = vpop.f32.mrb[0].mxu0
    %v4474 = vadd.f32 %v2675, %v4473
    %v4475 = vpop.f32.mrb[0].mxu0
    %v4476 = vadd.f32 %v2679, %v4475
    %4477 = vdwg.mxu0
    %4478 = vmatprep.subr.bf16.mxu0 %v3876
    %4479 = vmatpush1.bf16.msra.mxu0 %v3875
    %4480 = vmatprep.subr.bf16.mxu0 %v3883
    %4481 = vmatpush1.bf16.msra.mxu0 %v3882
    %4482 = vmatprep.subr.bf16.mxu0 %v3890
    %4483 = vmatpush1.bf16.msra.mxu0 %v3889
    %4484 = vmatprep.subr.bf16.mxu0 %v3897
    %4485 = vmatpush1.bf16.msra.mxu0 %v3896
    %4486 = vmatprep.subr.bf16.mxu0 %v3904
    %4487 = vmatpush1.bf16.msra.mxu0 %v3903
    %4488 = vmatprep.subr.bf16.mxu0 %v3911
    %4489 = vmatpush1.bf16.msra.mxu0 %v3910
    %4490 = vmatprep.subr.bf16.mxu0 %v3918
    %4491 = vmatpush1.bf16.msra.mxu0 %v3917
    %4492 = vmatprep.subr.bf16.mxu0 %v3925
    %4493 = vmatpush1.bf16.msra.mxu0 %v3924
    %4494 = vmatprep.subr.bf16.mxu0 %v3932
    %4495 = vmatpush1.bf16.msra.mxu0 %v3931
    %4496 = vmatprep.subr.bf16.mxu0 %v3939
    %4497 = vmatpush1.bf16.msra.mxu0 %v3938
    %4498 = vmatprep.subr.bf16.mxu0 %v3946
    %4499 = vmatpush1.bf16.msra.mxu0 %v3945
    %4500 = vmatprep.subr.bf16.mxu0 %v3953
    %4501 = vmatpush1.bf16.msra.mxu0 %v3952
    %4502 = vmatprep.subr.bf16.mxu0 %v3960
    %4503 = vmatpush1.bf16.msra.mxu0 %v3959
    %4504 = vmatprep.subr.bf16.mxu0 %v3967
    %4505 = vmatpush1.bf16.msra.mxu0 %v3966
    %4506 = vmatprep.subr.bf16.mxu0 %v3974
    %4507 = vmatpush1.bf16.msra.mxu0 %v3973
    %4508 = vmatprep.subr.bf16.mxu0 %v3981
    %4509 = vmatpush1.bf16.msra.mxu0 %v3980
    %4510 = vmatprep.mubr.bf16.mxu0 %v2283
    %4511 = vmatmul.mubr.bf16.gmra.mrb[0].mxu0 %v2282
    %v4512 = vpop.f32.mrb[0].mxu0
    %v4513 = vadd.f32 %v4470, %v4512
    %v4514 = vpop.f32.mrb[0].mxu0
    %v4515 = vadd.f32 %v4472, %v4514
    %v4516 = vpop.f32.mrb[0].mxu0
    %v4517 = vadd.f32 %v4474, %v4516
    %v4518 = vpop.f32.mrb[0].mxu0
    %v4519 = vadd.f32 %v4476, %v4518
    %4520 = vdwg.mxu0
    %4521 = vmatprep.subr.bf16.mxu0 %v3988
    %4522 = vmatpush1.bf16.msra.mxu0 %v3987
    %4523 = vmatprep.subr.bf16.mxu0 %v3995
    %4524 = vmatpush1.bf16.msra.mxu0 %v3994
    %4525 = vmatprep.subr.bf16.mxu0 %v4002
    %4526 = vmatpush1.bf16.msra.mxu0 %v4001
    %4527 = vmatprep.subr.bf16.mxu0 %v4009
    %4528 = vmatpush1.bf16.msra.mxu0 %v4008
    %4529 = vmatprep.subr.bf16.mxu0 %v4016
    %4530 = vmatpush1.bf16.msra.mxu0 %v4015
    %4531 = vmatprep.subr.bf16.mxu0 %v4023
    %4532 = vmatpush1.bf16.msra.mxu0 %v4022
    %4533 = vmatprep.subr.bf16.mxu0 %v4030
    %4534 = vmatpush1.bf16.msra.mxu0 %v4029
    %4535 = vmatprep.subr.bf16.mxu0 %v4037
    %4536 = vmatpush1.bf16.msra.mxu0 %v4036
    %4537 = vmatprep.subr.bf16.mxu0 %v4044
    %4538 = vmatpush1.bf16.msra.mxu0 %v4043
    %4539 = vmatprep.subr.bf16.mxu0 %v4051
    %4540 = vmatpush1.bf16.msra.mxu0 %v4050
    %4541 = vmatprep.subr.bf16.mxu0 %v4058
    %4542 = vmatpush1.bf16.msra.mxu0 %v4057
    %4543 = vmatprep.subr.bf16.mxu0 %v4065
    %4544 = vmatpush1.bf16.msra.mxu0 %v4064
    %4545 = vmatprep.subr.bf16.mxu0 %v4072
    %4546 = vmatpush1.bf16.msra.mxu0 %v4071
    %4547 = vmatprep.subr.bf16.mxu0 %v4079
    %4548 = vmatpush1.bf16.msra.mxu0 %v4078
    %4549 = vmatprep.subr.bf16.mxu0 %v4086
    %4550 = vmatpush1.bf16.msra.mxu0 %v4085
    %4551 = vmatprep.subr.bf16.mxu0 %v4093
    %4552 = vmatpush1.bf16.msra.mxu0 %v4092
    %4553 = vmatprep.mubr.bf16.mxu0 %v2285
    %4554 = vmatmul.mubr.bf16.gmra.mrb[0].mxu0 %v2284
    %v4555 = vpop.f32.mrb[0].mxu0
    %v4556 = vadd.f32 %v4513, %v4555
    %v4557 = vpop.f32.mrb[0].mxu0
    %v4558 = vadd.f32 %v4515, %v4557
    %v4559 = vpop.f32.mrb[0].mxu0
    %v4560 = vadd.f32 %v4517, %v4559
    %v4561 = vpop.f32.mrb[0].mxu0
    %v4562 = vadd.f32 %v4519, %v4561
    %4563 = vdwg.mxu0
    %4564 = vmatprep.subr.bf16.mxu0 %v3766
    %4565 = vmatpush1.bf16.msra.mxu0 %v3765
    %4566 = vmatprep.subr.bf16.mxu0 %v3773
    %4567 = vmatpush1.bf16.msra.mxu0 %v3772
    %4568 = vmatprep.subr.bf16.mxu0 %v3780
    %4569 = vmatpush1.bf16.msra.mxu0 %v3779
    %4570 = vmatprep.subr.bf16.mxu0 %v3787
    %4571 = vmatpush1.bf16.msra.mxu0 %v3786
    %4572 = vmatprep.subr.bf16.mxu0 %v3794
    %4573 = vmatpush1.bf16.msra.mxu0 %v3793
    %4574 = vmatprep.subr.bf16.mxu0 %v3801
    %4575 = vmatpush1.bf16.msra.mxu0 %v3800
    %4576 = vmatprep.subr.bf16.mxu0 %v3808
    %4577 = vmatpush1.bf16.msra.mxu0 %v3807
    %4578 = vmatprep.subr.bf16.mxu0 %v3815
    %4579 = vmatpush1.bf16.msra.mxu0 %v3814
    %4580 = vmatprep.subr.bf16.mxu0 %v3822
    %4581 = vmatpush1.bf16.msra.mxu0 %v3821
    %4582 = vmatprep.subr.bf16.mxu0 %v3829
    %4583 = vmatpush1.bf16.msra.mxu0 %v3828
    %4584 = vmatprep.subr.bf16.mxu0 %v3836
    %4585 = vmatpush1.bf16.msra.mxu0 %v3835
    %4586 = vmatprep.subr.bf16.mxu0 %v3843
    %4587 = vmatpush1.bf16.msra.mxu0 %v3842
    %4588 = vmatprep.subr.bf16.mxu0 %v3850
    %4589 = vmatpush1.bf16.msra.mxu0 %v3849
    %4590 = vmatprep.subr.bf16.mxu0 %v3857
    %4591 = vmatpush1.bf16.msra.mxu0 %v3856
    %4592 = vmatprep.subr.bf16.mxu0 %v3864
    %4593 = vmatpush1.bf16.msra.mxu0 %v3863
    %4594 = vmatprep.subr.bf16.mxu0 %v3871
    %4595 = vmatpush1.bf16.msra.mxu0 %v3870
    %4596 = vmatprep.mubr.bf16.mxu0 %v2281
    %4597 = vmatmul.mubr.bf16.gmra.mrb[0].mxu0 %v2280
    %v4598 = vpop.f32.mrb[0].mxu0
    %v4599 = vadd.f32 %v2683, %v4598
    %v4600 = vpop.f32.mrb[0].mxu0
    %v4601 = vadd.f32 %v2687, %v4600
    %v4602 = vpop.f32.mrb[0].mxu0
    %v4603 = vadd.f32 %v2683, %v4602
    %v4604 = vpop.f32.mrb[0].mxu0
    %v4605 = vadd.f32 %v2687, %v4604
    %4606 = vdwg.mxu0
    %4607 = vmatprep.subr.bf16.mxu0 %v3878
    %4608 = vmatpush1.bf16.msra.mxu0 %v3877
    %4609 = vmatprep.subr.bf16.mxu0 %v3885
    %4610 = vmatpush1.bf16.msra.mxu0 %v3884
    %4611 = vmatprep.subr.bf16.mxu0 %v3892
    %4612 = vmatpush1.bf16.msra.mxu0 %v3891
    %4613 = vmatprep.subr.bf16.mxu0 %v3899
    %4614 = vmatpush1.bf16.msra.mxu0 %v3898
    %4615 = vmatprep.subr.bf16.mxu0 %v3906
    %4616 = vmatpush1.bf16.msra.mxu0 %v3905
    %4617 = vmatprep.subr.bf16.mxu0 %v3913
    %4618 = vmatpush1.bf16.msra.mxu0 %v3912
    %4619 = vmatprep.subr.bf16.mxu0 %v3920
    %4620 = vmatpush1.bf16.msra.mxu0 %v3919
    %4621 = vmatprep.subr.bf16.mxu0 %v3927
    %4622 = vmatpush1.bf16.msra.mxu0 %v3926
    %4623 = vmatprep.subr.bf16.mxu0 %v3934
    %4624 = vmatpush1.bf16.msra.mxu0 %v3933
    %4625 = vmatprep.subr.bf16.mxu0 %v3941
    %4626 = vmatpush1.bf16.msra.mxu0 %v3940
    %4627 = vmatprep.subr.bf16.mxu0 %v3948
    %4628 = vmatpush1.bf16.msra.mxu0 %v3947
    %4629 = vmatprep.subr.bf16.mxu0 %v3955
    %4630 = vmatpush1.bf16.msra.mxu0 %v3954
    %4631 = vmatprep.subr.bf16.mxu0 %v3962
    %4632 = vmatpush1.bf16.msra.mxu0 %v3961
    %4633 = vmatprep.subr.bf16.mxu0 %v3969
    %4634 = vmatpush1.bf16.msra.mxu0 %v3968
    %4635 = vmatprep.subr.bf16.mxu0 %v3976
    %4636 = vmatpush1.bf16.msra.mxu0 %v3975
    %4637 = vmatprep.subr.bf16.mxu0 %v3983
    %4638 = vmatpush1.bf16.msra.mxu0 %v3982
    %4639 = vmatprep.mubr.bf16.mxu0 %v2283
    %4640 = vmatmul.mubr.bf16.gmra.mrb[0].mxu0 %v2282
    %v4641 = vpop.f32.mrb[0].mxu0
    %v4642 = vadd.f32 %v4599, %v4641
    %v4643 = vpop.f32.mrb[0].mxu0
    %v4644 = vadd.f32 %v4601, %v4643
    %v4645 = vpop.f32.mrb[0].mxu0
    %v4646 = vadd.f32 %v4603, %v4645
    %v4647 = vpop.f32.mrb[0].mxu0
    %v4648 = vadd.f32 %v4605, %v4647
    %4649 = vdwg.mxu0
    %4650 = vmatprep.subr.bf16.mxu0 %v3990
    %4651 = vmatpush1.bf16.msra.mxu0 %v3989
    %4652 = vmatprep.subr.bf16.mxu0 %v3997
    %4653 = vmatpush1.bf16.msra.mxu0 %v3996
    %4654 = vmatprep.subr.bf16.mxu0 %v4004
    %4655 = vmatpush1.bf16.msra.mxu0 %v4003
    %4656 = vmatprep.subr.bf16.mxu0 %v4011
    %4657 = vmatpush1.bf16.msra.mxu0 %v4010
    %4658 = vmatprep.subr.bf16.mxu0 %v4018
    %4659 = vmatpush1.bf16.msra.mxu0 %v4017
    %4660 = vmatprep.subr.bf16.mxu0 %v4025
    %4661 = vmatpush1.bf16.msra.mxu0 %v4024
    %4662 = vmatprep.subr.bf16.mxu0 %v4032
    %4663 = vmatpush1.bf16.msra.mxu0 %v4031
    %4664 = vmatprep.subr.bf16.mxu0 %v4039
    %4665 = vmatpush1.bf16.msra.mxu0 %v4038
    %4666 = vmatprep.subr.bf16.mxu0 %v4046
    %4667 = vmatpush1.bf16.msra.mxu0 %v4045
    %4668 = vmatprep.subr.bf16.mxu0 %v4053
    %4669 = vmatpush1.bf16.msra.mxu0 %v4052
    %4670 = vmatprep.subr.bf16.mxu0 %v4060
    %4671 = vmatpush1.bf16.msra.mxu0 %v4059
    %4672 = vmatprep.subr.bf16.mxu0 %v4067
    %4673 = vmatpush1.bf16.msra.mxu0 %v4066
    %4674 = vmatprep.subr.bf16.mxu0 %v4074
    %4675 = vmatpush1.bf16.msra.mxu0 %v4073
    %4676 = vmatprep.subr.bf16.mxu0 %v4081
    %4677 = vmatpush1.bf16.msra.mxu0 %v4080
    %4678 = vmatprep.subr.bf16.mxu0 %v4088
    %4679 = vmatpush1.bf16.msra.mxu0 %v4087
    %4680 = vmatprep.subr.bf16.mxu0 %v4095
    %4681 = vmatpush1.bf16.msra.mxu0 %v4094
    %4682 = vmatprep.mubr.bf16.mxu0 %v2285
    %4683 = vmatmul.mubr.bf16.gmra.mrb[0].mxu0 %v2284
    %v4684 = vpop.f32.mrb[0].mxu0
    %v4685 = vadd.f32 %v4642, %v4684
    %v4686 = vpop.f32.mrb[0].mxu0
    %v4687 = vadd.f32 %v4644, %v4686
    %v4688 = vpop.f32.mrb[0].mxu0
    %v4689 = vadd.f32 %v4646, %v4688
    %v4690 = vpop.f32.mrb[0].mxu0
    %v4691 = vadd.f32 %v4648, %v4690
    %4692 = vdwg.mxu0
    %4693 = vmatprep.subr.bf16.mxu0 %v3768
    %4694 = vmatpush1.bf16.msra.mxu0 %v3767
    %4695 = vmatprep.subr.bf16.mxu0 %v3775
    %4696 = vmatpush1.bf16.msra.mxu0 %v3774
    %4697 = vmatprep.subr.bf16.mxu0 %v3782
    %4698 = vmatpush1.bf16.msra.mxu0 %v3781
    %4699 = vmatprep.subr.bf16.mxu0 %v3789
    %4700 = vmatpush1.bf16.msra.mxu0 %v3788
    %4701 = vmatprep.subr.bf16.mxu0 %v3796
    %4702 = vmatpush1.bf16.msra.mxu0 %v3795
    %4703 = vmatprep.subr.bf16.mxu0 %v3803
    %4704 = vmatpush1.bf16.msra.mxu0 %v3802
    %4705 = vmatprep.subr.bf16.mxu0 %v3810
    %4706 = vmatpush1.bf16.msra.mxu0 %v3809
    %4707 = vmatprep.subr.bf16.mxu0 %v3817
    %4708 = vmatpush1.bf16.msra.mxu0 %v3816
    %4709 = vmatprep.subr.bf16.mxu0 %v3824
    %4710 = vmatpush1.bf16.msra.mxu0 %v3823
    %4711 = vmatprep.subr.bf16.mxu0 %v3831
    %4712 = vmatpush1.bf16.msra.mxu0 %v3830
    %4713 = vmatprep.subr.bf16.mxu0 %v3838
    %4714 = vmatpush1.bf16.msra.mxu0 %v3837
    %4715 = vmatprep.subr.bf16.mxu0 %v3845
    %4716 = vmatpush1.bf16.msra.mxu0 %v3844
    %4717 = vmatprep.subr.bf16.mxu0 %v3852
    %4718 = vmatpush1.bf16.msra.mxu0 %v3851
    %4719 = vmatprep.subr.bf16.mxu0 %v3859
    %4720 = vmatpush1.bf16.msra.mxu0 %v3858
    %4721 = vmatprep.subr.bf16.mxu0 %v3866
    %4722 = vmatpush1.bf16.msra.mxu0 %v3865
    %4723 = vmatprep.subr.bf16.mxu0 %v3873
    %4724 = vmatpush1.bf16.msra.mxu0 %v3872
    %4725 = vmatprep.mubr.bf16.mxu0 %v2281
    %4726 = vmatmul.mubr.bf16.gmra.mrb[0].mxu0 %v2280
    %v4727 = vpop.f32.mrb[0].mxu0
    %v4728 = vadd.f32 %v2691, %v4727
    %v4729 = vpop.f32.mrb[0].mxu0
    %v4730 = vadd.f32 %v2695, %v4729
    %v4731 = vpop.f32.mrb[0].mxu0
    %v4732 = vadd.f32 %v2691, %v4731
    %v4733 = vpop.f32.mrb[0].mxu0
    %v4734 = vadd.f32 %v2695, %v4733
    %4735 = vdwg.mxu0
    %4736 = vmatprep.subr.bf16.mxu0 %v3880
    %4737 = vmatpush1.bf16.msra.mxu0 %v3879
    %4738 = vmatprep.subr.bf16.mxu0 %v3887
    %4739 = vmatpush1.bf16.msra.mxu0 %v3886
    %4740 = vmatprep.subr.bf16.mxu0 %v3894
    %4741 = vmatpush1.bf16.msra.mxu0 %v3893
    %4742 = vmatprep.subr.bf16.mxu0 %v3901
    %4743 = vmatpush1.bf16.msra.mxu0 %v3900
    %4744 = vmatprep.subr.bf16.mxu0 %v3908
    %4745 = vmatpush1.bf16.msra.mxu0 %v3907
    %4746 = vmatprep.subr.bf16.mxu0 %v3915
    %4747 = vmatpush1.bf16.msra.mxu0 %v3914
    %4748 = vmatprep.subr.bf16.mxu0 %v3922
    %4749 = vmatpush1.bf16.msra.mxu0 %v3921
    %4750 = vmatprep.subr.bf16.mxu0 %v3929
    %4751 = vmatpush1.bf16.msra.mxu0 %v3928
    %4752 = vmatprep.subr.bf16.mxu0 %v3936
    %4753 = vmatpush1.bf16.msra.mxu0 %v3935
    %4754 = vmatprep.subr.bf16.mxu0 %v3943
    %4755 = vmatpush1.bf16.msra.mxu0 %v3942
    %4756 = vmatprep.subr.bf16.mxu0 %v3950
    %4757 = vmatpush1.bf16.msra.mxu0 %v3949
    %4758 = vmatprep.subr.bf16.mxu0 %v3957
    %4759 = vmatpush1.bf16.msra.mxu0 %v3956
    %4760 = vmatprep.subr.bf16.mxu0 %v3964
    %4761 = vmatpush1.bf16.msra.mxu0 %v3963
    %4762 = vmatprep.subr.bf16.mxu0 %v3971
    %4763 = vmatpush1.bf16.msra.mxu0 %v3970
    %4764 = vmatprep.subr.bf16.mxu0 %v3978
    %4765 = vmatpush1.bf16.msra.mxu0 %v3977
    %4766 = vmatprep.subr.bf16.mxu0 %v3985
    %4767 = vmatpush1.bf16.msra.mxu0 %v3984
    %4768 = vmatprep.mubr.bf16.mxu0 %v2283
    %4769 = vmatmul.mubr.bf16.gmra.mrb[0].mxu0 %v2282
    %v4770 = vpop.f32.mrb[0].mxu0
    %v4771 = vadd.f32 %v4728, %v4770
    %v4772 = vpop.f32.mrb[0].mxu0
    %v4773 = vadd.f32 %v4730, %v4772
    %v4774 = vpop.f32.mrb[0].mxu0
    %v4775 = vadd.f32 %v4732, %v4774
    %v4776 = vpop.f32.mrb[0].mxu0
    %v4777 = vadd.f32 %v4734, %v4776
    %4778 = vdwg.mxu0
    %4779 = vmatprep.subr.bf16.mxu0 %v3992
    %4780 = vmatpush1.bf16.msra.mxu0 %v3991
    %4781 = vmatprep.subr.bf16.mxu0 %v3999
    %4782 = vmatpush1.bf16.msra.mxu0 %v3998
    %4783 = vmatprep.subr.bf16.mxu0 %v4006
    %4784 = vmatpush1.bf16.msra.mxu0 %v4005
    %4785 = vmatprep.subr.bf16.mxu0 %v4013
    %4786 = vmatpush1.bf16.msra.mxu0 %v4012
    %4787 = vmatprep.subr.bf16.mxu0 %v4020
    %4788 = vmatpush1.bf16.msra.mxu0 %v4019
    %4789 = vmatprep.subr.bf16.mxu0 %v4027
    %4790 = vmatpush1.bf16.msra.mxu0 %v4026
    %4791 = vmatprep.subr.bf16.mxu0 %v4034
    %4792 = vmatpush1.bf16.msra.mxu0 %v4033
    %4793 = vmatprep.subr.bf16.mxu0 %v4041
    %4794 = vmatpush1.bf16.msra.mxu0 %v4040
    %4795 = vmatprep.subr.bf16.mxu0 %v4048
    %4796 = vmatpush1.bf16.msra.mxu0 %v4047
    %4797 = vmatprep.subr.bf16.mxu0 %v4055
    %4798 = vmatpush1.bf16.msra.mxu0 %v4054
    %4799 = vmatprep.subr.bf16.mxu0 %v4062
    %4800 = vmatpush1.bf16.msra.mxu0 %v4061
    %4801 = vmatprep.subr.bf16.mxu0 %v4069
    %4802 = vmatpush1.bf16.msra.mxu0 %v4068
    %4803 = vmatprep.subr.bf16.mxu0 %v4076
    %4804 = vmatpush1.bf16.msra.mxu0 %v4075
    %4805 = vmatprep.subr.bf16.mxu0 %v4083
    %4806 = vmatpush1.bf16.msra.mxu0 %v4082
    %4807 = vmatprep.subr.bf16.mxu0 %v4090
    %4808 = vmatpush1.bf16.msra.mxu0 %v4089
    %4809 = vmatprep.subr.bf16.mxu0 %v4097
    %4810 = vmatpush1.bf16.msra.mxu0 %v4096
    %4811 = vmatprep.mubr.bf16.mxu0 %v2285
    %4812 = vmatmul.mubr.bf16.gmra.mrb[0].mxu0 %v2284
    %v4813 = vpop.f32.mrb[0].mxu0
    %v4814 = vadd.f32 %v4771, %v4813
    %v4815 = vpop.f32.mrb[0].mxu0
    %v4816 = vadd.f32 %v4773, %v4815
    %v4817 = vpop.f32.mrb[0].mxu0
    %v4818 = vadd.f32 %v4775, %v4817
    %v4819 = vpop.f32.mrb[0].mxu0
    %v4820 = vadd.f32 %v4777, %v4819
    %4821 = vdwg.mxu0
    %4822 = vmatprep.subr.bf16.mxu0 0
    %4823 = vmatpush1.bf16.msra.mxu0 %v3769
    %4824 = vmatprep.subr.bf16.mxu0 0
    %4825 = vmatpush1.bf16.msra.mxu0 %v3776
    %4826 = vmatprep.subr.bf16.mxu0 0
    %4827 = vmatpush1.bf16.msra.mxu0 %v3783
    %4828 = vmatprep.subr.bf16.mxu0 0
    %4829 = vmatpush1.bf16.msra.mxu0 %v3790
    %4830 = vmatprep.subr.bf16.mxu0 0
    %4831 = vmatpush1.bf16.msra.mxu0 %v3797
    %4832 = vmatprep.subr.bf16.mxu0 0
    %4833 = vmatpush1.bf16.msra.mxu0 %v3804
    %4834 = vmatprep.subr.bf16.mxu0 0
    %4835 = vmatpush1.bf16.msra.mxu0 %v3811
    %4836 = vmatprep.subr.bf16.mxu0 0
    %4837 = vmatpush1.bf16.msra.mxu0 %v3818
    %4838 = vmatprep.subr.bf16.mxu0 0
    %4839 = vmatpush1.bf16.msra.mxu0 %v3825
    %4840 = vmatprep.subr.bf16.mxu0 0
    %4841 = vmatpush1.bf16.msra.mxu0 %v3832
    %4842 = vmatprep.subr.bf16.mxu0 0
    %4843 = vmatpush1.bf16.msra.mxu0 %v3839
    %4844 = vmatprep.subr.bf16.mxu0 0
    %4845 = vmatpush1.bf16.msra.mxu0 %v3846
    %4846 = vmatprep.subr.bf16.mxu0 0
    %4847 = vmatpush1.bf16.msra.mxu0 %v3853
    %4848 = vmatprep.subr.bf16.mxu0 0
    %4849 = vmatpush1.bf16.msra.mxu0 %v3860
    %4850 = vmatprep.subr.bf16.mxu0 0
    %4851 = vmatpush1.bf16.msra.mxu0 %v3867
    %4852 = vmatprep.subr.bf16.mxu0 0
    %4853 = vmatpush1.bf16.msra.mxu0 %v3874
    %4854 = vmatprep.mubr.bf16.mxu0 %v2281
    %4855 = vmatmul.mubr.bf16.gmra.mrb[0].mxu0 %v2280
    %v4856 = vpop.f32.mrb[0].mxu0
    %v4857 = vadd.f32 %v2699, %v4856
    %v4858 = vpop.f32.mrb[0].mxu0
    %v4859 = vpop.f32.mrb[0].mxu0
    %v4860 = vadd.f32 %v2699, %v4859
    %v4861 = vpop.f32.mrb[0].mxu0
    %4862 = vdwg.mxu0
    %4863 = vmatprep.subr.bf16.mxu0 0
    %4864 = vmatpush1.bf16.msra.mxu0 %v3881
    %4865 = vmatprep.subr.bf16.mxu0 0
    %4866 = vmatpush1.bf16.msra.mxu0 %v3888
    %4867 = vmatprep.subr.bf16.mxu0 0
    %4868 = vmatpush1.bf16.msra.mxu0 %v3895
    %4869 = vmatprep.subr.bf16.mxu0 0
    %4870 = vmatpush1.bf16.msra.mxu0 %v3902
    %4871 = vmatprep.subr.bf16.mxu0 0
    %4872 = vmatpush1.bf16.msra.mxu0 %v3909
    %4873 = vmatprep.subr.bf16.mxu0 0
    %4874 = vmatpush1.bf16.msra.mxu0 %v3916
    %4875 = vmatprep.subr.bf16.mxu0 0
    %4876 = vmatpush1.bf16.msra.mxu0 %v3923
    %4877 = vmatprep.subr.bf16.mxu0 0
    %4878 = vmatpush1.bf16.msra.mxu0 %v3930
    %4879 = vmatprep.subr.bf16.mxu0 0
    %4880 = vmatpush1.bf16.msra.mxu0 %v3937
    %4881 = vmatprep.subr.bf16.mxu0 0
    %4882 = vmatpush1.bf16.msra.mxu0 %v3944
    %4883 = vmatprep.subr.bf16.mxu0 0
    %4884 = vmatpush1.bf16.msra.mxu0 %v3951
    %4885 = vmatprep.subr.bf16.mxu0 0
    %4886 = vmatpush1.bf16.msra.mxu0 %v3958
    %4887 = vmatprep.subr.bf16.mxu0 0
    %4888 = vmatpush1.bf16.msra.mxu0 %v3965
    %4889 = vmatprep.subr.bf16.mxu0 0
    %4890 = vmatpush1.bf16.msra.mxu0 %v3972
    %4891 = vmatprep.subr.bf16.mxu0 0
    %4892 = vmatpush1.bf16.msra.mxu0 %v3979
    %4893 = vmatprep.subr.bf16.mxu0 0
    %4894 = vmatpush1.bf16.msra.mxu0 %v3986
    %4895 = vmatprep.mubr.bf16.mxu0 %v2283
    %4896 = vmatmul.mubr.bf16.gmra.mrb[0].mxu0 %v2282
    %v4897 = vpop.f32.mrb[0].mxu0
    %v4898 = vadd.f32 %v4857, %v4897
    %v4899 = vpop.f32.mrb[0].mxu0
    %v4900 = vpop.f32.mrb[0].mxu0
    %v4901 = vadd.f32 %v4860, %v4900
    %v4902 = vpop.f32.mrb[0].mxu0
    %4903 = vdwg.mxu0
    %4904 = vmatprep.subr.bf16.mxu0 0
    %4905 = vmatpush1.bf16.msra.mxu0 %v3993
    %4906 = vmatprep.subr.bf16.mxu0 0
    %4907 = vmatpush1.bf16.msra.mxu0 %v4000
    %4908 = vmatprep.subr.bf16.mxu0 0
    %4909 = vmatpush1.bf16.msra.mxu0 %v4007
    %4910 = vmatprep.subr.bf16.mxu0 0
    %4911 = vmatpush1.bf16.msra.mxu0 %v4014
    %4912 = vmatprep.subr.bf16.mxu0 0
    %4913 = vmatpush1.bf16.msra.mxu0 %v4021
    %4914 = vmatprep.subr.bf16.mxu0 0
    %4915 = vmatpush1.bf16.msra.mxu0 %v4028
    %4916 = vmatprep.subr.bf16.mxu0 0
    %4917 = vmatpush1.bf16.msra.mxu0 %v4035
    %4918 = vmatprep.subr.bf16.mxu0 0
    %4919 = vmatpush1.bf16.msra.mxu0 %v4042
    %4920 = vmatprep.subr.bf16.mxu0 0
    %4921 = vmatpush1.bf16.msra.mxu0 %v4049
    %4922 = vmatprep.subr.bf16.mxu0 0
    %4923 = vmatpush1.bf16.msra.mxu0 %v4056
    %4924 = vmatprep.subr.bf16.mxu0 0
    %4925 = vmatpush1.bf16.msra.mxu0 %v4063
    %4926 = vmatprep.subr.bf16.mxu0 0
    %4927 = vmatpush1.bf16.msra.mxu0 %v4070
    %4928 = vmatprep.subr.bf16.mxu0 0
    %4929 = vmatpush1.bf16.msra.mxu0 %v4077
    %4930 = vmatprep.subr.bf16.mxu0 0
    %4931 = vmatpush1.bf16.msra.mxu0 %v4084
    %4932 = vmatprep.subr.bf16.mxu0 0
    %4933 = vmatpush1.bf16.msra.mxu0 %v4091
    %4934 = vmatprep.subr.bf16.mxu0 0
    %4935 = vmatpush1.bf16.msra.mxu0 %v4098
    %4936 = vmatprep.mubr.bf16.mxu0 %v2285
    %4937 = vmatmul.mubr.bf16.gmra.mrb[0].mxu0 %v2284
    %v4938 = vpop.f32.mrb[0].mxu0
    %v4939 = vadd.f32 %v4898, %v4938
    %v4940 = vpop.f32.mrb[0].mxu0
    %v4941 = vpop.f32.mrb[0].mxu0
    %v4942 = vadd.f32 %v4901, %v4941
    %v4943 = vpop.f32.mrb[0].mxu0
    %4944 = vdwg.mxu0
    %v4945 = vmul.f32 %v4556, %v4556
    %v4946 = vmul.f32 %v4558, %v4558
    %v4947 = vmul.f32 %v4685, %v4685
    %v4948 = vmul.f32 %v4687, %v4687
    %v4949 = vmul.f32 %v4814, %v4814
    %v4950 = vmul.f32 %v4816, %v4816
    %v4951 = vmul.f32 %v4939, %v4939
    %v4952 = vmul.f32 %v4560, %v4560
    %v4953 = vmul.f32 %v4562, %v4562
    %v4954 = vmul.f32 %v4689, %v4689
    %v4955 = vmul.f32 %v4691, %v4691
    %v4956 = vmul.f32 %v4818, %v4818
    %v4957 = vmul.f32 %v4820, %v4820
    %v4958 = vmul.f32 %v4942, %v4942
    %v4959 = vpack.c.bf16 %v4952, %v4945
    %v4960 = vpack.c.bf16 %v4953, %v4946
    %v4961 = vpack.c.bf16 %v4954, %v4947
    %v4962 = vpack.c.bf16 %v4955, %v4948
    %v4963 = vpack.c.bf16 %v4956, %v4949
    %v4964 = vpack.c.bf16 %v4957, %v4950
    %v4965 = vpack.c.bf16 %v4958, %v4951
    %v4966 = vld [vmem:[#allocation9] sm:$0xf]
    %v4967 = vld [vmem:[#allocation9 + $0x4] sm:$0xf]
    %v4968 = vld [vmem:[#allocation9 + $0x8] sm:$0xf]
    %v4969 = vld [vmem:[#allocation9 + $0xc] sm:$0xf]
    %v4970 = vld [vmem:[#allocation9 + $0x10] sm:$0xf]
    %v4971 = vld [vmem:[#allocation9 + $0x14] sm:$0xf]
    %v4972 = vld [vmem:[#allocation9 + $0x18] sm:$0xf]
    %v4973 = vld [vmem:[#allocation9 + $0x1c] sm:$0xf]
    %v4974 = vld [vmem:[#allocation9 + $0x20] sm:$0xf]
    %v4975 = vld [vmem:[#allocation9 + $0x24] sm:$0xf]
    %v4976 = vld [vmem:[#allocation9 + $0x28] sm:$0xf]
    %v4977 = vld [vmem:[#allocation9 + $0x2c] sm:$0xf]
    %v4978 = vld [vmem:[#allocation9 + $0x30] sm:$0xf]
    %v4979 = vld [vmem:[#allocation9 + $0x34] sm:$0xf]
    %v4980 = vld [vmem:[#allocation9 + $0x38] sm:$0xf]
    %v4981 = vld [vmem:[#allocation9 + $0x3c] sm:$0xf]
    %v4982 = vld [vmem:[#allocation9 + $0x40] sm:$0xf]
    %v4983 = vld [vmem:[#allocation9 + $0x44] sm:$0xf]
    %v4984 = vld [vmem:[#allocation9 + $0x48] sm:$0xf]
    %v4985 = vld [vmem:[#allocation9 + $0x4c] sm:$0xf]
    %v4986 = vld [vmem:[#allocation9 + $0x50] sm:$0xf]
    %v4987 = vld [vmem:[#allocation9 + $0x54] sm:$0xf]
    %v4988 = vld [vmem:[#allocation9 + $0x58] sm:$0xf]
    %v4989 = vld [vmem:[#allocation9 + $0x5c] sm:$0xf]
    %v4990 = vld [vmem:[#allocation9 + $0x60] sm:$0xf]
    %v4991 = vld [vmem:[#allocation9 + $0x64] sm:$0xf]
    %v4992 = vld [vmem:[#allocation9 + $0x68] sm:$0xf]
    %v4993 = vld [vmem:[#allocation9 + $0x6c] sm:$0xf]
    %v4994 = vld [vmem:[#allocation9 + $0x70] sm:$0xf]
    %v4995 = vld [vmem:[#allocation9 + $0x74] sm:$0xf]
    %v4996 = vld [vmem:[#allocation9 + $0x78] sm:$0xf]
    %v4997 = vld [vmem:[#allocation9 + $0x7c] sm:$0xf]
    %v4998 = vld [vmem:[#allocation9 + $0x80] sm:$0xf]
    %v4999 = vld [vmem:[#allocation9 + $0x84] sm:$0xf]
    %v5000 = vld [vmem:[#allocation9 + $0x88] sm:$0xf]
    %v5001 = vld [vmem:[#allocation9 + $0x8c] sm:$0xf]
    %v5002 = vld [vmem:[#allocation9 + $0x90] sm:$0xf]
    %v5003 = vld [vmem:[#allocation9 + $0x94] sm:$0xf]
    %v5004 = vld [vmem:[#allocation9 + $0x98] sm:$0xf]
    %v5005 = vld [vmem:[#allocation9 + $0x9c] sm:$0xf]
    %v5006 = vld [vmem:[#allocation9 + $0xa0] sm:$0xf]
    %v5007 = vld [vmem:[#allocation9 + $0xa4] sm:$0xf]
    %v5008 = vld [vmem:[#allocation9 + $0xa8] sm:$0xf]
    %v5009 = vld [vmem:[#allocation9 + $0xac] sm:$0xf]
    %v5010 = vld [vmem:[#allocation9 + $0xb0] sm:$0xf]
    %v5011 = vld [vmem:[#allocation9 + $0xb4] sm:$0xf]
    %v5012 = vld [vmem:[#allocation9 + $0xb8] sm:$0xf]
    %v5013 = vld [vmem:[#allocation9 + $0xbc] sm:$0xf]
    %v5014 = vld [vmem:[#allocation9 + $0xc0] sm:$0xf]
    %v5015 = vld [vmem:[#allocation9 + $0xc4] sm:$0xf]
    %v5016 = vld [vmem:[#allocation9 + $0xc8] sm:$0xf]
    %v5017 = vld [vmem:[#allocation9 + $0xcc] sm:$0xf]
    %v5018 = vld [vmem:[#allocation9 + $0xd0] sm:$0xf]
    %v5019 = vld [vmem:[#allocation9 + $0xd4] sm:$0xf]
    %v5020 = vld [vmem:[#allocation9 + $0xd8] sm:$0xf]
    %v5021 = vld [vmem:[#allocation9 + $0xdc] sm:$0xf]
    %v5022 = vld [vmem:[#allocation9 + $0xe0] sm:$0xf]
    %v5023 = vld [vmem:[#allocation9 + $0xe4] sm:$0xf]
    %v5024 = vld [vmem:[#allocation9 + $0xe8] sm:$0xf]
    %v5025 = vld [vmem:[#allocation9 + $0xec] sm:$0xf]
    %v5026 = vld [vmem:[#allocation9 + $0xf0] sm:$0xf]
    %v5027 = vld [vmem:[#allocation9 + $0xf4] sm:$0xf]
    %v5028 = vld [vmem:[#allocation9 + $0xf8] sm:$0xf]
    %v5029 = vld [vmem:[#allocation9 + $0xfc] sm:$0xf]
    %v5030 = vld [vmem:[#allocation9 + $0x100] sm:$0xf]
    %v5031 = vld [vmem:[#allocation9 + $0x104] sm:$0xf]
    %v5032 = vld [vmem:[#allocation9 + $0x108] sm:$0xf]
    %v5033 = vld [vmem:[#allocation9 + $0x10c] sm:$0xf]
    %v5034 = vld [vmem:[#allocation9 + $0x110] sm:$0xf]
    %v5035 = vld [vmem:[#allocation9 + $0x114] sm:$0xf]
    %v5036 = vld [vmem:[#allocation9 + $0x118] sm:$0xf]
    %v5037 = vld [vmem:[#allocation9 + $0x11c] sm:$0xf]
    %v5038 = vld [vmem:[#allocation9 + $0x120] sm:$0xf]
    %v5039 = vld [vmem:[#allocation9 + $0x124] sm:$0xf]
    %v5040 = vld [vmem:[#allocation9 + $0x128] sm:$0xf]
    %v5041 = vld [vmem:[#allocation9 + $0x12c] sm:$0xf]
    %v5042 = vld [vmem:[#allocation9 + $0x130] sm:$0xf]
    %v5043 = vld [vmem:[#allocation9 + $0x134] sm:$0xf]
    %v5044 = vld [vmem:[#allocation9 + $0x138] sm:$0xf]
    %v5045 = vld [vmem:[#allocation9 + $0x13c] sm:$0xf]
    %v5046 = vld [vmem:[#allocation9 + $0x140] sm:$0xf]
    %v5047 = vld [vmem:[#allocation9 + $0x144] sm:$0xf]
    %v5048 = vld [vmem:[#allocation9 + $0x148] sm:$0xf]
    %v5049 = vld [vmem:[#allocation9 + $0x14c] sm:$0xf]
    %v5050 = vld [vmem:[#allocation9 + $0x150] sm:$0xf]
    %v5051 = vld [vmem:[#allocation9 + $0x154] sm:$0xf]
    %v5052 = vld [vmem:[#allocation9 + $0x158] sm:$0xf]
    %v5053 = vld [vmem:[#allocation9 + $0x15c] sm:$0xf]
    %v5054 = vld [vmem:[#allocation9 + $0x160] sm:$0xf]
    %v5055 = vld [vmem:[#allocation9 + $0x164] sm:$0xf]
    %v5056 = vld [vmem:[#allocation9 + $0x168] sm:$0xf]
    %v5057 = vld [vmem:[#allocation9 + $0x16c] sm:$0xf]
    %v5058 = vld [vmem:[#allocation9 + $0x170] sm:$0xf]
    %v5059 = vld [vmem:[#allocation9 + $0x174] sm:$0xf]
    %v5060 = vld [vmem:[#allocation9 + $0x178] sm:$0xf]
    %v5061 = vld [vmem:[#allocation9 + $0x17c] sm:$0xf]
    %v5062 = vld [vmem:[#allocation9 + $0x180] sm:$0xf]
    %v5063 = vld [vmem:[#allocation9 + $0x184] sm:$0xf]
    %v5064 = vld [vmem:[#allocation9 + $0x188] sm:$0xf]
    %v5065 = vld [vmem:[#allocation9 + $0x18c] sm:$0xf]
    %v5066 = vld [vmem:[#allocation9 + $0x190] sm:$0xf]
    %v5067 = vld [vmem:[#allocation9 + $0x194] sm:$0xf]
    %v5068 = vld [vmem:[#allocation9 + $0x198] sm:$0xf]
    %v5069 = vld [vmem:[#allocation9 + $0x19c] sm:$0xf]
    %v5070 = vld [vmem:[#allocation9 + $0x1a0] sm:$0xf]
    %v5071 = vld [vmem:[#allocation9 + $0x1a4] sm:$0xf]
    %v5072 = vld [vmem:[#allocation9 + $0x1a8] sm:$0xf]
    %v5073 = vld [vmem:[#allocation9 + $0x1ac] sm:$0xf]
    %v5074 = vld [vmem:[#allocation9 + $0x1b0] sm:$0xf]
    %v5075 = vld [vmem:[#allocation9 + $0x1b4] sm:$0xf]
    %v5076 = vld [vmem:[#allocation9 + $0x1b8] sm:$0xf]
    %v5077 = vld [vmem:[#allocation9 + $0x1bc] sm:$0xf]
    %v5078 = vld [vmem:[#allocation10] sm:$0x1]
    %v5080 = vlaneseq
    %v5081 = vshrl.u32 %v5080, 7
    %v5082 = vsub.s32 0, %v5081
    %v5083 = vrot.slane %v5078, %v5082
    %v5197 = vunpack.c.l.b16 %v4966
    %v5198 = vunpack.c.l.b16 %v4967
    %v5199 = vunpack.c.l.b16 %v4968
    %v5200 = vunpack.c.l.b16 %v4969
    %v5201 = vunpack.c.l.b16 %v4970
    %v5202 = vunpack.c.l.b16 %v4971
    %v5203 = vunpack.c.l.b16 %v4972
    %v5204 = vunpack.c.l.b16 %v4973
    %v5205 = vunpack.c.l.b16 %v4974
    %v5206 = vunpack.c.l.b16 %v4975
    %v5207 = vunpack.c.l.b16 %v4976
    %v5208 = vunpack.c.l.b16 %v4977
    %v5209 = vunpack.c.l.b16 %v4978
    %v5210 = vunpack.c.l.b16 %v4979
    %v5211 = vunpack.c.l.b16 %v4980
    %v5212 = vunpack.c.l.b16 %v4981
    %v5213 = vunpack.c.l.b16 %v4982
    %v5214 = vunpack.c.l.b16 %v4983
    %v5215 = vunpack.c.l.b16 %v4984
    %v5216 = vunpack.c.l.b16 %v4985
    %v5217 = vunpack.c.l.b16 %v4986
    %v5218 = vunpack.c.l.b16 %v4987
    %v5219 = vunpack.c.l.b16 %v4988
    %v5220 = vunpack.c.l.b16 %v4989
    %v5221 = vunpack.c.l.b16 %v4990
    %v5222 = vunpack.c.l.b16 %v4991
    %v5223 = vunpack.c.l.b16 %v4992
    %v5224 = vunpack.c.l.b16 %v4993
    %v5225 = vunpack.c.l.b16 %v4994
    %v5226 = vunpack.c.l.b16 %v4995
    %v5227 = vunpack.c.l.b16 %v4996
    %v5228 = vunpack.c.l.b16 %v4997
    %v5229 = vunpack.c.l.b16 %v4998
    %v5230 = vunpack.c.l.b16 %v4999
    %v5231 = vunpack.c.l.b16 %v5000
    %v5232 = vunpack.c.l.b16 %v5001
    %v5233 = vunpack.c.l.b16 %v5002
    %v5234 = vunpack.c.l.b16 %v5003
    %v5235 = vunpack.c.l.b16 %v5004
    %v5236 = vunpack.c.l.b16 %v5005
    %v5237 = vunpack.c.l.b16 %v5006
    %v5238 = vunpack.c.l.b16 %v5007
    %v5239 = vunpack.c.l.b16 %v5008
    %v5240 = vunpack.c.l.b16 %v5009
    %v5241 = vunpack.c.l.b16 %v5010
    %v5242 = vunpack.c.l.b16 %v5011
    %v5243 = vunpack.c.l.b16 %v5012
    %v5244 = vunpack.c.l.b16 %v5013
    %v5245 = vunpack.c.l.b16 %v5014
    %v5246 = vunpack.c.l.b16 %v5015
    %v5247 = vunpack.c.l.b16 %v5016
    %v5248 = vunpack.c.l.b16 %v5017
    %v5249 = vunpack.c.l.b16 %v5018
    %v5250 = vunpack.c.l.b16 %v5019
    %v5251 = vunpack.c.l.b16 %v5020
    %v5252 = vunpack.c.l.b16 %v5021
    %v5253 = vunpack.c.l.b16 %v5022
    %v5254 = vunpack.c.l.b16 %v5023
    %v5255 = vunpack.c.l.b16 %v5024
    %v5256 = vunpack.c.l.b16 %v5025
    %v5257 = vunpack.c.l.b16 %v5026
    %v5258 = vunpack.c.l.b16 %v5027
    %v5259 = vunpack.c.l.b16 %v5028
    %v5260 = vunpack.c.l.b16 %v5029
    %v5261 = vunpack.c.l.b16 %v5030
    %v5262 = vunpack.c.l.b16 %v5031
    %v5263 = vunpack.c.l.b16 %v5032
    %v5264 = vunpack.c.l.b16 %v5033
    %v5265 = vunpack.c.l.b16 %v5034
    %v5266 = vunpack.c.l.b16 %v5035
    %v5267 = vunpack.c.l.b16 %v5036
    %v5268 = vunpack.c.l.b16 %v5037
    %v5269 = vunpack.c.l.b16 %v5038
    %v5270 = vunpack.c.l.b16 %v5039
    %v5271 = vunpack.c.l.b16 %v5040
    %v5272 = vunpack.c.l.b16 %v5041
    %v5273 = vunpack.c.l.b16 %v5042
    %v5274 = vunpack.c.l.b16 %v5043
    %v5275 = vunpack.c.l.b16 %v5044
    %v5276 = vunpack.c.l.b16 %v5045
    %v5277 = vunpack.c.l.b16 %v5046
    %v5278 = vunpack.c.l.b16 %v5047
    %v5279 = vunpack.c.l.b16 %v5048
    %v5280 = vunpack.c.l.b16 %v5049
    %v5281 = vunpack.c.l.b16 %v5050
    %v5282 = vunpack.c.l.b16 %v5051
    %v5283 = vunpack.c.l.b16 %v5052
    %v5284 = vunpack.c.l.b16 %v5053
    %v5285 = vunpack.c.l.b16 %v5054
    %v5286 = vunpack.c.l.b16 %v5055
    %v5287 = vunpack.c.l.b16 %v5056
    %v5288 = vunpack.c.l.b16 %v5057
    %v5289 = vunpack.c.l.b16 %v5058
    %v5290 = vunpack.c.l.b16 %v5059
    %v5291 = vunpack.c.l.b16 %v5060
    %v5292 = vunpack.c.l.b16 %v5061
    %v5293 = vunpack.c.l.b16 %v5062
    %v5294 = vunpack.c.l.b16 %v5063
    %v5295 = vunpack.c.l.b16 %v5064
    %v5296 = vunpack.c.l.b16 %v5065
    %v5297 = vunpack.c.l.b16 %v5066
    %v5298 = vunpack.c.l.b16 %v5067
    %v5299 = vunpack.c.l.b16 %v5068
    %v5300 = vunpack.c.l.b16 %v5069
    %v5301 = vunpack.c.l.b16 %v5070
    %v5302 = vunpack.c.l.b16 %v5071
    %v5303 = vunpack.c.l.b16 %v5072
    %v5304 = vunpack.c.l.b16 %v5073
    %v5305 = vunpack.c.l.b16 %v5074
    %v5306 = vunpack.c.l.b16 %v5075
    %v5307 = vunpack.c.l.b16 %v5076
    %v5308 = vunpack.c.l.b16 %v5077
    %v5309 = vpack.c.b16 %v5198, %v5197
    %v5310 = vpack.c.b16 %v5200, %v5199
    %v5311 = vpack.c.b16 %v5202, %v5201
    %v5312 = vpack.c.b16 %v5204, %v5203
    %v5313 = vpack.c.b16 %v5206, %v5205
    %v5314 = vpack.c.b16 %v5208, %v5207
    %v5315 = vpack.c.b16 %v5210, %v5209
    %v5316 = vpack.c.b16 %v5212, %v5211
    %v5317 = vpack.c.b16 %v5214, %v5213
    %v5318 = vpack.c.b16 %v5216, %v5215
    %v5319 = vpack.c.b16 %v5218, %v5217
    %v5320 = vpack.c.b16 %v5220, %v5219
    %v5321 = vpack.c.b16 %v5222, %v5221
    %v5322 = vpack.c.b16 %v5224, %v5223
    %v5323 = vpack.c.b16 %v5226, %v5225
    %v5324 = vpack.c.b16 %v5228, %v5227
    %v5325 = vpack.c.b16 %v5230, %v5229
    %v5326 = vpack.c.b16 %v5232, %v5231
    %v5327 = vpack.c.b16 %v5234, %v5233
    %v5328 = vpack.c.b16 %v5236, %v5235
    %v5329 = vpack.c.b16 %v5238, %v5237
    %v5330 = vpack.c.b16 %v5240, %v5239
    %v5331 = vpack.c.b16 %v5242, %v5241
    %v5332 = vpack.c.b16 %v5244, %v5243
    %v5333 = vpack.c.b16 %v5246, %v5245
    %v5334 = vpack.c.b16 %v5248, %v5247
    %v5335 = vpack.c.b16 %v5250, %v5249
    %v5336 = vpack.c.b16 %v5252, %v5251
    %v5337 = vpack.c.b16 %v5254, %v5253
    %v5338 = vpack.c.b16 %v5256, %v5255
    %v5339 = vpack.c.b16 %v5258, %v5257
    %v5340 = vpack.c.b16 %v5260, %v5259
    %v5341 = vpack.c.b16 %v5262, %v5261
    %v5342 = vpack.c.b16 %v5264, %v5263
    %v5343 = vpack.c.b16 %v5266, %v5265
    %v5344 = vpack.c.b16 %v5268, %v5267
    %v5345 = vpack.c.b16 %v5270, %v5269
    %v5346 = vpack.c.b16 %v5272, %v5271
    %v5347 = vpack.c.b16 %v5274, %v5273
    %v5348 = vpack.c.b16 %v5276, %v5275
    %v5349 = vpack.c.b16 %v5278, %v5277
    %v5350 = vpack.c.b16 %v5280, %v5279
    %v5351 = vpack.c.b16 %v5282, %v5281
    %v5352 = vpack.c.b16 %v5284, %v5283
    %v5353 = vpack.c.b16 %v5286, %v5285
    %v5354 = vpack.c.b16 %v5288, %v5287
    %v5355 = vpack.c.b16 %v5290, %v5289
    %v5356 = vpack.c.b16 %v5292, %v5291
    %v5357 = vpack.c.b16 %v5294, %v5293
    %v5358 = vpack.c.b16 %v5296, %v5295
    %v5359 = vpack.c.b16 %v5298, %v5297
    %v5360 = vpack.c.b16 %v5300, %v5299
    %v5361 = vpack.c.b16 %v5302, %v5301
    %v5362 = vpack.c.b16 %v5304, %v5303
    %v5363 = vpack.c.b16 %v5306, %v5305
    %v5364 = vpack.c.b16 %v5308, %v5307
    %5421 = vmatprep.subr.bf16.mxu0 0
    %5422 = vmatpush1.bf16.msra.mxu0 %v5309
    %5423 = vmatprep.subr.bf16.mxu0 0
    %5424 = vmatpush1.bf16.msra.mxu0 %v5310
    %5425 = vmatprep.subr.bf16.mxu0 0
    %5426 = vmatpush1.bf16.msra.mxu0 %v5311
    %5427 = vmatprep.subr.bf16.mxu0 0
    %5428 = vmatpush1.bf16.msra.mxu0 %v5312
    %5429 = vmatprep.subr.bf16.mxu0 0
    %5430 = vmatpush1.bf16.msra.mxu0 %v5313
    %5431 = vmatprep.subr.bf16.mxu0 0
    %5432 = vmatpush1.bf16.msra.mxu0 %v5314
    %5433 = vmatprep.subr.bf16.mxu0 0
    %5434 = vmatpush1.bf16.msra.mxu0 %v5315
    %5435 = vmatprep.subr.bf16.mxu0 0
    %5436 = vmatpush1.bf16.msra.mxu0 %v5316
    %5437 = vmatprep.subr.bf16.mxu0 0
    %5438 = vmatpush1.bf16.msra.mxu0 %v5317
    %5439 = vmatprep.subr.bf16.mxu0 0
    %5440 = vmatpush1.bf16.msra.mxu0 %v5318
    %5441 = vmatprep.subr.bf16.mxu0 0
    %5442 = vmatpush1.bf16.msra.mxu0 %v5319
    %5443 = vmatprep.subr.bf16.mxu0 0
    %5444 = vmatpush1.bf16.msra.mxu0 %v5320
    %5445 = vmatprep.subr.bf16.mxu0 0
    %5446 = vmatpush1.bf16.msra.mxu0 %v5321
    %5447 = vmatprep.subr.bf16.mxu0 0
    %5448 = vmatpush1.bf16.msra.mxu0 %v5322
    %5449 = vmatprep.subr.bf16.mxu0 0
    %5450 = vmatpush1.bf16.msra.mxu0 %v5323
    %5451 = vmatprep.subr.bf16.mxu0 0
    %5452 = vmatpush1.bf16.msra.mxu0 %v5324
    %5453 = vmatprep.mubr.bf16.mxu0 %v4960
    %5454 = vmatmul.mubr.bf16.gmra.mrb[0].mxu0 %v4959
    %v5455 = vpop.f32.mrb[0].mxu0
    %v5456 = vadd.f32 %v5083, %v5455
    %v5457 = vpop.f32.mrb[0].mxu0
    %v5458 = vpop.f32.mrb[0].mxu0
    %v5459 = vadd.f32 %v5083, %v5458
    %v5460 = vpop.f32.mrb[0].mxu0
    %5461 = vdwg.mxu0
    %5462 = vmatprep.subr.bf16.mxu0 0
    %5463 = vmatpush1.bf16.msra.mxu0 %v5325
    %5464 = vmatprep.subr.bf16.mxu0 0
    %5465 = vmatpush1.bf16.msra.mxu0 %v5326
    %5466 = vmatprep.subr.bf16.mxu0 0
    %5467 = vmatpush1.bf16.msra.mxu0 %v5327
    %5468 = vmatprep.subr.bf16.mxu0 0
    %5469 = vmatpush1.bf16.msra.mxu0 %v5328
    %5470 = vmatprep.subr.bf16.mxu0 0
    %5471 = vmatpush1.bf16.msra.mxu0 %v5329
    %5472 = vmatprep.subr.bf16.mxu0 0
    %5473 = vmatpush1.bf16.msra.mxu0 %v5330
    %5474 = vmatprep.subr.bf16.mxu0 0
    %5475 = vmatpush1.bf16.msra.mxu0 %v5331
    %5476 = vmatprep.subr.bf16.mxu0 0
    %5477 = vmatpush1.bf16.msra.mxu0 %v5332
    %5478 = vmatprep.subr.bf16.mxu0 0
    %5479 = vmatpush1.bf16.msra.mxu0 %v5333
    %5480 = vmatprep.subr.bf16.mxu0 0
    %5481 = vmatpush1.bf16.msra.mxu0 %v5334
    %5482 = vmatprep.subr.bf16.mxu0 0
    %5483 = vmatpush1.bf16.msra.mxu0 %v5335
    %5484 = vmatprep.subr.bf16.mxu0 0
    %5485 = vmatpush1.bf16.msra.mxu0 %v5336
    %5486 = vmatprep.subr.bf16.mxu0 0
    %5487 = vmatpush1.bf16.msra.mxu0 %v5337
    %5488 = vmatprep.subr.bf16.mxu0 0
    %5489 = vmatpush1.bf16.msra.mxu0 %v5338
    %5490 = vmatprep.subr.bf16.mxu0 0
    %5491 = vmatpush1.bf16.msra.mxu0 %v5339
    %5492 = vmatprep.subr.bf16.mxu0 0
    %5493 = vmatpush1.bf16.msra.mxu0 %v5340
    %5494 = vmatprep.mubr.bf16.mxu0 %v4962
    %5495 = vmatmul.mubr.bf16.gmra.mrb[0].mxu0 %v4961
    %v5496 = vpop.f32.mrb[0].mxu0
    %v5497 = vadd.f32 %v5456, %v5496
    %v5498 = vpop.f32.mrb[0].mxu0
    %v5499 = vpop.f32.mrb[0].mxu0
    %v5500 = vadd.f32 %v5459, %v5499
    %v5501 = vpop.f32.mrb[0].mxu0
    %5502 = vdwg.mxu0
    %5503 = vmatprep.subr.bf16.mxu0 0
    %5504 = vmatpush1.bf16.msra.mxu0 %v5341
    %5505 = vmatprep.subr.bf16.mxu0 0
    %5506 = vmatpush1.bf16.msra.mxu0 %v5342
    %5507 = vmatprep.subr.bf16.mxu0 0
    %5508 = vmatpush1.bf16.msra.mxu0 %v5343
    %5509 = vmatprep.subr.bf16.mxu0 0
    %5510 = vmatpush1.bf16.msra.mxu0 %v5344
    %5511 = vmatprep.subr.bf16.mxu0 0
    %5512 = vmatpush1.bf16.msra.mxu0 %v5345
    %5513 = vmatprep.subr.bf16.mxu0 0
    %5514 = vmatpush1.bf16.msra.mxu0 %v5346
    %5515 = vmatprep.subr.bf16.mxu0 0
    %5516 = vmatpush1.bf16.msra.mxu0 %v5347
    %5517 = vmatprep.subr.bf16.mxu0 0
    %5518 = vmatpush1.bf16.msra.mxu0 %v5348
    %5519 = vmatprep.subr.bf16.mxu0 0
    %5520 = vmatpush1.bf16.msra.mxu0 %v5349
    %5521 = vmatprep.subr.bf16.mxu0 0
    %5522 = vmatpush1.bf16.msra.mxu0 %v5350
    %5523 = vmatprep.subr.bf16.mxu0 0
    %5524 = vmatpush1.bf16.msra.mxu0 %v5351
    %5525 = vmatprep.subr.bf16.mxu0 0
    %5526 = vmatpush1.bf16.msra.mxu0 %v5352
    %5527 = vmatprep.subr.bf16.mxu0 0
    %5528 = vmatpush1.bf16.msra.mxu0 %v5353
    %5529 = vmatprep.subr.bf16.mxu0 0
    %5530 = vmatpush1.bf16.msra.mxu0 %v5354
    %5531 = vmatprep.subr.bf16.mxu0 0
    %5532 = vmatpush1.bf16.msra.mxu0 %v5355
    %5533 = vmatprep.subr.bf16.mxu0 0
    %5534 = vmatpush1.bf16.msra.mxu0 %v5356
    %5535 = vmatprep.mubr.bf16.mxu0 %v4964
    %5536 = vmatmul.mubr.bf16.gmra.mrb[0].mxu0 %v4963
    %v5537 = vpop.f32.mrb[0].mxu0
    %v5538 = vadd.f32 %v5497, %v5537
    %v5539 = vpop.f32.mrb[0].mxu0
    %v5540 = vpop.f32.mrb[0].mxu0
    %v5541 = vadd.f32 %v5500, %v5540
    %v5542 = vpop.f32.mrb[0].mxu0
    %5543 = vdwg.mxu0
    %5544 = vmatprep.subr.bf16.mxu0 0
    %5545 = vmatpush1.bf16.msra.mxu0 %v5357
    %5546 = vmatprep.subr.bf16.mxu0 0
    %5547 = vmatpush1.bf16.msra.mxu0 %v5358
    %5548 = vmatprep.subr.bf16.mxu0 0
    %5549 = vmatpush1.bf16.msra.mxu0 %v5359
    %5550 = vmatprep.subr.bf16.mxu0 0
    %5551 = vmatpush1.bf16.msra.mxu0 %v5360
    %5552 = vmatprep.subr.bf16.mxu0 0
    %5553 = vmatpush1.bf16.msra.mxu0 %v5361
    %5554 = vmatprep.subr.bf16.mxu0 0
    %5555 = vmatpush1.bf16.msra.mxu0 %v5362
    %5556 = vmatprep.subr.bf16.mxu0 0
    %5557 = vmatpush1.bf16.msra.mxu0 %v5363
    %5558 = vmatprep.subr.bf16.mxu0 0
    %5559 = vmatpush1.bf16.msra.mxu0 %v5364
    %5560 = vmatprep.subr.bf16.mxu0 0
    %5561 = vmatpush1.bf16.msra.mxu0 0
    %5562 = vmatprep.subr.bf16.mxu0 0
    %5563 = vmatpush1.bf16.msra.mxu0 0
    %5564 = vmatprep.subr.bf16.mxu0 0
    %5565 = vmatpush1.bf16.msra.mxu0 0
    %5566 = vmatprep.subr.bf16.mxu0 0
    %5567 = vmatpush1.bf16.msra.mxu0 0
    %5568 = vmatprep.subr.bf16.mxu0 0
    %5569 = vmatpush1.bf16.msra.mxu0 0
    %5570 = vmatprep.subr.bf16.mxu0 0
    %5571 = vmatpush1.bf16.msra.mxu0 0
    %5572 = vmatprep.subr.bf16.mxu0 0
    %5573 = vmatpush1.bf16.msra.mxu0 0
    %5574 = vmatprep.subr.bf16.mxu0 0
    %5575 = vmatpush1.bf16.msra.mxu0 0
    %5576 = vmatprep.mubr.bf16.mxu0 0
    %5577 = vmatmul.mubr.bf16.gmra.mrb[0].mxu0 %v4965
    %v5578 = vpop.f32.mrb[0].mxu0
    %v5579 = vadd.f32 %v5538, %v5578
    %v5580 = vpop.f32.mrb[0].mxu0
    %v5581 = vpop.f32.mrb[0].mxu0
    %v5582 = vadd.f32 %v5541, %v5581
    %v5583 = vpop.f32.mrb[0].mxu0
    %5584 = vdwg.mxu0
    %v5585 = vadd.f32 %v5579, 1.0
    %v5586 = vadd.f32 %v5582, 1.0
    %v5587 = vmul.f32 %v5579, 0.5
    %v5588 = vmul.f32 %v5582, 0.5
    %v5589 = vmul.f32 %v5587, %v5579
    %v5590 = vmul.f32 %v5588, %v5582
    %v5591 = vadd.f32 %v5585, %v5589
    %v5592 = vadd.f32 %v5586, %v5590
    %5593 = vadd.xlane.f32.xlu0 %v5591
    %v5594 = vpop.xlane.xlu0 %5593
    %5595 = vadd.xlane.f32.xlu0 %v5592
    %v5596 = vpop.xlane.xlu0 %5595
    %v5597 = vsub.f32 %v5594, 118.0
    %v5598 = vsub.f32 %v5596, 118.0
    %v5599 = vrcp.pop %v5597
    %v5600 = vrcp.pop %v5598
    %v5601 = vmul.f32 %v5591, %v5599
    %v5602 = vmul.f32 %v5592, %v5600
    %5603 = vst [vmem:[%s7] sm:$0xff] %v5601
    %5604 = vst [vmem:[%s7 + $0x8] sm:$0xff] %v5602
    // Predicated region
    $region54: #{mnist_henet_forward.1} parent=1 // pred_check
      _
    $region55: #{mnist_henet_forward.1} parent=1 // pred_check_branch
      %5606 = sbr.rel (0) target = $region57
    $region56: #{mnist_henet_forward.1} parent=1 // pred_region
      _
    $region57: #{mnist_henet_forward.1} parent=1 // pred_fallthru
      _
    // Predicated region
    $region58: #{mnist_henet_forward.1} parent=1 // pred_check
      _
    $region59: #{mnist_henet_forward.1} parent=1 // pred_check_branch
      %5608 = sbr.rel (0) target = $region61
    $region60: #{mnist_henet_forward.1} parent=1 // pred_region
      _
    $region61: #{mnist_henet_forward.1} parent=1 // pred_fallthru
      _
    %5609 = vsyncpa [#allocation3], 1
    %5610 = vsyncpa [#allocation5], 1
    %5611 = vsyncpa [#allocation8], 1
    %5612 = vsyncpa [#allocation11], 1

</llo_original>
